<compile_context>
chip_gen: v6e
topology: v6e:2x2x1
jax: 0.10.0
libtpu: 0.0.40
codegen_flags: <defaults>
</compile_context>

<pallas_src>
import functools
import numpy as np

import jax
import jax.numpy as jnp
from jax.experimental import pallas as pl
from jax.experimental.pallas import tpu as pltpu


# --------------------------------------------------------------------------
# Host-side (numpy) parameter construction
# --------------------------------------------------------------------------
def _round_up(x, m):
    return ((x + m - 1) // m) * m


def _cdiv(a, b):
    return -(-a // b)


def _hz_to_midi(hz):
    return 12.0 * (np.log2(hz) - np.log2(440.0)) + 69.0


def _midi_to_hz(midi):
    return 440.0 * 2.0 ** ((midi - 69.0) / 12.0)


def initialize_filterbank(sample_rate, n_harmonic, semitone_scale):
    # librosa note_to_midi('C1') == 24; hz_to_note rounds to the nearest semitone.
    # NOTE: numerical stand-in for librosa's hz_to_note -> note_to_midi round trip;
    # for some (sample_rate, n_harmonic) combos the rounding convention could differ
    # by one semitone from librosa (changes `level`). Verified for the default config.
    low_midi = 24
    high_midi = int(np.round(_hz_to_midi(sample_rate / (2 * n_harmonic))))
    level = (high_midi - low_midi) * semitone_scale
    midi = np.linspace(low_midi, high_midi, level + 1)
    hz = _midi_to_hz(midi[:-1])
    harmonic_hz = np.concatenate([hz * (i + 1) for i in range(n_harmonic)])
    return harmonic_hz.astype(np.float32), level


def _build_dft_matrices(n_fft, win_length, n_freq):
    """Periodic hann window folded into the real/imag DFT matrices (float32)."""
    n = np.arange(n_fft)
    w = 0.5 - 0.5 * np.cos(2.0 * np.pi * n / win_length)
    k = np.arange(n_freq)
    ang = 2.0 * np.pi * np.outer(n, k) / n_fft
    cw = (w[:, None] * np.cos(ang)).astype(np.float32)      # (n_fft, n_freq)
    sw = (w[:, None] * (-np.sin(ang))).astype(np.float32)   # (n_fft, n_freq)
    return cw, sw


def _build_harmonic_fb(sample_rate, n_freq, harmonic_hz, bw_Q, bw_alpha, bw_beta):
    """Triangular harmonic filterbank fb[bin, filter] (float32) -- get_harmonic_fb."""
    f0 = harmonic_hz[None, :].astype(np.float64)                           # (1, HL)
    bw = (bw_alpha * f0 + bw_beta) / float(bw_Q)
    fft_bins = np.linspace(0.0, float(sample_rate // 2), n_freq)[:, None]  # (n_freq, 1)
    up = fft_bins * (2.0 / bw) + 1.0 - 2.0 * f0 / bw
    down = fft_bins * (-2.0 / bw) + 1.0 + 2.0 * f0 / bw
    return np.maximum(0.0, np.minimum(down, up)).astype(np.float32)        # (n_freq, HL)


def _frame_waveform(waveform_f32, n_fft, hop, n_frames_out, n_fft_p, dtype):
    """torch.stft framing (center=True, reflect pad) via hop-strided slices + reshapes.

    Emits exactly `n_frames_out` frames (extra frames read trailing zeros appended to the
    padded waveform), with the column dim already zero-padded to `n_fft_p`, in `dtype`.
    """
    B = waveform_f32.shape[0]
    pad = n_fft // 2
    padded = jnp.pad(waveform_f32, ((0, 0), (pad, pad)), mode="reflect")
    need = n_fft + (n_frames_out - 1) * hop
    if padded.shape[1] < need:                       # fold frame-count padding into the waveform
        padded = jnp.pad(padded, ((0, 0), (0, need - padded.shape[1])))
    padded = padded.astype(dtype)                    # bf16 before framing: no f32 frames pass
    n_full = n_fft // hop
    rem = n_fft - n_full * hop
    parts = []
    for j in range(n_full):
        part = padded[:, j * hop: j * hop + n_frames_out * hop]
        parts.append(part.reshape(B, n_frames_out, hop))
    for d in range(rem):
        start = n_full * hop + d
        col = padded[:, start: start + (n_frames_out - 1) * hop + 1: hop]
        parts.append(col[:, :, None])
    if n_fft_p > n_fft:                              # fold column zero-pad into the concat
        parts.append(jnp.zeros((B, n_frames_out, n_fft_p - n_fft), dtype))
    return jnp.concatenate(parts, axis=-1)           # (B, n_frames_out, n_fft_p)


# --------------------------------------------------------------------------
# Pallas kernel: windowed DFT power spec + harmonic filterbank + AmplitudeToDB
# --------------------------------------------------------------------------
def hstft_kernel(frames_ref, cwsw_ref, fb_ref, out_ref, *, n_pair):
    x = frames_ref[...]                                                   # (tile, n_fft_p) bf16
    # Fused windowed DFT. RHS columns: [cos 0:n_pair | sin 0:n_pair | cos rest | sin rest | 0-pad]
    z = jnp.dot(x, cwsw_ref[...], preferred_element_type=jnp.float32)     # (tile, n_cols) f32

    parts = []
    if n_pair > 0:
        re = z[:, :n_pair]
        im = z[:, n_pair:2 * n_pair]
        parts.append(re * re + im * im)                                   # power of paired bins
    if z.shape[1] > 2 * n_pair:
        zr = z[:, 2 * n_pair:]                                            # leftover cos / sin columns
        # fb_p duplicates the leftover bins' filter rows, so cos^2 + sin^2 is summed inside matmul-2.
        parts.append(zr * zr)
    power = parts[0] if len(parts) == 1 else jnp.concatenate(parts, axis=-1)   # (tile, k2) f32

    hs = jnp.dot(power.astype(fb_ref.dtype), fb_ref[...],
                 preferred_element_type=jnp.float32)                      # (tile, HL_p) f32
    # torchaudio AmplitudeToDB(stype="power", top_db=None), ref=1.0, amin=1e-10
    db = 10.0 * jnp.log10(jnp.maximum(hs, 1e-10))
    # Emit already transposed (HL_p, tile): the (B, frames, HL) -> (B, HL, frames) transpose is
    # fused into the kernel (XLU slot is otherwise idle) and the output stays lane-dense.
    out_ref[...] = db.T.astype(out_ref.dtype)


# --------------------------------------------------------------------------
# Wrapper
# --------------------------------------------------------------------------
def harmonic_stft(
    waveform,
    *,
    sample_rate=16000,
    n_fft=513,
    n_harmonic=6,
    semitone_scale=2,
    bw_Q=1.0,
    bw_alpha=0.1079,
    bw_beta=24.7,
    tile_frames=1024,
    matmul_dtype=jnp.bfloat16,
    out_dtype=jnp.float32,
):
    waveform = waveform.astype(jnp.float32)
    B, T = waveform.shape
    win_length = n_fft
    hop = win_length // 2
    n_freq = n_fft // 2 + 1
    pad = n_fft // 2
    n_frames = 1 + (T + 2 * pad - n_fft) // hop

    # ---- static weights on the host ----
    cw, sw = _build_dft_matrices(n_fft, win_length, n_freq)
    harmonic_hz, level = initialize_filterbank(sample_rate, n_harmonic, semitone_scale)
    HL = harmonic_hz.shape[0]                                   # n_harmonic * level
    fb = _build_harmonic_fb(sample_rate, n_freq, harmonic_hz, bw_Q, bw_alpha, bw_beta)

    # ---- packed / padded dims (all multiples of 128 -> lane / MXU friendly) ----
    n_fft_p = _round_up(n_fft, 128)                             # 513 -> 640
    n_pair = (n_freq // 128) * 128                              # 257 -> 256 paired bins
    n_rest = n_freq - n_pair                                    # 1 leftover bin
    rest_cols = _round_up(2 * n_rest, 128) if n_rest else 0     # 128
    n_cols = 2 * n_pair + rest_cols                             # fused DFT RHS: 640 (was 768)
    k2 = n_pair + rest_cols                                     # power width / matmul-2 K: 384
    HL_p = _round_up(HL, 128)                                   # 768 -> 768

    cwsw = np.zeros((n_fft_p, n_cols), np.float32)
    cwsw[:n_fft, :n_pair] = cw[:, :n_pair]
    cwsw[:n_fft, n_pair:2 * n_pair] = sw[:, :n_pair]
    if n_rest:
        cwsw[:n_fft, 2 * n_pair:2 * n_pair + n_rest] = cw[:, n_pair:]
        cwsw[:n_fft, 2 * n_pair + n_rest:2 * n_pair + 2 * n_rest] = sw[:, n_pair:]
    fb_p = np.zeros((k2, HL_p), np.float32)
    fb_p[:n_pair, :HL] = fb[:n_pair]
    if n_rest:
        fb_p[n_pair:n_pair + n_rest, :HL] = fb[n_pair:]
        # duplicated rows: the leftover bins' sin^2 column hits the same filter row as cos^2
        fb_p[n_pair + n_rest:n_pair + 2 * n_rest, :HL] = fb[n_pair:]
    cwsw = jnp.asarray(cwsw).astype(matmul_dtype)
    fb_p = jnp.asarray(fb_p).astype(matmul_dtype)

    # ---- frame-tile selection (128-aligned; keep >= 2 grid steps for v7x megacore) ----
    n_frames_128 = _round_up(n_frames, 128)
    tile = max(128, min(_round_up(tile_frames, 128), n_frames_128))
    if B * _cdiv(n_frames_128, tile) < 2 and tile > 128:
        tile = _round_up(_cdiv(tile, 2), 128)
    frames_padded = _round_up(n_frames, tile)

    # ---- framing directly in matmul_dtype with the zero-padding folded in ----
    frames = _frame_waveform(waveform, n_fft, hop, frames_padded, n_fft_p, matmul_dtype)

    rows = B * frames_padded
    in_item = jnp.dtype(matmul_dtype).itemsize
    out_item = jnp.dtype(out_dtype).itemsize
    flops = (2 * rows * n_fft_p * n_cols                        # fused DFT matmul
             + 3 * rows * n_pair + rows * rest_cols             # power
             + 2 * rows * k2 * HL_p                             # harmonic matmul
             + 2 * rows * HL_p)                                 # clamp + scale
    bytes_accessed = (rows * n_fft_p * in_item
                      + n_fft_p * n_cols * in_item
                      + k2 * HL_p * in_item
                      + rows * HL_p * out_item)
    cost = pl.CostEstimate(flops=flops,
                           transcendentals=rows * HL_p,
                           bytes_accessed=bytes_accessed)

    out_full = pl.pallas_call(
        functools.partial(hstft_kernel, n_pair=n_pair),
        out_shape=jax.ShapeDtypeStruct((B, HL_p, frames_padded), out_dtype),
        grid=(B, frames_padded // tile),
        in_specs=[
            pl.BlockSpec((None, tile, n_fft_p), lambda b, i: (b, i, 0)),
            pl.BlockSpec((n_fft_p, n_cols), lambda b, i: (0, 0)),
            pl.BlockSpec((k2, HL_p), lambda b, i: (0, 0)),
        ],
        out_specs=pl.BlockSpec((None, HL_p, tile), lambda b, i: (b, 0, i)),
        compiler_params=pltpu.CompilerParams(
            dimension_semantics=("parallel", "parallel"),
            vmem_limit_bytes=48 * 1024 * 1024),
        cost_estimate=cost,
    )(frames, cwsw, fb_p)

    # Trim padding (pad frames hold -100 dB garbage) and reshape to (B, n_harmonic, level, n_frames).
    out = out_full[:, :HL, :n_frames]
    return out.reshape(B, n_harmonic, level, n_frames)


# --------------------------------------------------------------------------
# Pure-JAX reference. All dots are f32 x f32 (no BF16xBF16=F32 DotThunk);
# emulate_bf16=True rounds operands to bf16 first, mirroring the MXU path
# (bf16 inputs, exact f32 products, f32 accumulation).
# --------------------------------------------------------------------------
def harmonic_stft_reference(
    waveform, *, sample_rate=16000, n_fft=513, n_harmonic=6, semitone_scale=2,
    bw_Q=1.0, bw_alpha=0.1079, bw_beta=24.7, emulate_bf16=False,
):
    def q(x):
        return x.astype(jnp.bfloat16).astype(jnp.float32) if emulate_bf16 else x

    waveform = waveform.astype(jnp.float32)
    B, T = waveform.shape
    hop = n_fft // 2
    n_freq = n_fft // 2 + 1
    pad = n_fft // 2
    padded = jnp.pad(waveform, ((0, 0), (pad, pad)), mode="reflect")
    n_frames = 1 + (padded.shape[1] - n_fft) // hop
    idx = np.arange(n_frames)[:, None] * hop + np.arange(n_fft)[None, :]
    frames = q(padded[:, idx])                                   # (B, n_frames, n_fft) f32

    cw, sw = _build_dft_matrices(n_fft, n_fft, n_freq)
    cw = q(jnp.asarray(cw))
    sw = q(jnp.asarray(sw))
    re = jnp.einsum("btn,nf->btf", frames, cw)
    im = jnp.einsum("btn,nf->btf", frames, sw)
    power = q(re * re + im * im)                                 # (B, n_frames, n_freq)

    harmonic_hz, level = initialize_filterbank(sample_rate, n_harmonic, semitone_scale)
    fb = q(jnp.asarray(
        _build_harmonic_fb(sample_rate, n_freq, harmonic_hz, bw_Q, bw_alpha, bw_beta)))
    hs = jnp.einsum("btf,fh->bht", power, fb)                    # (B, HL, n_frames)
    hs = hs.reshape(B, n_harmonic, level, n_frames)
    return 10.0 * jnp.log10(jnp.maximum(hs, 1e-10))


if __name__ == "__main__":
    key = jax.random.PRNGKey(0)
    B, T = 2, 2048                       # -> 8 STFT frames per item
    waveform = jax.random.normal(key, (B, T), dtype=jnp.float32)

    out = harmonic_stft(waveform)
    out = jax.block_until_ready(out)
    assert out.shape == (2, 6, 128, 8), out.shape

    # Tight check against a reference that emulates the kernel's bf16-input / f32-accumulate
    # matmul precision using f32 dots on bf16-rounded operands.
    ref_emul = harmonic_stft_reference(waveform, emulate_bf16=True)
    np.testing.assert_allclose(np.asarray(out), np.asarray(ref_emul), rtol=5e-3, atol=5e-2)

    # Loose statistical check against the full-f32 reference (bf16 matmul noise in dB,
    # typically ~0.03 dB mean).
    ref_f32 = harmonic_stft_reference(waveform, emulate_bf16=False)
    mean_abs_db_err = float(jnp.mean(jnp.abs(out - ref_f32)))
    assert mean_abs_db_err < 0.2, mean_abs_db_err

    print("KERNEL_OK")
</pallas_src>

<mosaic_0001>
module attributes {stable_mosaic.version = 11 : i64} {
  func.func @hstft_kernel(%arg0: i32, %arg1: i32, %arg2: memref<1x128x640xbf16, #tpu.memory_space<vmem>>, %arg3: memref<640x640xbf16, #tpu.memory_space<vmem>>, %arg4: memref<384x768xbf16, #tpu.memory_space<vmem>>, %arg5: memref<1x768x128xf32, #tpu.memory_space<vmem>>) attributes {dimension_semantics = [#tpu.dimension_semantics<parallel>, #tpu.dimension_semantics<parallel>], iteration_bounds = array<i64: 2, 1>, scalar_prefetch = 0 : i64, scratch_operands = 0 : i64, tpu.core_type = #tpu.core_type<tc>, window_params = [{transform_indices = @transform_0, window_bounds = array<i64: 1, 128, 640>}, {pipeline_mode = #tpu.pipeline_mode<synchronous>, transform_indices = @transform_1, window_bounds = array<i64: 640, 640>}, {pipeline_mode = #tpu.pipeline_mode<synchronous>, transform_indices = @transform_2, window_bounds = array<i64: 384, 768>}, {transform_indices = @transform_3, window_bounds = array<i64: 1, 768, 128>}]} {
    %c0 = arith.constant 0 : index
    %c0_0 = arith.constant 0 : index
    %c0_1 = arith.constant 0 : index
    %0 = vector.load %arg2[%c0, %c0_0, %c0_1] : memref<1x128x640xbf16, #tpu.memory_space<vmem>>, vector<1x128x640xbf16>
    %1 = vector.shape_cast %0 : vector<1x128x640xbf16> to vector<128x640xbf16>
    %c0_2 = arith.constant 0 : index
    %c0_3 = arith.constant 0 : index
    %2 = vector.load %arg3[%c0_2, %c0_3] : memref<640x640xbf16, #tpu.memory_space<vmem>>, vector<640x640xbf16>
    %cst = arith.constant dense<0.000000e+00> : vector<128x640xf32>
    %3 = tpu.matmul %1, %2, %cst {dimension_numbers = #tpu.dot_dimension_numbers<[1], [0], [0], [1], [0, 0, 1, 1], [], []>} : vector<128x640xbf16>, vector<640x640xbf16>, vector<128x640xf32> -> vector<128x640xf32>
    %4 = vector.extract_strided_slice %3 {offsets = [0, 0], sizes = [128, 256], strides = [1, 1]} : vector<128x640xf32> to vector<128x256xf32>
    %5 = vector.extract_strided_slice %3 {offsets = [0, 256], sizes = [128, 256], strides = [1, 1]} : vector<128x640xf32> to vector<128x256xf32>
    %6 = arith.mulf %4, %4 : vector<128x256xf32>
    %7 = arith.mulf %5, %5 : vector<128x256xf32>
    %8 = arith.addf %6, %7 : vector<128x256xf32>
    %9 = vector.extract_strided_slice %3 {offsets = [0, 512], sizes = [128, 128], strides = [1, 1]} : vector<128x640xf32> to vector<128x128xf32>
    %10 = arith.mulf %9, %9 : vector<128x128xf32>
    %11 = tpu.concatenate %8, %10 in 1 : vector<128x256xf32>, vector<128x128xf32> -> vector<128x384xf32>
    %12 = arith.truncf %11 : vector<128x384xf32> to vector<128x384xbf16>
    %c0_4 = arith.constant 0 : index
    %c0_5 = arith.constant 0 : index
    %13 = vector.load %arg4[%c0_4, %c0_5] : memref<384x768xbf16, #tpu.memory_space<vmem>>, vector<384x768xbf16>
    %cst_6 = arith.constant dense<0.000000e+00> : vector<128x768xf32>
    %14 = tpu.matmul %12, %13, %cst_6 {dimension_numbers = #tpu.dot_dimension_numbers<[1], [0], [0], [1], [0, 0, 1, 1], [], []>} : vector<128x384xbf16>, vector<384x768xbf16>, vector<128x768xf32> -> vector<128x768xf32>
    %cst_7 = arith.constant 1.000000e-10 : f32
    %15 = vector.broadcast %cst_7 : f32 to vector<128x768xf32>
    %16 = arith.maximumf %14, %15 : vector<128x768xf32>
    %17 = math.log %16 : vector<128x768xf32>
    %cst_8 = arith.constant 0.434294492 : f32
    %18 = vector.broadcast %cst_8 : f32 to vector<128x768xf32>
    %19 = arith.mulf %17, %18 : vector<128x768xf32>
    %cst_9 = arith.constant 1.000000e+01 : f32
    %20 = vector.broadcast %cst_9 : f32 to vector<128x768xf32>
    %21 = arith.mulf %20, %19 : vector<128x768xf32>
    %22 = tpu.transpose %21, [1, 0] : vector<128x768xf32> -> vector<768x128xf32>
    %c0_10 = arith.constant 0 : index
    %c0_11 = arith.constant 0 : index
    %c0_12 = arith.constant 0 : index
    %23 = vector.load %arg5[%c0_10, %c0_11, %c0_12] : memref<1x768x128xf32, #tpu.memory_space<vmem>>, vector<1x768x128xf32>
    %24 = vector.shape_cast %23 : vector<1x768x128xf32> to vector<768x128xf32>
    %25 = vector.shape_cast %22 : vector<768x128xf32> to vector<1x768x128xf32>
    tpu.vector_store %arg5[%c0_10, %c0_11, %c0_12], %25 {strides = array<i32>} : memref<1x768x128xf32, #tpu.memory_space<vmem>>, vector<1x768x128xf32>,
    return
  }
  func.func @transform_0(%arg0: i32, %arg1: i32) -> (i32, i32, i32) {
    %c0_i32 = arith.constant 0 : i32
    %c0_i32_0 = arith.constant 0 : i32
    return %arg0, %arg1, %c0_i32 : i32, i32, i32
  }
  func.func @transform_1(%arg0: i32, %arg1: i32) -> (i32, i32) {
    %c0_i32 = arith.constant 0 : i32
    %c0_i32_0 = arith.constant 0 : i32
    %c0_i32_1 = arith.constant 0 : i32
    return %c0_i32, %c0_i32_0 : i32, i32
  }
  func.func @transform_2(%arg0: i32, %arg1: i32) -> (i32, i32) {
    %c0_i32 = arith.constant 0 : i32
    %c0_i32_0 = arith.constant 0 : i32
    %c0_i32_1 = arith.constant 0 : i32
    return %c0_i32, %c0_i32_0 : i32, i32
  }
  func.func @transform_3(%arg0: i32, %arg1: i32) -> (i32, i32, i32) {
    %c0_i32 = arith.constant 0 : i32
    %c0_i32_0 = arith.constant 0 : i32
    return %arg0, %c0_i32, %arg1 : i32, i32, i32
  }
}

</mosaic_0001>

<llo_original>
// kernel: tpu_custom_call.1
$region0: #{tpu_custom_call.1}
  #allocation0 [shape = 'u32[]', space=smem, size = 0x4, offset = 0x4, fixed_abs, tag = 'smem constant byte address 0x4 - core index']
  #allocation1 [shape = 'u32[144,128]{1,0:T(1,128)}', space=vmem, size = 0x12000, scoped, tag = 'internal scratch']
  %s0 = inlined_call_operand.hbm [shape: bf16[2,128,640], index: 0, kind: input, shape index: {}]
  %s1 = inlined_call_operand.hbm [shape: bf16[640,640], index: 1, kind: input, shape index: {}]
  %s2 = inlined_call_operand.hbm [shape: bf16[384,768], index: 2, kind: input, shape index: {}]
  %s3 = inlined_call_operand.hbm [shape: f32[2,768,128], index: 3, kind: output, shape index: {}]
  %s4 = sld [smem:[#allocation0]]
  $region57: #{tpu_custom_call.1} parent=0
    _
  %s6 = ssub.s32 1, %s4
  %s7 = scalar_select 0, %s6, %s4
  $region1: #{tpu_custom_call.1} parent=0
    #allocation2 [shape = 'u8[327680]{0}', space=vmem, size = 0x50000, scoped, tag = 'input window, operand 0']
    #allocation3 [shape = 's32[2]{0}', space=sflag, size = 0x8, scoped, tag = 'scoped memory for tpu_custom_call.1']
    #allocation4 [shape = 's32[2]{0}', space=sflag, size = 0x8, scoped, tag = 'scoped memory for tpu_custom_call.1']
    #allocation5 [shape = 'u8[819200]{0}', space=vmem, size = 0xc8000, scoped, tag = 'input window, operand 1, single buffered']
    #allocation6 [shape = 's32[1]{0}', space=sflag, size = 0x4, scoped, tag = 'scoped memory for tpu_custom_call.1']
    #allocation7 [shape = 'u8[589824]{0}', space=vmem, size = 0x90000, scoped, tag = 'input window, operand 2, single buffered']
    #allocation8 [shape = 'u8[786432]{0}', space=vmem, size = 0xc0000, scoped, tag = 'output window, operand 0']
    %8 = vsyncpa [#allocation3], 0
    %s9 = scalar_lea.sflag [#allocation3], 1
    %10 = vsyncpa %s9, 0
    %11 = vsyncpa [#allocation6], 0
    %12 = vsyncpa [#allocation4], 0
    %s13 = scalar_lea.sflag [#allocation4], 1
    %14 = vsyncpa %s13, 0
    loop: start=0, step=1, limit=4
    $region2: #{tpu_custom_call.1} parent=1 // loop_pre_header
      _
    $region3: #{tpu_custom_call.1} parent=1 // loop_header
      %s16 = sphi 0, %s20
      %p17 = scmp.ge.s32.totalorder %s16, 4
      %s23 = sphi 0, %s35
      %s24 = sphi 0, %s31
      %s25 = sphi 0, %s23
      %s26 = sphi 0, %s24
      %s27 = sphi 0, %s25
      %s28 = sphi 0, %s26
      %s40 = sphi 0, %s42
      %s43 = sphi 0, %s40
      %s44 = sphi 0, %s43
      %s60 = sphi 0, %s44
      %s64 = sphi 0, %s64
      %s66 = sphi 0, %s64
      %s67 = sphi 0, %s66
      %s81 = sphi 0, %s67
      %s85 = sphi 0, %s85
      %s87 = sphi 0, %s85
      %s88 = sphi 0, %s87
      %s102 = sphi 0, %s88
      %s110 = sphi 0, %s112
      %s113 = sphi 0, %s110
      %s114 = sphi 0, %s113
      %s130 = sphi 0, %s114
    $region4: #{tpu_custom_call.1} parent=1 // loop_header_branch
      %19 = sbr.rel (%p17) target = $region8
    $region5: #{tpu_custom_call.1} parent=1 // loop_body
      %s21 = ssub.s32 %s16, 1
      %s22 = ssub.s32 %s16, 2
      %s29 = sadd.s32 1, %s24
      %p30 = scmp.ge.s32.totalorder %s29, 1
      %s31 = scalar_select %p30, 0, %s29
      %s32 = sadd.s32 1, %s23
      %s33 = scalar_select %p30, %s32, %s23
      %p34 = scmp.ge.s32.totalorder %s33, 2
      %s35 = scalar_select %p34, 0, %s33
      %s36 = ssub.s32 %s23, %s35
      %s37 = ssub.s32 %s24, %s31
      %s38 = sor.u32 %s36, %s37
      %p39 = scmp.eq.s32.totalorder %s38, 0
      %s41 = sadd.s32 %s40, 1
      %s42 = scalar_select %p39, %s40, %s41
      %p45 = pneg %p39
      %p46 = scmp.eq.s32.totalorder %s16, 1
      %p47 = por %p45, %p46
      %p48 = scmp.ne.s32.totalorder %s40, %s43
      %p49 = scmp.eq.s32.totalorder %s16, 0
      %p50 = por %p48, %p49
      %p51 = scmp.ne.s32.totalorder %s40, %s43
      %p52 = scmp.eq.s32.totalorder %s21, 1
      %p53 = por %p51, %p52
      %p54 = scmp.ne.s32.totalorder %s43, %s44
      %p55 = scmp.eq.s32.totalorder %s21, 0
      %p56 = por %p54, %p55
      %p57 = scmp.ne.s32.totalorder %s43, %s44
      %p58 = scmp.eq.s32.totalorder %s22, 1
      %p59 = por %p57, %p58
      %p61 = scmp.ne.s32.totalorder %s44, %s60
      %p62 = scmp.eq.s32.totalorder %s22, 0
      %p63 = por %p61, %p62
      %s65 = sadd.s32 %s64, 1
      %p68 = scmp.eq.s32.totalorder %s16, 1
      %p69 = scmp.ne.s32.totalorder %s64, %s66
      %p70 = scmp.eq.s32.totalorder %s16, 0
      %p71 = por %p69, %p70
      %p72 = scmp.ne.s32.totalorder %s64, %s66
      %p73 = scmp.eq.s32.totalorder %s21, 1
      %p74 = por %p72, %p73
      %p75 = scmp.ne.s32.totalorder %s66, %s67
      %p76 = scmp.eq.s32.totalorder %s21, 0
      %p77 = por %p75, %p76
      %p78 = scmp.ne.s32.totalorder %s66, %s67
      %p79 = scmp.eq.s32.totalorder %s22, 1
      %p80 = por %p78, %p79
      %p82 = scmp.ne.s32.totalorder %s67, %s81
      %p83 = scmp.eq.s32.totalorder %s22, 0
      %p84 = por %p82, %p83
      %s86 = sadd.s32 %s85, 1
      %p89 = scmp.eq.s32.totalorder %s16, 1
      %p90 = scmp.ne.s32.totalorder %s85, %s87
      %p91 = scmp.eq.s32.totalorder %s16, 0
      %p92 = por %p90, %p91
      %p93 = scmp.ne.s32.totalorder %s85, %s87
      %p94 = scmp.eq.s32.totalorder %s21, 1
      %p95 = por %p93, %p94
      %p96 = scmp.ne.s32.totalorder %s87, %s88
      %p97 = scmp.eq.s32.totalorder %s21, 0
      %p98 = por %p96, %p97
      %p99 = scmp.ne.s32.totalorder %s87, %s88
      %p100 = scmp.eq.s32.totalorder %s22, 1
      %p101 = por %p99, %p100
      %p103 = scmp.ne.s32.totalorder %s88, %s102
      %p104 = scmp.eq.s32.totalorder %s22, 0
      %p105 = por %p103, %p104
      %s106 = ssub.s32 %s23, %s35
      %s107 = ssub.s32 %s24, %s31
      %s108 = sor.u32 %s106, %s107
      %p109 = scmp.eq.s32.totalorder %s108, 0
      %s111 = sadd.s32 %s110, 1
      %s112 = scalar_select %p109, %s110, %s111
      %p115 = pneg %p109
      %p116 = scmp.eq.s32.totalorder %s16, 1
      %p117 = por %p115, %p116
      %p118 = scmp.ne.s32.totalorder %s110, %s113
      %p119 = scmp.eq.s32.totalorder %s16, 0
      %p120 = por %p118, %p119
      %p121 = scmp.ne.s32.totalorder %s110, %s113
      %p122 = scmp.eq.s32.totalorder %s21, 1
      %p123 = por %p121, %p122
      %p124 = scmp.ne.s32.totalorder %s113, %s114
      %p125 = scmp.eq.s32.totalorder %s21, 0
      %p126 = por %p124, %p125
      %p127 = scmp.ne.s32.totalorder %s113, %s114
      %p128 = scmp.eq.s32.totalorder %s22, 1
      %p129 = por %p127, %p128
      %p131 = scmp.ne.s32.totalorder %s114, %s130
      %p132 = scmp.eq.s32.totalorder %s22, 0
      %p133 = por %p131, %p132
      %p134 = scmp.le.s32.totalorder 1, %s16
      %p135 = scmp.lt.s32.totalorder %s16, 3
      %p136 = pnand %p134, %p135
      %p137 = pneg %p136
      // Predicated region
      $region9: #{tpu_custom_call.1} parent=5 // pred_check
        _
      $region10: #{tpu_custom_call.1} parent=5 // pred_check_branch
        %139 = sbr.rel (%p136) target = $region12
      $region11: #{tpu_custom_call.1} parent=5 // pred_region
        %s140 = ssub.s32 %s16, 1
        // Predicated region
        $region13: #{tpu_custom_call.1} parent=11 // pred_check
          %p141 = pneg %p77
        $region14: #{tpu_custom_call.1} parent=11 // pred_check_branch
          %143 = sbr.rel (%p141) target = $region16
        $region15: #{tpu_custom_call.1} parent=11 // pred_region
          %s145 = ssub.s32 25600, 25600
          %146 = vsyncadd [#allocation6], %s145
          %s147 = sshll.u32 [#allocation5], 4
          %s148 = int_to_ptr.vmem [resolvable:$true] %s147
          %153 = dma.hbm_to_vmem [thread:$0]  %s1, 25600, %s148, [#allocation6], 320, 320, 20
        $region16: #{tpu_custom_call.1} parent=11 // pred_fallthru
          _
        // Predicated region
        $region17: #{tpu_custom_call.1} parent=11 // pred_check
          %p154 = pneg %p98
        $region18: #{tpu_custom_call.1} parent=11 // pred_check_branch
          %156 = sbr.rel (%p154) target = $region20
        $region19: #{tpu_custom_call.1} parent=11 // pred_region
          %s158 = ssub.s32 18432, 18432
          %159 = vsyncadd [#allocation6], %s158
          %s160 = sshll.u32 [#allocation7], 4
          %s161 = int_to_ptr.vmem [resolvable:$true] %s160
          %166 = dma.hbm_to_vmem [thread:$0]  %s2, 18432, %s161, [#allocation6], 384, 384, 24
        $region20: #{tpu_custom_call.1} parent=11 // pred_fallthru
          _
      $region12: #{tpu_custom_call.1} parent=5 // pred_fallthru
        _
      %p167 = scmp.lt.s32.totalorder %s16, 2
      // Predicated region
      $region21: #{tpu_custom_call.1} parent=5 // pred_check
        %p168 = pneg %p167
      $region22: #{tpu_custom_call.1} parent=5 // pred_check_branch
        %170 = sbr.rel (%p168) target = $region24
      $region23: #{tpu_custom_call.1} parent=5 // pred_region
        // Predicated region
        $region25: #{tpu_custom_call.1} parent=23 // pred_check
          %p171 = pneg %p50
        $region26: #{tpu_custom_call.1} parent=23 // pred_check_branch
          %173 = sbr.rel (%p171) target = $region28
        $region27: #{tpu_custom_call.1} parent=23 // pred_region
          %s174 = sand.u32 %s40, 1
          %s175 = scalar_lea.sflag [#allocation3], %s174
          %s176 = sand.u32 %s40, 1
          %s177 = smul.addr %s176, 320
          %s178 = scalar_lea.vmem [#allocation2], %s177
          %s179 = smul.u32 16, %s24
          %s181 = ssub.s32 5120, 5120
          %182 = vsyncadd %s175, %s181
          %s183 = smul.addr %s179, 5
          %s184 = smul.addr %s23, 80
          %s185 = sadd.s32 %s183, %s184
          %s186 = smul.addr %s185, 64
          %s187 = scalar_lea.hbm %s0, %s186
          %s188 = sshll.u32 %s178, 4
          %s189 = int_to_ptr.vmem [resolvable:$true] %s188
          %194 = dma.hbm_to_vmem [thread:$0]  %s187, 5120, %s189, %s175, 320, 320, 20
        $region28: #{tpu_custom_call.1} parent=23 // pred_fallthru
          _
      $region24: #{tpu_custom_call.1} parent=5 // pred_fallthru
        _
      %p195 = scmp.le.s32.totalorder 1, %s16
      %p196 = scmp.lt.s32.totalorder %s16, 3
      %p197 = pnand %p195, %p196
      %p198 = pneg %p197
      // Predicated region
      $region29: #{tpu_custom_call.1} parent=5 // pred_check
        _
      $region30: #{tpu_custom_call.1} parent=5 // pred_check_branch
        %200 = sbr.rel (%p197) target = $region32
      $region31: #{tpu_custom_call.1} parent=5 // pred_region
        %s201 = ssub.s32 %s16, 1
        %s202 = sand.u32 %s43, 1
        %s203 = scalar_lea.sflag [#allocation3], %s202
        %s204 = sand.u32 %s43, 1
        %s205 = smul.addr %s204, 320
        %s206 = scalar_lea.vmem [#allocation2], %s205
        // Predicated region
        $region33: #{tpu_custom_call.1} parent=31 // pred_check
          %p207 = pneg %p56
        $region34: #{tpu_custom_call.1} parent=31 // pred_check_branch
          %209 = sbr.rel (%p207) target = $region36
        $region35: #{tpu_custom_call.1} parent=31 // pred_region
          %210 = dma.done %s203, 5120
        $region36: #{tpu_custom_call.1} parent=31 // pred_fallthru
          _
        // Predicated region
        $region37: #{tpu_custom_call.1} parent=31 // pred_check
          %p211 = pneg %p77
        $region38: #{tpu_custom_call.1} parent=31 // pred_check_branch
          %213 = sbr.rel (%p211) target = $region40
        $region39: #{tpu_custom_call.1} parent=31 // pred_region
          %214 = dma.done [#allocation6], 25600
        $region40: #{tpu_custom_call.1} parent=31 // pred_fallthru
          _
        // Predicated region
        $region41: #{tpu_custom_call.1} parent=31 // pred_check
          %p215 = pneg %p98
        $region42: #{tpu_custom_call.1} parent=31 // pred_check_branch
          %217 = sbr.rel (%p215) target = $region44
        $region43: #{tpu_custom_call.1} parent=31 // pred_region
          %218 = dma.done [#allocation6], 18432
        $region44: #{tpu_custom_call.1} parent=31 // pred_fallthru
          _
        %s219 = sand.u32 %s43, 1
        %s220 = scalar_lea.sflag [#allocation3], %s219
        %s221 = sand.u32 %s43, 1
        %s222 = smul.addr %s221, 320
        %s223 = scalar_lea.vmem [#allocation2], %s222
        %p224 = pneg %p56
        %p225 = pneg %p53
        %p226 = pneg %p77
        %p227 = pneg %p74
        %p228 = pneg %p98
        %p229 = pneg %p95
        %p230 = pneg %p126
        %p231 = pneg %p123
        %s232 = sand.u32 %s113, 1
        %s233 = scalar_lea.sflag [#allocation4], %s232
        %s234 = sand.u32 %s113, 1
        %s235 = smul.addr %s234, 768
        %s236 = scalar_lea.vmem [#allocation8], %s235
        %s237 = smul.u32 16, %s26
        %v239 = vld [vmem:[%s206] sm:$0xff]
        %v240 = vld [vmem:[%s206 + $0x8] sm:$0xff]
        %v241 = vld [vmem:[%s206 + $0x10] sm:$0xf]
        %v242 = vld [vmem:[%s206 + $0x14] sm:$0xff]
        %v243 = vld [vmem:[%s206 + $0x1c] sm:$0xff]
        %v244 = vld [vmem:[%s206 + $0x24] sm:$0xf]
        %v245 = vld [vmem:[%s206 + $0x28] sm:$0xff]
        %v246 = vld [vmem:[%s206 + $0x30] sm:$0xff]
        %v247 = vld [vmem:[%s206 + $0x38] sm:$0xf]
        %v248 = vld [vmem:[%s206 + $0x3c] sm:$0xff]
        %v249 = vld [vmem:[%s206 + $0x44] sm:$0xff]
        %v250 = vld [vmem:[%s206 + $0x4c] sm:$0xf]
        %v251 = vld [vmem:[%s206 + $0x50] sm:$0xff]
        %v252 = vld [vmem:[%s206 + $0x58] sm:$0xff]
        %v253 = vld [vmem:[%s206 + $0x60] sm:$0xf]
        %v254 = vld [vmem:[%s206 + $0x64] sm:$0xff]
        %v255 = vld [vmem:[%s206 + $0x6c] sm:$0xff]
        %v256 = vld [vmem:[%s206 + $0x74] sm:$0xf]
        %v257 = vld [vmem:[%s206 + $0x78] sm:$0xff]
        %v258 = vld [vmem:[%s206 + $0x80] sm:$0xff]
        %v259 = vld [vmem:[%s206 + $0x88] sm:$0xf]
        %v260 = vld [vmem:[%s206 + $0x8c] sm:$0xff]
        %v261 = vld [vmem:[%s206 + $0x94] sm:$0xff]
        %v262 = vld [vmem:[%s206 + $0x9c] sm:$0xf]
        %v263 = vld [vmem:[%s206 + $0xa0] sm:$0xff]
        %v264 = vld [vmem:[%s206 + $0xa8] sm:$0xff]
        %v265 = vld [vmem:[%s206 + $0xb0] sm:$0xf]
        %v266 = vld [vmem:[%s206 + $0xb4] sm:$0xff]
        %v267 = vld [vmem:[%s206 + $0xbc] sm:$0xff]
        %v268 = vld [vmem:[%s206 + $0xc4] sm:$0xf]
        %v269 = vld [vmem:[%s206 + $0xc8] sm:$0xff]
        %v270 = vld [vmem:[%s206 + $0xd0] sm:$0xff]
        %v271 = vld [vmem:[%s206 + $0xd8] sm:$0xf]
        %v272 = vld [vmem:[%s206 + $0xdc] sm:$0xff]
        %v273 = vld [vmem:[%s206 + $0xe4] sm:$0xff]
        %v274 = vld [vmem:[%s206 + $0xec] sm:$0xf]
        %v275 = vld [vmem:[%s206 + $0xf0] sm:$0xff]
        %v276 = vld [vmem:[%s206 + $0xf8] sm:$0xff]
        %v277 = vld [vmem:[%s206 + $0x100] sm:$0xf]
        %v278 = vld [vmem:[%s206 + $0x104] sm:$0xff]
        %v279 = vld [vmem:[%s206 + $0x10c] sm:$0xff]
        %v280 = vld [vmem:[%s206 + $0x114] sm:$0xf]
        %v281 = vld [vmem:[%s206 + $0x118] sm:$0xff]
        %v282 = vld [vmem:[%s206 + $0x120] sm:$0xff]
        %v283 = vld [vmem:[%s206 + $0x128] sm:$0xf]
        %v284 = vld [vmem:[%s206 + $0x12c] sm:$0xff]
        %v285 = vld [vmem:[%s206 + $0x134] sm:$0xff]
        %v286 = vld [vmem:[%s206 + $0x13c] sm:$0xf]
        %v287 = vld [vmem:[#allocation5] sm:$0xff]
        %v288 = vld [vmem:[#allocation5 + $0x8] sm:$0xff]
        %v289 = vld [vmem:[#allocation5 + $0x10] sm:$0xf]
        %v290 = vld [vmem:[#allocation5 + $0x14] sm:$0xff]
        %v291 = vld [vmem:[#allocation5 + $0x1c] sm:$0xff]
        %v292 = vld [vmem:[#allocation5 + $0x24] sm:$0xf]
        %v293 = vld [vmem:[#allocation5 + $0x28] sm:$0xff]
        %v294 = vld [vmem:[#allocation5 + $0x30] sm:$0xff]
        %v295 = vld [vmem:[#allocation5 + $0x38] sm:$0xf]
        %v296 = vld [vmem:[#allocation5 + $0x3c] sm:$0xff]
        %v297 = vld [vmem:[#allocation5 + $0x44] sm:$0xff]
        %v298 = vld [vmem:[#allocation5 + $0x4c] sm:$0xf]
        %v299 = vld [vmem:[#allocation5 + $0x50] sm:$0xff]
        %v300 = vld [vmem:[#allocation5 + $0x58] sm:$0xff]
        %v301 = vld [vmem:[#allocation5 + $0x60] sm:$0xf]
        %v302 = vld [vmem:[#allocation5 + $0x64] sm:$0xff]
        %v303 = vld [vmem:[#allocation5 + $0x6c] sm:$0xff]
        %v304 = vld [vmem:[#allocation5 + $0x74] sm:$0xf]
        %v305 = vld [vmem:[#allocation5 + $0x78] sm:$0xff]
        %v306 = vld [vmem:[#allocation5 + $0x80] sm:$0xff]
        %v307 = vld [vmem:[#allocation5 + $0x88] sm:$0xf]
        %v308 = vld [vmem:[#allocation5 + $0x8c] sm:$0xff]
        %v309 = vld [vmem:[#allocation5 + $0x94] sm:$0xff]
        %v310 = vld [vmem:[#allocation5 + $0x9c] sm:$0xf]
        %v311 = vld [vmem:[#allocation5 + $0xa0] sm:$0xff]
        %v312 = vld [vmem:[#allocation5 + $0xa8] sm:$0xff]
        %v313 = vld [vmem:[#allocation5 + $0xb0] sm:$0xf]
        %v314 = vld [vmem:[#allocation5 + $0xb4] sm:$0xff]
        %v315 = vld [vmem:[#allocation5 + $0xbc] sm:$0xff]
        %v316 = vld [vmem:[#allocation5 + $0xc4] sm:$0xf]
        %v317 = vld [vmem:[#allocation5 + $0xc8] sm:$0xff]
        %v318 = vld [vmem:[#allocation5 + $0xd0] sm:$0xff]
        %v319 = vld [vmem:[#allocation5 + $0xd8] sm:$0xf]
        %v320 = vld [vmem:[#allocation5 + $0xdc] sm:$0xff]
        %v321 = vld [vmem:[#allocation5 + $0xe4] sm:$0xff]
        %v322 = vld [vmem:[#allocation5 + $0xec] sm:$0xf]
        %v323 = vld [vmem:[#allocation5 + $0xf0] sm:$0xff]
        %v324 = vld [vmem:[#allocation5 + $0xf8] sm:$0xff]
        %v325 = vld [vmem:[#allocation5 + $0x100] sm:$0xf]
        %v326 = vld [vmem:[#allocation5 + $0x104] sm:$0xff]
        %v327 = vld [vmem:[#allocation5 + $0x10c] sm:$0xff]
        %v328 = vld [vmem:[#allocation5 + $0x114] sm:$0xf]
        %v329 = vld [vmem:[#allocation5 + $0x118] sm:$0xff]
        %v330 = vld [vmem:[#allocation5 + $0x120] sm:$0xff]
        %v331 = vld [vmem:[#allocation5 + $0x128] sm:$0xf]
        %v332 = vld [vmem:[#allocation5 + $0x12c] sm:$0xff]
        %v333 = vld [vmem:[#allocation5 + $0x134] sm:$0xff]
        %v334 = vld [vmem:[#allocation5 + $0x13c] sm:$0xf]
        %v335 = vld [vmem:[#allocation5 + $0x140] sm:$0xff]
        %v336 = vld [vmem:[#allocation5 + $0x148] sm:$0xff]
        %v337 = vld [vmem:[#allocation5 + $0x150] sm:$0xf]
        %v338 = vld [vmem:[#allocation5 + $0x154] sm:$0xff]
        %v339 = vld [vmem:[#allocation5 + $0x15c] sm:$0xff]
        %v340 = vld [vmem:[#allocation5 + $0x164] sm:$0xf]
        %v341 = vld [vmem:[#allocation5 + $0x168] sm:$0xff]
        %v342 = vld [vmem:[#allocation5 + $0x170] sm:$0xff]
        %v343 = vld [vmem:[#allocation5 + $0x178] sm:$0xf]
        %v344 = vld [vmem:[#allocation5 + $0x17c] sm:$0xff]
        %v345 = vld [vmem:[#allocation5 + $0x184] sm:$0xff]
        %v346 = vld [vmem:[#allocation5 + $0x18c] sm:$0xf]
        %v347 = vld [vmem:[#allocation5 + $0x190] sm:$0xff]
        %v348 = vld [vmem:[#allocation5 + $0x198] sm:$0xff]
        %v349 = vld [vmem:[#allocation5 + $0x1a0] sm:$0xf]
        %v350 = vld [vmem:[#allocation5 + $0x1a4] sm:$0xff]
        %v351 = vld [vmem:[#allocation5 + $0x1ac] sm:$0xff]
        %v352 = vld [vmem:[#allocation5 + $0x1b4] sm:$0xf]
        %v353 = vld [vmem:[#allocation5 + $0x1b8] sm:$0xff]
        %v354 = vld [vmem:[#allocation5 + $0x1c0] sm:$0xff]
        %v355 = vld [vmem:[#allocation5 + $0x1c8] sm:$0xf]
        %v356 = vld [vmem:[#allocation5 + $0x1cc] sm:$0xff]
        %v357 = vld [vmem:[#allocation5 + $0x1d4] sm:$0xff]
        %v358 = vld [vmem:[#allocation5 + $0x1dc] sm:$0xf]
        %v359 = vld [vmem:[#allocation5 + $0x1e0] sm:$0xff]
        %v360 = vld [vmem:[#allocation5 + $0x1e8] sm:$0xff]
        %v361 = vld [vmem:[#allocation5 + $0x1f0] sm:$0xf]
        %v362 = vld [vmem:[#allocation5 + $0x1f4] sm:$0xff]
        %v363 = vld [vmem:[#allocation5 + $0x1fc] sm:$0xff]
        %v364 = vld [vmem:[#allocation5 + $0x204] sm:$0xf]
        %v365 = vld [vmem:[#allocation5 + $0x208] sm:$0xff]
        %v366 = vld [vmem:[#allocation5 + $0x210] sm:$0xff]
        %v367 = vld [vmem:[#allocation5 + $0x218] sm:$0xf]
        %v368 = vld [vmem:[#allocation5 + $0x21c] sm:$0xff]
        %v369 = vld [vmem:[#allocation5 + $0x224] sm:$0xff]
        %v370 = vld [vmem:[#allocation5 + $0x22c] sm:$0xf]
        %v371 = vld [vmem:[#allocation5 + $0x230] sm:$0xff]
        %v372 = vld [vmem:[#allocation5 + $0x238] sm:$0xff]
        %v373 = vld [vmem:[#allocation5 + $0x240] sm:$0xf]
        %v374 = vld [vmem:[#allocation5 + $0x244] sm:$0xff]
        %v375 = vld [vmem:[#allocation5 + $0x24c] sm:$0xff]
        %v376 = vld [vmem:[#allocation5 + $0x254] sm:$0xf]
        %v377 = vld [vmem:[#allocation5 + $0x258] sm:$0xff]
        %v378 = vld [vmem:[#allocation5 + $0x260] sm:$0xff]
        %v379 = vld [vmem:[#allocation5 + $0x268] sm:$0xf]
        %v380 = vld [vmem:[#allocation5 + $0x26c] sm:$0xff]
        %v381 = vld [vmem:[#allocation5 + $0x274] sm:$0xff]
        %v382 = vld [vmem:[#allocation5 + $0x27c] sm:$0xf]
        %v383 = vld [vmem:[#allocation5 + $0x280] sm:$0xff]
        %v384 = vld [vmem:[#allocation5 + $0x288] sm:$0xff]
        %v385 = vld [vmem:[#allocation5 + $0x290] sm:$0xf]
        %v386 = vld [vmem:[#allocation5 + $0x294] sm:$0xff]
        %v387 = vld [vmem:[#allocation5 + $0x29c] sm:$0xff]
        %v388 = vld [vmem:[#allocation5 + $0x2a4] sm:$0xf]
        %v389 = vld [vmem:[#allocation5 + $0x2a8] sm:$0xff]
        %v390 = vld [vmem:[#allocation5 + $0x2b0] sm:$0xff]
        %v391 = vld [vmem:[#allocation5 + $0x2b8] sm:$0xf]
        %v392 = vld [vmem:[#allocation5 + $0x2bc] sm:$0xff]
        %v393 = vld [vmem:[#allocation5 + $0x2c4] sm:$0xff]
        %v394 = vld [vmem:[#allocation5 + $0x2cc] sm:$0xf]
        %v395 = vld [vmem:[#allocation5 + $0x2d0] sm:$0xff]
        %v396 = vld [vmem:[#allocation5 + $0x2d8] sm:$0xff]
        %v397 = vld [vmem:[#allocation5 + $0x2e0] sm:$0xf]
        %v398 = vld [vmem:[#allocation5 + $0x2e4] sm:$0xff]
        %v399 = vld [vmem:[#allocation5 + $0x2ec] sm:$0xff]
        %v400 = vld [vmem:[#allocation5 + $0x2f4] sm:$0xf]
        %v401 = vld [vmem:[#allocation5 + $0x2f8] sm:$0xff]
        %v402 = vld [vmem:[#allocation5 + $0x300] sm:$0xff]
        %v403 = vld [vmem:[#allocation5 + $0x308] sm:$0xf]
        %v404 = vld [vmem:[#allocation5 + $0x30c] sm:$0xff]
        %v405 = vld [vmem:[#allocation5 + $0x314] sm:$0xff]
        %v406 = vld [vmem:[#allocation5 + $0x31c] sm:$0xf]
        %v407 = vld [vmem:[#allocation5 + $0x320] sm:$0xff]
        %v408 = vld [vmem:[#allocation5 + $0x328] sm:$0xff]
        %v409 = vld [vmem:[#allocation5 + $0x330] sm:$0xf]
        %v410 = vld [vmem:[#allocation5 + $0x334] sm:$0xff]
        %v411 = vld [vmem:[#allocation5 + $0x33c] sm:$0xff]
        %v412 = vld [vmem:[#allocation5 + $0x344] sm:$0xf]
        %v413 = vld [vmem:[#allocation5 + $0x348] sm:$0xff]
        %v414 = vld [vmem:[#allocation5 + $0x350] sm:$0xff]
        %v415 = vld [vmem:[#allocation5 + $0x358] sm:$0xf]
        %v416 = vld [vmem:[#allocation5 + $0x35c] sm:$0xff]
        %v417 = vld [vmem:[#allocation5 + $0x364] sm:$0xff]
        %v418 = vld [vmem:[#allocation5 + $0x36c] sm:$0xf]
        %v419 = vld [vmem:[#allocation5 + $0x370] sm:$0xff]
        %v420 = vld [vmem:[#allocation5 + $0x378] sm:$0xff]
        %v421 = vld [vmem:[#allocation5 + $0x380] sm:$0xf]
        %v422 = vld [vmem:[#allocation5 + $0x384] sm:$0xff]
        %v423 = vld [vmem:[#allocation5 + $0x38c] sm:$0xff]
        %v424 = vld [vmem:[#allocation5 + $0x394] sm:$0xf]
        %v425 = vld [vmem:[#allocation5 + $0x398] sm:$0xff]
        %v426 = vld [vmem:[#allocation5 + $0x3a0] sm:$0xff]
        %v427 = vld [vmem:[#allocation5 + $0x3a8] sm:$0xf]
        %v428 = vld [vmem:[#allocation5 + $0x3ac] sm:$0xff]
        %v429 = vld [vmem:[#allocation5 + $0x3b4] sm:$0xff]
        %v430 = vld [vmem:[#allocation5 + $0x3bc] sm:$0xf]
        %v431 = vld [vmem:[#allocation5 + $0x3c0] sm:$0xff]
        %v432 = vld [vmem:[#allocation5 + $0x3c8] sm:$0xff]
        %v433 = vld [vmem:[#allocation5 + $0x3d0] sm:$0xf]
        %v434 = vld [vmem:[#allocation5 + $0x3d4] sm:$0xff]
        %v435 = vld [vmem:[#allocation5 + $0x3dc] sm:$0xff]
        %v436 = vld [vmem:[#allocation5 + $0x3e4] sm:$0xf]
        %v437 = vld [vmem:[#allocation5 + $0x3e8] sm:$0xff]
        %v438 = vld [vmem:[#allocation5 + $0x3f0] sm:$0xff]
        %v439 = vld [vmem:[#allocation5 + $0x3f8] sm:$0xf]
        %v440 = vld [vmem:[#allocation5 + $0x3fc] sm:$0xff]
        %v441 = vld [vmem:[#allocation5 + $0x404] sm:$0xff]
        %v442 = vld [vmem:[#allocation5 + $0x40c] sm:$0xf]
        %v443 = vld [vmem:[#allocation5 + $0x410] sm:$0xff]
        %v444 = vld [vmem:[#allocation5 + $0x418] sm:$0xff]
        %v445 = vld [vmem:[#allocation5 + $0x420] sm:$0xf]
        %v446 = vld [vmem:[#allocation5 + $0x424] sm:$0xff]
        %v447 = vld [vmem:[#allocation5 + $0x42c] sm:$0xff]
        %v448 = vld [vmem:[#allocation5 + $0x434] sm:$0xf]
        %v449 = vld [vmem:[#allocation5 + $0x438] sm:$0xff]
        %v450 = vld [vmem:[#allocation5 + $0x440] sm:$0xff]
        %v451 = vld [vmem:[#allocation5 + $0x448] sm:$0xf]
        %v452 = vld [vmem:[#allocation5 + $0x44c] sm:$0xff]
        %v453 = vld [vmem:[#allocation5 + $0x454] sm:$0xff]
        %v454 = vld [vmem:[#allocation5 + $0x45c] sm:$0xf]
        %v455 = vld [vmem:[#allocation5 + $0x460] sm:$0xff]
        %v456 = vld [vmem:[#allocation5 + $0x468] sm:$0xff]
        %v457 = vld [vmem:[#allocation5 + $0x470] sm:$0xf]
        %v458 = vld [vmem:[#allocation5 + $0x474] sm:$0xff]
        %v459 = vld [vmem:[#allocation5 + $0x47c] sm:$0xff]
        %v460 = vld [vmem:[#allocation5 + $0x484] sm:$0xf]
        %v461 = vld [vmem:[#allocation5 + $0x488] sm:$0xff]
        %v462 = vld [vmem:[#allocation5 + $0x490] sm:$0xff]
        %v463 = vld [vmem:[#allocation5 + $0x498] sm:$0xf]
        %v464 = vld [vmem:[#allocation5 + $0x49c] sm:$0xff]
        %v465 = vld [vmem:[#allocation5 + $0x4a4] sm:$0xff]
        %v466 = vld [vmem:[#allocation5 + $0x4ac] sm:$0xf]
        %v467 = vld [vmem:[#allocation5 + $0x4b0] sm:$0xff]
        %v468 = vld [vmem:[#allocation5 + $0x4b8] sm:$0xff]
        %v469 = vld [vmem:[#allocation5 + $0x4c0] sm:$0xf]
        %v470 = vld [vmem:[#allocation5 + $0x4c4] sm:$0xff]
        %v471 = vld [vmem:[#allocation5 + $0x4cc] sm:$0xff]
        %v472 = vld [vmem:[#allocation5 + $0x4d4] sm:$0xf]
        %v473 = vld [vmem:[#allocation5 + $0x4d8] sm:$0xff]
        %v474 = vld [vmem:[#allocation5 + $0x4e0] sm:$0xff]
        %v475 = vld [vmem:[#allocation5 + $0x4e8] sm:$0xf]
        %v476 = vld [vmem:[#allocation5 + $0x4ec] sm:$0xff]
        %v477 = vld [vmem:[#allocation5 + $0x4f4] sm:$0xff]
        %v478 = vld [vmem:[#allocation5 + $0x4fc] sm:$0xf]
        %v479 = vld [vmem:[#allocation5 + $0x500] sm:$0xff]
        %v480 = vld [vmem:[#allocation5 + $0x508] sm:$0xff]
        %v481 = vld [vmem:[#allocation5 + $0x510] sm:$0xf]
        %v482 = vld [vmem:[#allocation5 + $0x514] sm:$0xff]
        %v483 = vld [vmem:[#allocation5 + $0x51c] sm:$0xff]
        %v484 = vld [vmem:[#allocation5 + $0x524] sm:$0xf]
        %v485 = vld [vmem:[#allocation5 + $0x528] sm:$0xff]
        %v486 = vld [vmem:[#allocation5 + $0x530] sm:$0xff]
        %v487 = vld [vmem:[#allocation5 + $0x538] sm:$0xf]
        %v488 = vld [vmem:[#allocation5 + $0x53c] sm:$0xff]
        %v489 = vld [vmem:[#allocation5 + $0x544] sm:$0xff]
        %v490 = vld [vmem:[#allocation5 + $0x54c] sm:$0xf]
        %v491 = vld [vmem:[#allocation5 + $0x550] sm:$0xff]
        %v492 = vld [vmem:[#allocation5 + $0x558] sm:$0xff]
        %v493 = vld [vmem:[#allocation5 + $0x560] sm:$0xf]
        %v494 = vld [vmem:[#allocation5 + $0x564] sm:$0xff]
        %v495 = vld [vmem:[#allocation5 + $0x56c] sm:$0xff]
        %v496 = vld [vmem:[#allocation5 + $0x574] sm:$0xf]
        %v497 = vld [vmem:[#allocation5 + $0x578] sm:$0xff]
        %v498 = vld [vmem:[#allocation5 + $0x580] sm:$0xff]
        %v499 = vld [vmem:[#allocation5 + $0x588] sm:$0xf]
        %v500 = vld [vmem:[#allocation5 + $0x58c] sm:$0xff]
        %v501 = vld [vmem:[#allocation5 + $0x594] sm:$0xff]
        %v502 = vld [vmem:[#allocation5 + $0x59c] sm:$0xf]
        %v503 = vld [vmem:[#allocation5 + $0x5a0] sm:$0xff]
        %v504 = vld [vmem:[#allocation5 + $0x5a8] sm:$0xff]
        %v505 = vld [vmem:[#allocation5 + $0x5b0] sm:$0xf]
        %v506 = vld [vmem:[#allocation5 + $0x5b4] sm:$0xff]
        %v507 = vld [vmem:[#allocation5 + $0x5bc] sm:$0xff]
        %v508 = vld [vmem:[#allocation5 + $0x5c4] sm:$0xf]
        %v509 = vld [vmem:[#allocation5 + $0x5c8] sm:$0xff]
        %v510 = vld [vmem:[#allocation5 + $0x5d0] sm:$0xff]
        %v511 = vld [vmem:[#allocation5 + $0x5d8] sm:$0xf]
        %v512 = vld [vmem:[#allocation5 + $0x5dc] sm:$0xff]
        %v513 = vld [vmem:[#allocation5 + $0x5e4] sm:$0xff]
        %v514 = vld [vmem:[#allocation5 + $0x5ec] sm:$0xf]
        %v515 = vld [vmem:[#allocation5 + $0x5f0] sm:$0xff]
        %v516 = vld [vmem:[#allocation5 + $0x5f8] sm:$0xff]
        %v517 = vld [vmem:[#allocation5 + $0x600] sm:$0xf]
        %v518 = vld [vmem:[#allocation5 + $0x604] sm:$0xff]
        %v519 = vld [vmem:[#allocation5 + $0x60c] sm:$0xff]
        %v520 = vld [vmem:[#allocation5 + $0x614] sm:$0xf]
        %v521 = vld [vmem:[#allocation5 + $0x618] sm:$0xff]
        %v522 = vld [vmem:[#allocation5 + $0x620] sm:$0xff]
        %v523 = vld [vmem:[#allocation5 + $0x628] sm:$0xf]
        %v524 = vld [vmem:[#allocation5 + $0x62c] sm:$0xff]
        %v525 = vld [vmem:[#allocation5 + $0x634] sm:$0xff]
        %v526 = vld [vmem:[#allocation5 + $0x63c] sm:$0xf]
        %v575 = vunpack.c.l.b16 %v239
        %v576 = vunpack.c.h.b16 %v239
        %v577 = vunpack.c.l.b16 %v240
        %v578 = vunpack.c.h.b16 %v240
        %v579 = vunpack.c.l.b16 %v241
        %v580 = vunpack.c.l.b16 %v242
        %v581 = vunpack.c.h.b16 %v242
        %v582 = vunpack.c.l.b16 %v243
        %v583 = vunpack.c.h.b16 %v243
        %v584 = vunpack.c.l.b16 %v244
        %v585 = vunpack.c.l.b16 %v245
        %v586 = vunpack.c.h.b16 %v245
        %v587 = vunpack.c.l.b16 %v246
        %v588 = vunpack.c.h.b16 %v246
        %v589 = vunpack.c.l.b16 %v247
        %v590 = vunpack.c.l.b16 %v248
        %v591 = vunpack.c.h.b16 %v248
        %v592 = vunpack.c.l.b16 %v249
        %v593 = vunpack.c.h.b16 %v249
        %v594 = vunpack.c.l.b16 %v250
        %v595 = vunpack.c.l.b16 %v251
        %v596 = vunpack.c.h.b16 %v251
        %v597 = vunpack.c.l.b16 %v252
        %v598 = vunpack.c.h.b16 %v252
        %v599 = vunpack.c.l.b16 %v253
        %v600 = vunpack.c.l.b16 %v254
        %v601 = vunpack.c.h.b16 %v254
        %v602 = vunpack.c.l.b16 %v255
        %v603 = vunpack.c.h.b16 %v255
        %v604 = vunpack.c.l.b16 %v256
        %v605 = vunpack.c.l.b16 %v257
        %v606 = vunpack.c.h.b16 %v257
        %v607 = vunpack.c.l.b16 %v258
        %v608 = vunpack.c.h.b16 %v258
        %v609 = vunpack.c.l.b16 %v259
        %v610 = vunpack.c.l.b16 %v260
        %v611 = vunpack.c.h.b16 %v260
        %v612 = vunpack.c.l.b16 %v261
        %v613 = vunpack.c.h.b16 %v261
        %v614 = vunpack.c.l.b16 %v262
        %v615 = vunpack.c.l.b16 %v263
        %v616 = vunpack.c.h.b16 %v263
        %v617 = vunpack.c.l.b16 %v264
        %v618 = vunpack.c.h.b16 %v264
        %v619 = vunpack.c.l.b16 %v265
        %v620 = vunpack.c.l.b16 %v266
        %v621 = vunpack.c.h.b16 %v266
        %v622 = vunpack.c.l.b16 %v267
        %v623 = vunpack.c.h.b16 %v267
        %v624 = vunpack.c.l.b16 %v268
        %v625 = vunpack.c.l.b16 %v269
        %v626 = vunpack.c.h.b16 %v269
        %v627 = vunpack.c.l.b16 %v270
        %v628 = vunpack.c.h.b16 %v270
        %v629 = vunpack.c.l.b16 %v271
        %v630 = vunpack.c.l.b16 %v272
        %v631 = vunpack.c.h.b16 %v272
        %v632 = vunpack.c.l.b16 %v273
        %v633 = vunpack.c.h.b16 %v273
        %v634 = vunpack.c.l.b16 %v274
        %v635 = vunpack.c.l.b16 %v275
        %v636 = vunpack.c.h.b16 %v275
        %v637 = vunpack.c.l.b16 %v276
        %v638 = vunpack.c.h.b16 %v276
        %v639 = vunpack.c.l.b16 %v277
        %v640 = vunpack.c.l.b16 %v278
        %v641 = vunpack.c.h.b16 %v278
        %v642 = vunpack.c.l.b16 %v279
        %v643 = vunpack.c.h.b16 %v279
        %v644 = vunpack.c.l.b16 %v280
        %v645 = vunpack.c.l.b16 %v281
        %v646 = vunpack.c.h.b16 %v281
        %v647 = vunpack.c.l.b16 %v282
        %v648 = vunpack.c.h.b16 %v282
        %v649 = vunpack.c.l.b16 %v283
        %v650 = vunpack.c.l.b16 %v284
        %v651 = vunpack.c.h.b16 %v284
        %v652 = vunpack.c.l.b16 %v285
        %v653 = vunpack.c.h.b16 %v285
        %v654 = vunpack.c.l.b16 %v286
        %v655 = vpack.c.b16 %v580, %v575
        %v656 = vpack.c.b16 %v581, %v576
        %v657 = vpack.c.b16 %v582, %v577
        %v658 = vpack.c.b16 %v583, %v578
        %v659 = vpack.c.b16 %v584, %v579
        %v660 = vpack.c.b16 %v590, %v585
        %v661 = vpack.c.b16 %v591, %v586
        %v662 = vpack.c.b16 %v592, %v587
        %v663 = vpack.c.b16 %v593, %v588
        %v664 = vpack.c.b16 %v594, %v589
        %v665 = vpack.c.b16 %v600, %v595
        %v666 = vpack.c.b16 %v601, %v596
        %v667 = vpack.c.b16 %v602, %v597
        %v668 = vpack.c.b16 %v603, %v598
        %v669 = vpack.c.b16 %v604, %v599
        %v670 = vpack.c.b16 %v610, %v605
        %v671 = vpack.c.b16 %v611, %v606
        %v672 = vpack.c.b16 %v612, %v607
        %v673 = vpack.c.b16 %v613, %v608
        %v674 = vpack.c.b16 %v614, %v609
        %v675 = vpack.c.b16 %v620, %v615
        %v676 = vpack.c.b16 %v621, %v616
        %v677 = vpack.c.b16 %v622, %v617
        %v678 = vpack.c.b16 %v623, %v618
        %v679 = vpack.c.b16 %v624, %v619
        %v680 = vpack.c.b16 %v630, %v625
        %v681 = vpack.c.b16 %v631, %v626
        %v682 = vpack.c.b16 %v632, %v627
        %v683 = vpack.c.b16 %v633, %v628
        %v684 = vpack.c.b16 %v634, %v629
        %v685 = vpack.c.b16 %v640, %v635
        %v686 = vpack.c.b16 %v641, %v636
        %v687 = vpack.c.b16 %v642, %v637
        %v688 = vpack.c.b16 %v643, %v638
        %v689 = vpack.c.b16 %v644, %v639
        %v690 = vpack.c.b16 %v650, %v645
        %v691 = vpack.c.b16 %v651, %v646
        %v692 = vpack.c.b16 %v652, %v647
        %v693 = vpack.c.b16 %v653, %v648
        %v694 = vpack.c.b16 %v654, %v649
        %v975 = vunpack.c.l.b16 %v287
        %v976 = vunpack.c.h.b16 %v287
        %v977 = vunpack.c.l.b16 %v288
        %v978 = vunpack.c.h.b16 %v288
        %v979 = vunpack.c.l.b16 %v289
        %v980 = vunpack.c.l.b16 %v290
        %v981 = vunpack.c.h.b16 %v290
        %v982 = vunpack.c.l.b16 %v291
        %v983 = vunpack.c.h.b16 %v291
        %v984 = vunpack.c.l.b16 %v292
        %v985 = vunpack.c.l.b16 %v293
        %v986 = vunpack.c.h.b16 %v293
        %v987 = vunpack.c.l.b16 %v294
        %v988 = vunpack.c.h.b16 %v294
        %v989 = vunpack.c.l.b16 %v295
        %v990 = vunpack.c.l.b16 %v296
        %v991 = vunpack.c.h.b16 %v296
        %v992 = vunpack.c.l.b16 %v297
        %v993 = vunpack.c.h.b16 %v297
        %v994 = vunpack.c.l.b16 %v298
        %v995 = vunpack.c.l.b16 %v299
        %v996 = vunpack.c.h.b16 %v299
        %v997 = vunpack.c.l.b16 %v300
        %v998 = vunpack.c.h.b16 %v300
        %v999 = vunpack.c.l.b16 %v301
        %v1000 = vunpack.c.l.b16 %v302
        %v1001 = vunpack.c.h.b16 %v302
        %v1002 = vunpack.c.l.b16 %v303
        %v1003 = vunpack.c.h.b16 %v303
        %v1004 = vunpack.c.l.b16 %v304
        %v1005 = vunpack.c.l.b16 %v305
        %v1006 = vunpack.c.h.b16 %v305
        %v1007 = vunpack.c.l.b16 %v306
        %v1008 = vunpack.c.h.b16 %v306
        %v1009 = vunpack.c.l.b16 %v307
        %v1010 = vunpack.c.l.b16 %v308
        %v1011 = vunpack.c.h.b16 %v308
        %v1012 = vunpack.c.l.b16 %v309
        %v1013 = vunpack.c.h.b16 %v309
        %v1014 = vunpack.c.l.b16 %v310
        %v1015 = vunpack.c.l.b16 %v311
        %v1016 = vunpack.c.h.b16 %v311
        %v1017 = vunpack.c.l.b16 %v312
        %v1018 = vunpack.c.h.b16 %v312
        %v1019 = vunpack.c.l.b16 %v313
        %v1020 = vunpack.c.l.b16 %v314
        %v1021 = vunpack.c.h.b16 %v314
        %v1022 = vunpack.c.l.b16 %v315
        %v1023 = vunpack.c.h.b16 %v315
        %v1024 = vunpack.c.l.b16 %v316
        %v1025 = vunpack.c.l.b16 %v317
        %v1026 = vunpack.c.h.b16 %v317
        %v1027 = vunpack.c.l.b16 %v318
        %v1028 = vunpack.c.h.b16 %v318
        %v1029 = vunpack.c.l.b16 %v319
        %v1030 = vunpack.c.l.b16 %v320
        %v1031 = vunpack.c.h.b16 %v320
        %v1032 = vunpack.c.l.b16 %v321
        %v1033 = vunpack.c.h.b16 %v321
        %v1034 = vunpack.c.l.b16 %v322
        %v1035 = vunpack.c.l.b16 %v323
        %v1036 = vunpack.c.h.b16 %v323
        %v1037 = vunpack.c.l.b16 %v324
        %v1038 = vunpack.c.h.b16 %v324
        %v1039 = vunpack.c.l.b16 %v325
        %v1040 = vunpack.c.l.b16 %v326
        %v1041 = vunpack.c.h.b16 %v326
        %v1042 = vunpack.c.l.b16 %v327
        %v1043 = vunpack.c.h.b16 %v327
        %v1044 = vunpack.c.l.b16 %v328
        %v1045 = vunpack.c.l.b16 %v329
        %v1046 = vunpack.c.h.b16 %v329
        %v1047 = vunpack.c.l.b16 %v330
        %v1048 = vunpack.c.h.b16 %v330
        %v1049 = vunpack.c.l.b16 %v331
        %v1050 = vunpack.c.l.b16 %v332
        %v1051 = vunpack.c.h.b16 %v332
        %v1052 = vunpack.c.l.b16 %v333
        %v1053 = vunpack.c.h.b16 %v333
        %v1054 = vunpack.c.l.b16 %v334
        %v1055 = vunpack.c.l.b16 %v335
        %v1056 = vunpack.c.h.b16 %v335
        %v1057 = vunpack.c.l.b16 %v336
        %v1058 = vunpack.c.h.b16 %v336
        %v1059 = vunpack.c.l.b16 %v337
        %v1060 = vunpack.c.l.b16 %v338
        %v1061 = vunpack.c.h.b16 %v338
        %v1062 = vunpack.c.l.b16 %v339
        %v1063 = vunpack.c.h.b16 %v339
        %v1064 = vunpack.c.l.b16 %v340
        %v1065 = vunpack.c.l.b16 %v341
        %v1066 = vunpack.c.h.b16 %v341
        %v1067 = vunpack.c.l.b16 %v342
        %v1068 = vunpack.c.h.b16 %v342
        %v1069 = vunpack.c.l.b16 %v343
        %v1070 = vunpack.c.l.b16 %v344
        %v1071 = vunpack.c.h.b16 %v344
        %v1072 = vunpack.c.l.b16 %v345
        %v1073 = vunpack.c.h.b16 %v345
        %v1074 = vunpack.c.l.b16 %v346
        %v1075 = vunpack.c.l.b16 %v347
        %v1076 = vunpack.c.h.b16 %v347
        %v1077 = vunpack.c.l.b16 %v348
        %v1078 = vunpack.c.h.b16 %v348
        %v1079 = vunpack.c.l.b16 %v349
        %v1080 = vunpack.c.l.b16 %v350
        %v1081 = vunpack.c.h.b16 %v350
        %v1082 = vunpack.c.l.b16 %v351
        %v1083 = vunpack.c.h.b16 %v351
        %v1084 = vunpack.c.l.b16 %v352
        %v1085 = vunpack.c.l.b16 %v353
        %v1086 = vunpack.c.h.b16 %v353
        %v1087 = vunpack.c.l.b16 %v354
        %v1088 = vunpack.c.h.b16 %v354
        %v1089 = vunpack.c.l.b16 %v355
        %v1090 = vunpack.c.l.b16 %v356
        %v1091 = vunpack.c.h.b16 %v356
        %v1092 = vunpack.c.l.b16 %v357
        %v1093 = vunpack.c.h.b16 %v357
        %v1094 = vunpack.c.l.b16 %v358
        %v1095 = vunpack.c.l.b16 %v359
        %v1096 = vunpack.c.h.b16 %v359
        %v1097 = vunpack.c.l.b16 %v360
        %v1098 = vunpack.c.h.b16 %v360
        %v1099 = vunpack.c.l.b16 %v361
        %v1100 = vunpack.c.l.b16 %v362
        %v1101 = vunpack.c.h.b16 %v362
        %v1102 = vunpack.c.l.b16 %v363
        %v1103 = vunpack.c.h.b16 %v363
        %v1104 = vunpack.c.l.b16 %v364
        %v1105 = vunpack.c.l.b16 %v365
        %v1106 = vunpack.c.h.b16 %v365
        %v1107 = vunpack.c.l.b16 %v366
        %v1108 = vunpack.c.h.b16 %v366
        %v1109 = vunpack.c.l.b16 %v367
        %v1110 = vunpack.c.l.b16 %v368
        %v1111 = vunpack.c.h.b16 %v368
        %v1112 = vunpack.c.l.b16 %v369
        %v1113 = vunpack.c.h.b16 %v369
        %v1114 = vunpack.c.l.b16 %v370
        %v1115 = vunpack.c.l.b16 %v371
        %v1116 = vunpack.c.h.b16 %v371
        %v1117 = vunpack.c.l.b16 %v372
        %v1118 = vunpack.c.h.b16 %v372
        %v1119 = vunpack.c.l.b16 %v373
        %v1120 = vunpack.c.l.b16 %v374
        %v1121 = vunpack.c.h.b16 %v374
        %v1122 = vunpack.c.l.b16 %v375
        %v1123 = vunpack.c.h.b16 %v375
        %v1124 = vunpack.c.l.b16 %v376
        %v1125 = vunpack.c.l.b16 %v377
        %v1126 = vunpack.c.h.b16 %v377
        %v1127 = vunpack.c.l.b16 %v378
        %v1128 = vunpack.c.h.b16 %v378
        %v1129 = vunpack.c.l.b16 %v379
        %v1130 = vunpack.c.l.b16 %v380
        %v1131 = vunpack.c.h.b16 %v380
        %v1132 = vunpack.c.l.b16 %v381
        %v1133 = vunpack.c.h.b16 %v381
        %v1134 = vunpack.c.l.b16 %v382
        %v1135 = vunpack.c.l.b16 %v383
        %v1136 = vunpack.c.h.b16 %v383
        %v1137 = vunpack.c.l.b16 %v384
        %v1138 = vunpack.c.h.b16 %v384
        %v1139 = vunpack.c.l.b16 %v385
        %v1140 = vunpack.c.l.b16 %v386
        %v1141 = vunpack.c.h.b16 %v386
        %v1142 = vunpack.c.l.b16 %v387
        %v1143 = vunpack.c.h.b16 %v387
        %v1144 = vunpack.c.l.b16 %v388
        %v1145 = vunpack.c.l.b16 %v389
        %v1146 = vunpack.c.h.b16 %v389
        %v1147 = vunpack.c.l.b16 %v390
        %v1148 = vunpack.c.h.b16 %v390
        %v1149 = vunpack.c.l.b16 %v391
        %v1150 = vunpack.c.l.b16 %v392
        %v1151 = vunpack.c.h.b16 %v392
        %v1152 = vunpack.c.l.b16 %v393
        %v1153 = vunpack.c.h.b16 %v393
        %v1154 = vunpack.c.l.b16 %v394
        %v1155 = vunpack.c.l.b16 %v395
        %v1156 = vunpack.c.h.b16 %v395
        %v1157 = vunpack.c.l.b16 %v396
        %v1158 = vunpack.c.h.b16 %v396
        %v1159 = vunpack.c.l.b16 %v397
        %v1160 = vunpack.c.l.b16 %v398
        %v1161 = vunpack.c.h.b16 %v398
        %v1162 = vunpack.c.l.b16 %v399
        %v1163 = vunpack.c.h.b16 %v399
        %v1164 = vunpack.c.l.b16 %v400
        %v1165 = vunpack.c.l.b16 %v401
        %v1166 = vunpack.c.h.b16 %v401
        %v1167 = vunpack.c.l.b16 %v402
        %v1168 = vunpack.c.h.b16 %v402
        %v1169 = vunpack.c.l.b16 %v403
        %v1170 = vunpack.c.l.b16 %v404
        %v1171 = vunpack.c.h.b16 %v404
        %v1172 = vunpack.c.l.b16 %v405
        %v1173 = vunpack.c.h.b16 %v405
        %v1174 = vunpack.c.l.b16 %v406
        %v1175 = vunpack.c.l.b16 %v407
        %v1176 = vunpack.c.h.b16 %v407
        %v1177 = vunpack.c.l.b16 %v408
        %v1178 = vunpack.c.h.b16 %v408
        %v1179 = vunpack.c.l.b16 %v409
        %v1180 = vunpack.c.l.b16 %v410
        %v1181 = vunpack.c.h.b16 %v410
        %v1182 = vunpack.c.l.b16 %v411
        %v1183 = vunpack.c.h.b16 %v411
        %v1184 = vunpack.c.l.b16 %v412
        %v1185 = vunpack.c.l.b16 %v413
        %v1186 = vunpack.c.h.b16 %v413
        %v1187 = vunpack.c.l.b16 %v414
        %v1188 = vunpack.c.h.b16 %v414
        %v1189 = vunpack.c.l.b16 %v415
        %v1190 = vunpack.c.l.b16 %v416
        %v1191 = vunpack.c.h.b16 %v416
        %v1192 = vunpack.c.l.b16 %v417
        %v1193 = vunpack.c.h.b16 %v417
        %v1194 = vunpack.c.l.b16 %v418
        %v1195 = vunpack.c.l.b16 %v419
        %v1196 = vunpack.c.h.b16 %v419
        %v1197 = vunpack.c.l.b16 %v420
        %v1198 = vunpack.c.h.b16 %v420
        %v1199 = vunpack.c.l.b16 %v421
        %v1200 = vunpack.c.l.b16 %v422
        %v1201 = vunpack.c.h.b16 %v422
        %v1202 = vunpack.c.l.b16 %v423
        %v1203 = vunpack.c.h.b16 %v423
        %v1204 = vunpack.c.l.b16 %v424
        %v1205 = vunpack.c.l.b16 %v425
        %v1206 = vunpack.c.h.b16 %v425
        %v1207 = vunpack.c.l.b16 %v426
        %v1208 = vunpack.c.h.b16 %v426
        %v1209 = vunpack.c.l.b16 %v427
        %v1210 = vunpack.c.l.b16 %v428
        %v1211 = vunpack.c.h.b16 %v428
        %v1212 = vunpack.c.l.b16 %v429
        %v1213 = vunpack.c.h.b16 %v429
        %v1214 = vunpack.c.l.b16 %v430
        %v1215 = vunpack.c.l.b16 %v431
        %v1216 = vunpack.c.h.b16 %v431
        %v1217 = vunpack.c.l.b16 %v432
        %v1218 = vunpack.c.h.b16 %v432
        %v1219 = vunpack.c.l.b16 %v433
        %v1220 = vunpack.c.l.b16 %v434
        %v1221 = vunpack.c.h.b16 %v434
        %v1222 = vunpack.c.l.b16 %v435
        %v1223 = vunpack.c.h.b16 %v435
        %v1224 = vunpack.c.l.b16 %v436
        %v1225 = vunpack.c.l.b16 %v437
        %v1226 = vunpack.c.h.b16 %v437
        %v1227 = vunpack.c.l.b16 %v438
        %v1228 = vunpack.c.h.b16 %v438
        %v1229 = vunpack.c.l.b16 %v439
        %v1230 = vunpack.c.l.b16 %v440
        %v1231 = vunpack.c.h.b16 %v440
        %v1232 = vunpack.c.l.b16 %v441
        %v1233 = vunpack.c.h.b16 %v441
        %v1234 = vunpack.c.l.b16 %v442
        %v1235 = vunpack.c.l.b16 %v443
        %v1236 = vunpack.c.h.b16 %v443
        %v1237 = vunpack.c.l.b16 %v444
        %v1238 = vunpack.c.h.b16 %v444
        %v1239 = vunpack.c.l.b16 %v445
        %v1240 = vunpack.c.l.b16 %v446
        %v1241 = vunpack.c.h.b16 %v446
        %v1242 = vunpack.c.l.b16 %v447
        %v1243 = vunpack.c.h.b16 %v447
        %v1244 = vunpack.c.l.b16 %v448
        %v1245 = vunpack.c.l.b16 %v449
        %v1246 = vunpack.c.h.b16 %v449
        %v1247 = vunpack.c.l.b16 %v450
        %v1248 = vunpack.c.h.b16 %v450
        %v1249 = vunpack.c.l.b16 %v451
        %v1250 = vunpack.c.l.b16 %v452
        %v1251 = vunpack.c.h.b16 %v452
        %v1252 = vunpack.c.l.b16 %v453
        %v1253 = vunpack.c.h.b16 %v453
        %v1254 = vunpack.c.l.b16 %v454
        %v1255 = vunpack.c.l.b16 %v455
        %v1256 = vunpack.c.h.b16 %v455
        %v1257 = vunpack.c.l.b16 %v456
        %v1258 = vunpack.c.h.b16 %v456
        %v1259 = vunpack.c.l.b16 %v457
        %v1260 = vunpack.c.l.b16 %v458
        %v1261 = vunpack.c.h.b16 %v458
        %v1262 = vunpack.c.l.b16 %v459
        %v1263 = vunpack.c.h.b16 %v459
        %v1264 = vunpack.c.l.b16 %v460
        %v1265 = vunpack.c.l.b16 %v461
        %v1266 = vunpack.c.h.b16 %v461
        %v1267 = vunpack.c.l.b16 %v462
        %v1268 = vunpack.c.h.b16 %v462
        %v1269 = vunpack.c.l.b16 %v463
        %v1270 = vunpack.c.l.b16 %v464
        %v1271 = vunpack.c.h.b16 %v464
        %v1272 = vunpack.c.l.b16 %v465
        %v1273 = vunpack.c.h.b16 %v465
        %v1274 = vunpack.c.l.b16 %v466
        %v1275 = vunpack.c.l.b16 %v467
        %v1276 = vunpack.c.h.b16 %v467
        %v1277 = vunpack.c.l.b16 %v468
        %v1278 = vunpack.c.h.b16 %v468
        %v1279 = vunpack.c.l.b16 %v469
        %v1280 = vunpack.c.l.b16 %v470
        %v1281 = vunpack.c.h.b16 %v470
        %v1282 = vunpack.c.l.b16 %v471
        %v1283 = vunpack.c.h.b16 %v471
        %v1284 = vunpack.c.l.b16 %v472
        %v1285 = vunpack.c.l.b16 %v473
        %v1286 = vunpack.c.h.b16 %v473
        %v1287 = vunpack.c.l.b16 %v474
        %v1288 = vunpack.c.h.b16 %v474
        %v1289 = vunpack.c.l.b16 %v475
        %v1290 = vunpack.c.l.b16 %v476
        %v1291 = vunpack.c.h.b16 %v476
        %v1292 = vunpack.c.l.b16 %v477
        %v1293 = vunpack.c.h.b16 %v477
        %v1294 = vunpack.c.l.b16 %v478
        %v1295 = vunpack.c.l.b16 %v479
        %v1296 = vunpack.c.h.b16 %v479
        %v1297 = vunpack.c.l.b16 %v480
        %v1298 = vunpack.c.h.b16 %v480
        %v1299 = vunpack.c.l.b16 %v481
        %v1300 = vunpack.c.l.b16 %v482
        %v1301 = vunpack.c.h.b16 %v482
        %v1302 = vunpack.c.l.b16 %v483
        %v1303 = vunpack.c.h.b16 %v483
        %v1304 = vunpack.c.l.b16 %v484
        %v1305 = vunpack.c.l.b16 %v485
        %v1306 = vunpack.c.h.b16 %v485
        %v1307 = vunpack.c.l.b16 %v486
        %v1308 = vunpack.c.h.b16 %v486
        %v1309 = vunpack.c.l.b16 %v487
        %v1310 = vunpack.c.l.b16 %v488
        %v1311 = vunpack.c.h.b16 %v488
        %v1312 = vunpack.c.l.b16 %v489
        %v1313 = vunpack.c.h.b16 %v489
        %v1314 = vunpack.c.l.b16 %v490
        %v1315 = vunpack.c.l.b16 %v491
        %v1316 = vunpack.c.h.b16 %v491
        %v1317 = vunpack.c.l.b16 %v492
        %v1318 = vunpack.c.h.b16 %v492
        %v1319 = vunpack.c.l.b16 %v493
        %v1320 = vunpack.c.l.b16 %v494
        %v1321 = vunpack.c.h.b16 %v494
        %v1322 = vunpack.c.l.b16 %v495
        %v1323 = vunpack.c.h.b16 %v495
        %v1324 = vunpack.c.l.b16 %v496
        %v1325 = vunpack.c.l.b16 %v497
        %v1326 = vunpack.c.h.b16 %v497
        %v1327 = vunpack.c.l.b16 %v498
        %v1328 = vunpack.c.h.b16 %v498
        %v1329 = vunpack.c.l.b16 %v499
        %v1330 = vunpack.c.l.b16 %v500
        %v1331 = vunpack.c.h.b16 %v500
        %v1332 = vunpack.c.l.b16 %v501
        %v1333 = vunpack.c.h.b16 %v501
        %v1334 = vunpack.c.l.b16 %v502
        %v1335 = vunpack.c.l.b16 %v503
        %v1336 = vunpack.c.h.b16 %v503
        %v1337 = vunpack.c.l.b16 %v504
        %v1338 = vunpack.c.h.b16 %v504
        %v1339 = vunpack.c.l.b16 %v505
        %v1340 = vunpack.c.l.b16 %v506
        %v1341 = vunpack.c.h.b16 %v506
        %v1342 = vunpack.c.l.b16 %v507
        %v1343 = vunpack.c.h.b16 %v507
        %v1344 = vunpack.c.l.b16 %v508
        %v1345 = vunpack.c.l.b16 %v509
        %v1346 = vunpack.c.h.b16 %v509
        %v1347 = vunpack.c.l.b16 %v510
        %v1348 = vunpack.c.h.b16 %v510
        %v1349 = vunpack.c.l.b16 %v511
        %v1350 = vunpack.c.l.b16 %v512
        %v1351 = vunpack.c.h.b16 %v512
        %v1352 = vunpack.c.l.b16 %v513
        %v1353 = vunpack.c.h.b16 %v513
        %v1354 = vunpack.c.l.b16 %v514
        %v1355 = vunpack.c.l.b16 %v515
        %v1356 = vunpack.c.h.b16 %v515
        %v1357 = vunpack.c.l.b16 %v516
        %v1358 = vunpack.c.h.b16 %v516
        %v1359 = vunpack.c.l.b16 %v517
        %v1360 = vunpack.c.l.b16 %v518
        %v1361 = vunpack.c.h.b16 %v518
        %v1362 = vunpack.c.l.b16 %v519
        %v1363 = vunpack.c.h.b16 %v519
        %v1364 = vunpack.c.l.b16 %v520
        %v1365 = vunpack.c.l.b16 %v521
        %v1366 = vunpack.c.h.b16 %v521
        %v1367 = vunpack.c.l.b16 %v522
        %v1368 = vunpack.c.h.b16 %v522
        %v1369 = vunpack.c.l.b16 %v523
        %v1370 = vunpack.c.l.b16 %v524
        %v1371 = vunpack.c.h.b16 %v524
        %v1372 = vunpack.c.l.b16 %v525
        %v1373 = vunpack.c.h.b16 %v525
        %v1374 = vunpack.c.l.b16 %v526
        %v1375 = vpack.c.b16 %v980, %v975
        %v1376 = vpack.c.b16 %v981, %v976
        %v1377 = vpack.c.b16 %v982, %v977
        %v1378 = vpack.c.b16 %v983, %v978
        %v1379 = vpack.c.b16 %v984, %v979
        %v1380 = vpack.c.b16 %v990, %v985
        %v1381 = vpack.c.b16 %v991, %v986
        %v1382 = vpack.c.b16 %v992, %v987
        %v1383 = vpack.c.b16 %v993, %v988
        %v1384 = vpack.c.b16 %v994, %v989
        %v1385 = vpack.c.b16 %v1000, %v995
        %v1386 = vpack.c.b16 %v1001, %v996
        %v1387 = vpack.c.b16 %v1002, %v997
        %v1388 = vpack.c.b16 %v1003, %v998
        %v1389 = vpack.c.b16 %v1004, %v999
        %v1390 = vpack.c.b16 %v1010, %v1005
        %v1391 = vpack.c.b16 %v1011, %v1006
        %v1392 = vpack.c.b16 %v1012, %v1007
        %v1393 = vpack.c.b16 %v1013, %v1008
        %v1394 = vpack.c.b16 %v1014, %v1009
        %v1395 = vpack.c.b16 %v1020, %v1015
        %v1396 = vpack.c.b16 %v1021, %v1016
        %v1397 = vpack.c.b16 %v1022, %v1017
        %v1398 = vpack.c.b16 %v1023, %v1018
        %v1399 = vpack.c.b16 %v1024, %v1019
        %v1400 = vpack.c.b16 %v1030, %v1025
        %v1401 = vpack.c.b16 %v1031, %v1026
        %v1402 = vpack.c.b16 %v1032, %v1027
        %v1403 = vpack.c.b16 %v1033, %v1028
        %v1404 = vpack.c.b16 %v1034, %v1029
        %v1405 = vpack.c.b16 %v1040, %v1035
        %v1406 = vpack.c.b16 %v1041, %v1036
        %v1407 = vpack.c.b16 %v1042, %v1037
        %v1408 = vpack.c.b16 %v1043, %v1038
        %v1409 = vpack.c.b16 %v1044, %v1039
        %v1410 = vpack.c.b16 %v1050, %v1045
        %v1411 = vpack.c.b16 %v1051, %v1046
        %v1412 = vpack.c.b16 %v1052, %v1047
        %v1413 = vpack.c.b16 %v1053, %v1048
        %v1414 = vpack.c.b16 %v1054, %v1049
        %v1415 = vpack.c.b16 %v1060, %v1055
        %v1416 = vpack.c.b16 %v1061, %v1056
        %v1417 = vpack.c.b16 %v1062, %v1057
        %v1418 = vpack.c.b16 %v1063, %v1058
        %v1419 = vpack.c.b16 %v1064, %v1059
        %v1420 = vpack.c.b16 %v1070, %v1065
        %v1421 = vpack.c.b16 %v1071, %v1066
        %v1422 = vpack.c.b16 %v1072, %v1067
        %v1423 = vpack.c.b16 %v1073, %v1068
        %v1424 = vpack.c.b16 %v1074, %v1069
        %v1425 = vpack.c.b16 %v1080, %v1075
        %v1426 = vpack.c.b16 %v1081, %v1076
        %v1427 = vpack.c.b16 %v1082, %v1077
        %v1428 = vpack.c.b16 %v1083, %v1078
        %v1429 = vpack.c.b16 %v1084, %v1079
        %v1430 = vpack.c.b16 %v1090, %v1085
        %v1431 = vpack.c.b16 %v1091, %v1086
        %v1432 = vpack.c.b16 %v1092, %v1087
        %v1433 = vpack.c.b16 %v1093, %v1088
        %v1434 = vpack.c.b16 %v1094, %v1089
        %v1435 = vpack.c.b16 %v1100, %v1095
        %v1436 = vpack.c.b16 %v1101, %v1096
        %v1437 = vpack.c.b16 %v1102, %v1097
        %v1438 = vpack.c.b16 %v1103, %v1098
        %v1439 = vpack.c.b16 %v1104, %v1099
        %v1440 = vpack.c.b16 %v1110, %v1105
        %v1441 = vpack.c.b16 %v1111, %v1106
        %v1442 = vpack.c.b16 %v1112, %v1107
        %v1443 = vpack.c.b16 %v1113, %v1108
        %v1444 = vpack.c.b16 %v1114, %v1109
        %v1445 = vpack.c.b16 %v1120, %v1115
        %v1446 = vpack.c.b16 %v1121, %v1116
        %v1447 = vpack.c.b16 %v1122, %v1117
        %v1448 = vpack.c.b16 %v1123, %v1118
        %v1449 = vpack.c.b16 %v1124, %v1119
        %v1450 = vpack.c.b16 %v1130, %v1125
        %v1451 = vpack.c.b16 %v1131, %v1126
        %v1452 = vpack.c.b16 %v1132, %v1127
        %v1453 = vpack.c.b16 %v1133, %v1128
        %v1454 = vpack.c.b16 %v1134, %v1129
        %v1455 = vpack.c.b16 %v1140, %v1135
        %v1456 = vpack.c.b16 %v1141, %v1136
        %v1457 = vpack.c.b16 %v1142, %v1137
        %v1458 = vpack.c.b16 %v1143, %v1138
        %v1459 = vpack.c.b16 %v1144, %v1139
        %v1460 = vpack.c.b16 %v1150, %v1145
        %v1461 = vpack.c.b16 %v1151, %v1146
        %v1462 = vpack.c.b16 %v1152, %v1147
        %v1463 = vpack.c.b16 %v1153, %v1148
        %v1464 = vpack.c.b16 %v1154, %v1149
        %v1465 = vpack.c.b16 %v1160, %v1155
        %v1466 = vpack.c.b16 %v1161, %v1156
        %v1467 = vpack.c.b16 %v1162, %v1157
        %v1468 = vpack.c.b16 %v1163, %v1158
        %v1469 = vpack.c.b16 %v1164, %v1159
        %v1470 = vpack.c.b16 %v1170, %v1165
        %v1471 = vpack.c.b16 %v1171, %v1166
        %v1472 = vpack.c.b16 %v1172, %v1167
        %v1473 = vpack.c.b16 %v1173, %v1168
        %v1474 = vpack.c.b16 %v1174, %v1169
        %v1475 = vpack.c.b16 %v1180, %v1175
        %v1476 = vpack.c.b16 %v1181, %v1176
        %v1477 = vpack.c.b16 %v1182, %v1177
        %v1478 = vpack.c.b16 %v1183, %v1178
        %v1479 = vpack.c.b16 %v1184, %v1179
        %v1480 = vpack.c.b16 %v1190, %v1185
        %v1481 = vpack.c.b16 %v1191, %v1186
        %v1482 = vpack.c.b16 %v1192, %v1187
        %v1483 = vpack.c.b16 %v1193, %v1188
        %v1484 = vpack.c.b16 %v1194, %v1189
        %v1485 = vpack.c.b16 %v1200, %v1195
        %v1486 = vpack.c.b16 %v1201, %v1196
        %v1487 = vpack.c.b16 %v1202, %v1197
        %v1488 = vpack.c.b16 %v1203, %v1198
        %v1489 = vpack.c.b16 %v1204, %v1199
        %v1490 = vpack.c.b16 %v1210, %v1205
        %v1491 = vpack.c.b16 %v1211, %v1206
        %v1492 = vpack.c.b16 %v1212, %v1207
        %v1493 = vpack.c.b16 %v1213, %v1208
        %v1494 = vpack.c.b16 %v1214, %v1209
        %v1495 = vpack.c.b16 %v1220, %v1215
        %v1496 = vpack.c.b16 %v1221, %v1216
        %v1497 = vpack.c.b16 %v1222, %v1217
        %v1498 = vpack.c.b16 %v1223, %v1218
        %v1499 = vpack.c.b16 %v1224, %v1219
        %v1500 = vpack.c.b16 %v1230, %v1225
        %v1501 = vpack.c.b16 %v1231, %v1226
        %v1502 = vpack.c.b16 %v1232, %v1227
        %v1503 = vpack.c.b16 %v1233, %v1228
        %v1504 = vpack.c.b16 %v1234, %v1229
        %v1505 = vpack.c.b16 %v1240, %v1235
        %v1506 = vpack.c.b16 %v1241, %v1236
        %v1507 = vpack.c.b16 %v1242, %v1237
        %v1508 = vpack.c.b16 %v1243, %v1238
        %v1509 = vpack.c.b16 %v1244, %v1239
        %v1510 = vpack.c.b16 %v1250, %v1245
        %v1511 = vpack.c.b16 %v1251, %v1246
        %v1512 = vpack.c.b16 %v1252, %v1247
        %v1513 = vpack.c.b16 %v1253, %v1248
        %v1514 = vpack.c.b16 %v1254, %v1249
        %v1515 = vpack.c.b16 %v1260, %v1255
        %v1516 = vpack.c.b16 %v1261, %v1256
        %v1517 = vpack.c.b16 %v1262, %v1257
        %v1518 = vpack.c.b16 %v1263, %v1258
        %v1519 = vpack.c.b16 %v1264, %v1259
        %v1520 = vpack.c.b16 %v1270, %v1265
        %v1521 = vpack.c.b16 %v1271, %v1266
        %v1522 = vpack.c.b16 %v1272, %v1267
        %v1523 = vpack.c.b16 %v1273, %v1268
        %v1524 = vpack.c.b16 %v1274, %v1269
        %v1525 = vpack.c.b16 %v1280, %v1275
        %v1526 = vpack.c.b16 %v1281, %v1276
        %v1527 = vpack.c.b16 %v1282, %v1277
        %v1528 = vpack.c.b16 %v1283, %v1278
        %v1529 = vpack.c.b16 %v1284, %v1279
        %v1530 = vpack.c.b16 %v1290, %v1285
        %v1531 = vpack.c.b16 %v1291, %v1286
        %v1532 = vpack.c.b16 %v1292, %v1287
        %v1533 = vpack.c.b16 %v1293, %v1288
        %v1534 = vpack.c.b16 %v1294, %v1289
        %v1535 = vpack.c.b16 %v1300, %v1295
        %v1536 = vpack.c.b16 %v1301, %v1296
        %v1537 = vpack.c.b16 %v1302, %v1297
        %v1538 = vpack.c.b16 %v1303, %v1298
        %v1539 = vpack.c.b16 %v1304, %v1299
        %v1540 = vpack.c.b16 %v1310, %v1305
        %v1541 = vpack.c.b16 %v1311, %v1306
        %v1542 = vpack.c.b16 %v1312, %v1307
        %v1543 = vpack.c.b16 %v1313, %v1308
        %v1544 = vpack.c.b16 %v1314, %v1309
        %v1545 = vpack.c.b16 %v1320, %v1315
        %v1546 = vpack.c.b16 %v1321, %v1316
        %v1547 = vpack.c.b16 %v1322, %v1317
        %v1548 = vpack.c.b16 %v1323, %v1318
        %v1549 = vpack.c.b16 %v1324, %v1319
        %v1550 = vpack.c.b16 %v1330, %v1325
        %v1551 = vpack.c.b16 %v1331, %v1326
        %v1552 = vpack.c.b16 %v1332, %v1327
        %v1553 = vpack.c.b16 %v1333, %v1328
        %v1554 = vpack.c.b16 %v1334, %v1329
        %v1555 = vpack.c.b16 %v1340, %v1335
        %v1556 = vpack.c.b16 %v1341, %v1336
        %v1557 = vpack.c.b16 %v1342, %v1337
        %v1558 = vpack.c.b16 %v1343, %v1338
        %v1559 = vpack.c.b16 %v1344, %v1339
        %v1560 = vpack.c.b16 %v1350, %v1345
        %v1561 = vpack.c.b16 %v1351, %v1346
        %v1562 = vpack.c.b16 %v1352, %v1347
        %v1563 = vpack.c.b16 %v1353, %v1348
        %v1564 = vpack.c.b16 %v1354, %v1349
        %v1565 = vpack.c.b16 %v1360, %v1355
        %v1566 = vpack.c.b16 %v1361, %v1356
        %v1567 = vpack.c.b16 %v1362, %v1357
        %v1568 = vpack.c.b16 %v1363, %v1358
        %v1569 = vpack.c.b16 %v1364, %v1359
        %v1570 = vpack.c.b16 %v1370, %v1365
        %v1571 = vpack.c.b16 %v1371, %v1366
        %v1572 = vpack.c.b16 %v1372, %v1367
        %v1573 = vpack.c.b16 %v1373, %v1368
        %v1574 = vpack.c.b16 %v1374, %v1369
        %1775 = vmatprep.subr.bf16.mxu0 %v1411
        %1776 = vmatpush1.bf16.msra.mxu0 %v1410
        %1777 = vmatprep.subr.bf16.mxu0 %v1406
        %1778 = vmatpush1.bf16.msra.mxu0 %v1405
        %1779 = vmatprep.subr.bf16.mxu0 %v1401
        %1780 = vmatpush1.bf16.msra.mxu0 %v1400
        %1781 = vmatprep.subr.bf16.mxu0 %v1396
        %1782 = vmatpush1.bf16.msra.mxu0 %v1395
        %1783 = vmatprep.subr.bf16.mxu0 %v1391
        %1784 = vmatpush1.bf16.msra.mxu0 %v1390
        %1785 = vmatprep.subr.bf16.mxu0 %v1386
        %1786 = vmatpush1.bf16.msra.mxu0 %v1385
        %1787 = vmatprep.subr.bf16.mxu0 %v1381
        %1788 = vmatpush1.bf16.msra.mxu0 %v1380
        %1789 = vmatprep.subr.bf16.mxu0 %v1376
        %1790 = vmatpush1.bf16.msra.mxu0 %v1375
        %1791 = vmatprep.subr.bf16.mxu0 %v1451
        %1792 = vmatpush2.bf16.msra.mxu0 %v1450
        %1793 = vmatprep.subr.bf16.mxu0 %v1446
        %1794 = vmatpush2.bf16.msra.mxu0 %v1445
        %1795 = vmatprep.subr.bf16.mxu0 %v1441
        %1796 = vmatpush2.bf16.msra.mxu0 %v1440
        %1797 = vmatprep.subr.bf16.mxu0 %v1436
        %1798 = vmatpush2.bf16.msra.mxu0 %v1435
        %1799 = vmatprep.subr.bf16.mxu0 %v1431
        %1800 = vmatpush2.bf16.msra.mxu0 %v1430
        %1801 = vmatprep.subr.bf16.mxu0 %v1426
        %1802 = vmatpush2.bf16.msra.mxu0 %v1425
        %1803 = vmatprep.subr.bf16.mxu0 %v1421
        %1804 = vmatpush2.bf16.msra.mxu0 %v1420
        %1805 = vmatprep.subr.bf16.mxu0 %v1416
        %1806 = vmatpush2.bf16.msra.mxu0 %v1415
        %1807 = vmatprep.mubr.bf16.mxu0 %v656
        %1808 = vmatmul.mubr.bf16.gmra.mxu0 %v655
        %v1809 = vpop.f32.mrf.mxu0
        %v1810 = vadd.f32 0.0, %v1809
        %v1811 = vpop.f32.mrf.mxu0
        %v1812 = vadd.f32 0.0, %v1811
        %v1813 = vpop.f32.mrf.mxu0
        %v1814 = vadd.f32 0.0, %v1813
        %v1815 = vpop.f32.mrf.mxu0
        %v1816 = vadd.f32 0.0, %v1815
        %1817 = vmatprep.mubr.bf16.mxu0 %v661
        %1818 = vmatmul.mubr.bf16.gmra.mxu0 %v660
        %v1819 = vpop.f32.mrf.mxu0
        %v1820 = vadd.f32 0.0, %v1819
        %v1821 = vpop.f32.mrf.mxu0
        %v1822 = vadd.f32 0.0, %v1821
        %v1823 = vpop.f32.mrf.mxu0
        %v1824 = vadd.f32 0.0, %v1823
        %v1825 = vpop.f32.mrf.mxu0
        %v1826 = vadd.f32 0.0, %v1825
        %1827 = vmatprep.mubr.bf16.mxu0 %v666
        %1828 = vmatmul.mubr.bf16.gmra.mxu0 %v665
        %v1829 = vpop.f32.mrf.mxu0
        %v1830 = vadd.f32 0.0, %v1829
        %v1831 = vpop.f32.mrf.mxu0
        %v1832 = vadd.f32 0.0, %v1831
        %v1833 = vpop.f32.mrf.mxu0
        %v1834 = vadd.f32 0.0, %v1833
        %v1835 = vpop.f32.mrf.mxu0
        %v1836 = vadd.f32 0.0, %v1835
        %1837 = vmatprep.mubr.bf16.mxu0 %v671
        %1838 = vmatmul.mubr.bf16.gmra.mxu0 %v670
        %v1839 = vpop.f32.mrf.mxu0
        %v1840 = vadd.f32 0.0, %v1839
        %v1841 = vpop.f32.mrf.mxu0
        %v1842 = vadd.f32 0.0, %v1841
        %v1843 = vpop.f32.mrf.mxu0
        %v1844 = vadd.f32 0.0, %v1843
        %v1845 = vpop.f32.mrf.mxu0
        %v1846 = vadd.f32 0.0, %v1845
        %1847 = vmatprep.mubr.bf16.mxu0 %v676
        %1848 = vmatmul.mubr.bf16.gmra.mxu0 %v675
        %v1849 = vpop.f32.mrf.mxu0
        %v1850 = vadd.f32 0.0, %v1849
        %v1851 = vpop.f32.mrf.mxu0
        %v1852 = vadd.f32 0.0, %v1851
        %v1853 = vpop.f32.mrf.mxu0
        %v1854 = vadd.f32 0.0, %v1853
        %v1855 = vpop.f32.mrf.mxu0
        %v1856 = vadd.f32 0.0, %v1855
        %1857 = vmatprep.mubr.bf16.mxu0 %v681
        %1858 = vmatmul.mubr.bf16.gmra.mxu0 %v680
        %v1859 = vpop.f32.mrf.mxu0
        %v1860 = vadd.f32 0.0, %v1859
        %v1861 = vpop.f32.mrf.mxu0
        %v1862 = vadd.f32 0.0, %v1861
        %v1863 = vpop.f32.mrf.mxu0
        %v1864 = vadd.f32 0.0, %v1863
        %v1865 = vpop.f32.mrf.mxu0
        %v1866 = vadd.f32 0.0, %v1865
        %1867 = vmatprep.mubr.bf16.mxu0 %v686
        %1868 = vmatmul.mubr.bf16.gmra.mxu0 %v685
        %v1869 = vpop.f32.mrf.mxu0
        %v1870 = vadd.f32 0.0, %v1869
        %v1871 = vpop.f32.mrf.mxu0
        %v1872 = vadd.f32 0.0, %v1871
        %v1873 = vpop.f32.mrf.mxu0
        %v1874 = vadd.f32 0.0, %v1873
        %v1875 = vpop.f32.mrf.mxu0
        %v1876 = vadd.f32 0.0, %v1875
        %1877 = vmatprep.mubr.bf16.mxu0 %v691
        %1878 = vmatmul.mubr.bf16.gmra.mxu0 %v690
        %v1879 = vpop.f32.mrf.mxu0
        %v1880 = vadd.f32 0.0, %v1879
        %v1881 = vpop.f32.mrf.mxu0
        %v1882 = vadd.f32 0.0, %v1881
        %v1883 = vpop.f32.mrf.mxu0
        %v1884 = vadd.f32 0.0, %v1883
        %v1885 = vpop.f32.mrf.mxu0
        %v1886 = vadd.f32 0.0, %v1885
        %1887 = vdwg.mxu0
        %1888 = vmatprep.subr.bf16.mxu0 %v1491
        %1889 = vmatpush1.bf16.msra.mxu0 %v1490
        %1890 = vmatprep.subr.bf16.mxu0 %v1486
        %1891 = vmatpush1.bf16.msra.mxu0 %v1485
        %1892 = vmatprep.subr.bf16.mxu0 %v1481
        %1893 = vmatpush1.bf16.msra.mxu0 %v1480
        %1894 = vmatprep.subr.bf16.mxu0 %v1476
        %1895 = vmatpush1.bf16.msra.mxu0 %v1475
        %1896 = vmatprep.subr.bf16.mxu0 %v1471
        %1897 = vmatpush1.bf16.msra.mxu0 %v1470
        %1898 = vmatprep.subr.bf16.mxu0 %v1466
        %1899 = vmatpush1.bf16.msra.mxu0 %v1465
        %1900 = vmatprep.subr.bf16.mxu0 %v1461
        %1901 = vmatpush1.bf16.msra.mxu0 %v1460
        %1902 = vmatprep.subr.bf16.mxu0 %v1456
        %1903 = vmatpush1.bf16.msra.mxu0 %v1455
        %1904 = vmatprep.subr.bf16.mxu0 %v1531
        %1905 = vmatpush2.bf16.msra.mxu0 %v1530
        %1906 = vmatprep.subr.bf16.mxu0 %v1526
        %1907 = vmatpush2.bf16.msra.mxu0 %v1525
        %1908 = vmatprep.subr.bf16.mxu0 %v1521
        %1909 = vmatpush2.bf16.msra.mxu0 %v1520
        %1910 = vmatprep.subr.bf16.mxu0 %v1516
        %1911 = vmatpush2.bf16.msra.mxu0 %v1515
        %1912 = vmatprep.subr.bf16.mxu0 %v1511
        %1913 = vmatpush2.bf16.msra.mxu0 %v1510
        %1914 = vmatprep.subr.bf16.mxu0 %v1506
        %1915 = vmatpush2.bf16.msra.mxu0 %v1505
        %1916 = vmatprep.subr.bf16.mxu0 %v1501
        %1917 = vmatpush2.bf16.msra.mxu0 %v1500
        %1918 = vmatprep.subr.bf16.mxu0 %v1496
        %1919 = vmatpush2.bf16.msra.mxu0 %v1495
        %1920 = vmatprep.mubr.bf16.mxu0 %v658
        %1921 = vmatmul.mubr.bf16.gmra.mxu0 %v657
        %v1922 = vpop.f32.mrf.mxu0
        %v1923 = vadd.f32 %v1810, %v1922
        %v1924 = vpop.f32.mrf.mxu0
        %v1925 = vadd.f32 %v1812, %v1924
        %v1926 = vpop.f32.mrf.mxu0
        %v1927 = vadd.f32 %v1814, %v1926
        %v1928 = vpop.f32.mrf.mxu0
        %v1929 = vadd.f32 %v1816, %v1928
        %1930 = vmatprep.mubr.bf16.mxu0 %v663
        %1931 = vmatmul.mubr.bf16.gmra.mxu0 %v662
        %v1932 = vpop.f32.mrf.mxu0
        %v1933 = vadd.f32 %v1820, %v1932
        %v1934 = vpop.f32.mrf.mxu0
        %v1935 = vadd.f32 %v1822, %v1934
        %v1936 = vpop.f32.mrf.mxu0
        %v1937 = vadd.f32 %v1824, %v1936
        %v1938 = vpop.f32.mrf.mxu0
        %v1939 = vadd.f32 %v1826, %v1938
        %1940 = vmatprep.mubr.bf16.mxu0 %v668
        %1941 = vmatmul.mubr.bf16.gmra.mxu0 %v667
        %v1942 = vpop.f32.mrf.mxu0
        %v1943 = vadd.f32 %v1830, %v1942
        %v1944 = vpop.f32.mrf.mxu0
        %v1945 = vadd.f32 %v1832, %v1944
        %v1946 = vpop.f32.mrf.mxu0
        %v1947 = vadd.f32 %v1834, %v1946
        %v1948 = vpop.f32.mrf.mxu0
        %v1949 = vadd.f32 %v1836, %v1948
        %1950 = vmatprep.mubr.bf16.mxu0 %v673
        %1951 = vmatmul.mubr.bf16.gmra.mxu0 %v672
        %v1952 = vpop.f32.mrf.mxu0
        %v1953 = vadd.f32 %v1840, %v1952
        %v1954 = vpop.f32.mrf.mxu0
        %v1955 = vadd.f32 %v1842, %v1954
        %v1956 = vpop.f32.mrf.mxu0
        %v1957 = vadd.f32 %v1844, %v1956
        %v1958 = vpop.f32.mrf.mxu0
        %v1959 = vadd.f32 %v1846, %v1958
        %1960 = vmatprep.mubr.bf16.mxu0 %v678
        %1961 = vmatmul.mubr.bf16.gmra.mxu0 %v677
        %v1962 = vpop.f32.mrf.mxu0
        %v1963 = vadd.f32 %v1850, %v1962
        %v1964 = vpop.f32.mrf.mxu0
        %v1965 = vadd.f32 %v1852, %v1964
        %v1966 = vpop.f32.mrf.mxu0
        %v1967 = vadd.f32 %v1854, %v1966
        %v1968 = vpop.f32.mrf.mxu0
        %v1969 = vadd.f32 %v1856, %v1968
        %1970 = vmatprep.mubr.bf16.mxu0 %v683
        %1971 = vmatmul.mubr.bf16.gmra.mxu0 %v682
        %v1972 = vpop.f32.mrf.mxu0
        %v1973 = vadd.f32 %v1860, %v1972
        %v1974 = vpop.f32.mrf.mxu0
        %v1975 = vadd.f32 %v1862, %v1974
        %v1976 = vpop.f32.mrf.mxu0
        %v1977 = vadd.f32 %v1864, %v1976
        %v1978 = vpop.f32.mrf.mxu0
        %v1979 = vadd.f32 %v1866, %v1978
        %1980 = vmatprep.mubr.bf16.mxu0 %v688
        %1981 = vmatmul.mubr.bf16.gmra.mxu0 %v687
        %v1982 = vpop.f32.mrf.mxu0
        %v1983 = vadd.f32 %v1870, %v1982
        %v1984 = vpop.f32.mrf.mxu0
        %v1985 = vadd.f32 %v1872, %v1984
        %v1986 = vpop.f32.mrf.mxu0
        %v1987 = vadd.f32 %v1874, %v1986
        %v1988 = vpop.f32.mrf.mxu0
        %v1989 = vadd.f32 %v1876, %v1988
        %1990 = vmatprep.mubr.bf16.mxu0 %v693
        %1991 = vmatmul.mubr.bf16.gmra.mxu0 %v692
        %v1992 = vpop.f32.mrf.mxu0
        %v1993 = vadd.f32 %v1880, %v1992
        %v1994 = vpop.f32.mrf.mxu0
        %v1995 = vadd.f32 %v1882, %v1994
        %v1996 = vpop.f32.mrf.mxu0
        %v1997 = vadd.f32 %v1884, %v1996
        %v1998 = vpop.f32.mrf.mxu0
        %v1999 = vadd.f32 %v1886, %v1998
        %2000 = vdwg.mxu0
        %2001 = vmatprep.subr.bf16.mxu0 %v1571
        %2002 = vmatpush1.bf16.msra.mxu0 %v1570
        %2003 = vmatprep.subr.bf16.mxu0 %v1566
        %2004 = vmatpush1.bf16.msra.mxu0 %v1565
        %2005 = vmatprep.subr.bf16.mxu0 %v1561
        %2006 = vmatpush1.bf16.msra.mxu0 %v1560
        %2007 = vmatprep.subr.bf16.mxu0 %v1556
        %2008 = vmatpush1.bf16.msra.mxu0 %v1555
        %2009 = vmatprep.subr.bf16.mxu0 %v1551
        %2010 = vmatpush1.bf16.msra.mxu0 %v1550
        %2011 = vmatprep.subr.bf16.mxu0 %v1546
        %2012 = vmatpush1.bf16.msra.mxu0 %v1545
        %2013 = vmatprep.subr.bf16.mxu0 %v1541
        %2014 = vmatpush1.bf16.msra.mxu0 %v1540
        %2015 = vmatprep.subr.bf16.mxu0 %v1536
        %2016 = vmatpush1.bf16.msra.mxu0 %v1535
        %2017 = vmatprep.subr.bf16.mxu0 0
        %2018 = vmatpush2.bf16.msra.mxu0 0
        %2019 = vmatprep.subr.bf16.mxu0 0
        %2020 = vmatpush2.bf16.msra.mxu0 0
        %2021 = vmatprep.subr.bf16.mxu0 0
        %2022 = vmatpush2.bf16.msra.mxu0 0
        %2023 = vmatprep.subr.bf16.mxu0 0
        %2024 = vmatpush2.bf16.msra.mxu0 0
        %2025 = vmatprep.subr.bf16.mxu0 0
        %2026 = vmatpush2.bf16.msra.mxu0 0
        %2027 = vmatprep.subr.bf16.mxu0 0
        %2028 = vmatpush2.bf16.msra.mxu0 0
        %2029 = vmatprep.subr.bf16.mxu0 0
        %2030 = vmatpush2.bf16.msra.mxu0 0
        %2031 = vmatprep.subr.bf16.mxu0 0
        %2032 = vmatpush2.bf16.msra.mxu0 0
        %2033 = vmatprep.mubr.bf16.mxu0 0
        %2034 = vmatmul.mubr.bf16.gmra.mxu0 %v659
        %v2035 = vpop.f32.mrf.mxu0
        %v2036 = vadd.f32 %v1923, %v2035
        %v2037 = vpop.f32.mrf.mxu0
        %v2038 = vadd.f32 %v1925, %v2037
        %v2039 = vpop.f32.mrf.mxu0
        %v2040 = vadd.f32 %v1927, %v2039
        %v2041 = vpop.f32.mrf.mxu0
        %v2042 = vadd.f32 %v1929, %v2041
        %2043 = vmatprep.mubr.bf16.mxu0 0
        %2044 = vmatmul.mubr.bf16.gmra.mxu0 %v664
        %v2045 = vpop.f32.mrf.mxu0
        %v2046 = vadd.f32 %v1933, %v2045
        %v2047 = vpop.f32.mrf.mxu0
        %v2048 = vadd.f32 %v1935, %v2047
        %v2049 = vpop.f32.mrf.mxu0
        %v2050 = vadd.f32 %v1937, %v2049
        %v2051 = vpop.f32.mrf.mxu0
        %v2052 = vadd.f32 %v1939, %v2051
        %2053 = vmatprep.mubr.bf16.mxu0 0
        %2054 = vmatmul.mubr.bf16.gmra.mxu0 %v669
        %v2055 = vpop.f32.mrf.mxu0
        %v2056 = vadd.f32 %v1943, %v2055
        %v2057 = vpop.f32.mrf.mxu0
        %v2058 = vadd.f32 %v1945, %v2057
        %v2059 = vpop.f32.mrf.mxu0
        %v2060 = vadd.f32 %v1947, %v2059
        %v2061 = vpop.f32.mrf.mxu0
        %v2062 = vadd.f32 %v1949, %v2061
        %2063 = vmatprep.mubr.bf16.mxu0 0
        %2064 = vmatmul.mubr.bf16.gmra.mxu0 %v674
        %v2065 = vpop.f32.mrf.mxu0
        %v2066 = vadd.f32 %v1953, %v2065
        %v2067 = vpop.f32.mrf.mxu0
        %v2068 = vadd.f32 %v1955, %v2067
        %v2069 = vpop.f32.mrf.mxu0
        %v2070 = vadd.f32 %v1957, %v2069
        %v2071 = vpop.f32.mrf.mxu0
        %v2072 = vadd.f32 %v1959, %v2071
        %2073 = vmatprep.mubr.bf16.mxu0 0
        %2074 = vmatmul.mubr.bf16.gmra.mxu0 %v679
        %v2075 = vpop.f32.mrf.mxu0
        %v2076 = vadd.f32 %v1963, %v2075
        %v2077 = vpop.f32.mrf.mxu0
        %v2078 = vadd.f32 %v1965, %v2077
        %v2079 = vpop.f32.mrf.mxu0
        %v2080 = vadd.f32 %v1967, %v2079
        %v2081 = vpop.f32.mrf.mxu0
        %v2082 = vadd.f32 %v1969, %v2081
        %2083 = vmatprep.mubr.bf16.mxu0 0
        %2084 = vmatmul.mubr.bf16.gmra.mxu0 %v684
        %v2085 = vpop.f32.mrf.mxu0
        %v2086 = vadd.f32 %v1973, %v2085
        %v2087 = vpop.f32.mrf.mxu0
        %v2088 = vadd.f32 %v1975, %v2087
        %v2089 = vpop.f32.mrf.mxu0
        %v2090 = vadd.f32 %v1977, %v2089
        %v2091 = vpop.f32.mrf.mxu0
        %v2092 = vadd.f32 %v1979, %v2091
        %2093 = vmatprep.mubr.bf16.mxu0 0
        %2094 = vmatmul.mubr.bf16.gmra.mxu0 %v689
        %v2095 = vpop.f32.mrf.mxu0
        %v2096 = vadd.f32 %v1983, %v2095
        %v2097 = vpop.f32.mrf.mxu0
        %v2098 = vadd.f32 %v1985, %v2097
        %v2099 = vpop.f32.mrf.mxu0
        %v2100 = vadd.f32 %v1987, %v2099
        %v2101 = vpop.f32.mrf.mxu0
        %v2102 = vadd.f32 %v1989, %v2101
        %2103 = vmatprep.mubr.bf16.mxu0 0
        %2104 = vmatmul.mubr.bf16.gmra.mxu0 %v694
        %v2105 = vpop.f32.mrf.mxu0
        %v2106 = vadd.f32 %v1993, %v2105
        %v2107 = vpop.f32.mrf.mxu0
        %v2108 = vadd.f32 %v1995, %v2107
        %v2109 = vpop.f32.mrf.mxu0
        %v2110 = vadd.f32 %v1997, %v2109
        %v2111 = vpop.f32.mrf.mxu0
        %v2112 = vadd.f32 %v1999, %v2111
        %2113 = vdwg.mxu0
        %2114 = vmatprep.subr.bf16.mxu0 %v1413
        %2115 = vmatpush1.bf16.msra.mxu0 %v1412
        %2116 = vmatprep.subr.bf16.mxu0 %v1408
        %2117 = vmatpush1.bf16.msra.mxu0 %v1407
        %2118 = vmatprep.subr.bf16.mxu0 %v1403
        %2119 = vmatpush1.bf16.msra.mxu0 %v1402
        %2120 = vmatprep.subr.bf16.mxu0 %v1398
        %2121 = vmatpush1.bf16.msra.mxu0 %v1397
        %2122 = vmatprep.subr.bf16.mxu0 %v1393
        %2123 = vmatpush1.bf16.msra.mxu0 %v1392
        %2124 = vmatprep.subr.bf16.mxu0 %v1388
        %2125 = vmatpush1.bf16.msra.mxu0 %v1387
        %2126 = vmatprep.subr.bf16.mxu0 %v1383
        %2127 = vmatpush1.bf16.msra.mxu0 %v1382
        %2128 = vmatprep.subr.bf16.mxu0 %v1378
        %2129 = vmatpush1.bf16.msra.mxu0 %v1377
        %2130 = vmatprep.subr.bf16.mxu0 %v1453
        %2131 = vmatpush2.bf16.msra.mxu0 %v1452
        %2132 = vmatprep.subr.bf16.mxu0 %v1448
        %2133 = vmatpush2.bf16.msra.mxu0 %v1447
        %2134 = vmatprep.subr.bf16.mxu0 %v1443
        %2135 = vmatpush2.bf16.msra.mxu0 %v1442
        %2136 = vmatprep.subr.bf16.mxu0 %v1438
        %2137 = vmatpush2.bf16.msra.mxu0 %v1437
        %2138 = vmatprep.subr.bf16.mxu0 %v1433
        %2139 = vmatpush2.bf16.msra.mxu0 %v1432
        %2140 = vmatprep.subr.bf16.mxu0 %v1428
        %2141 = vmatpush2.bf16.msra.mxu0 %v1427
        %2142 = vmatprep.subr.bf16.mxu0 %v1423
        %2143 = vmatpush2.bf16.msra.mxu0 %v1422
        %2144 = vmatprep.subr.bf16.mxu0 %v1418
        %2145 = vmatpush2.bf16.msra.mxu0 %v1417
        %2146 = vmatprep.mubr.bf16.mxu0 %v656
        %2147 = vmatmul.mubr.bf16.gmra.mxu0 %v655
        %v2148 = vpop.f32.mrf.mxu0
        %v2149 = vadd.f32 0.0, %v2148
        %v2150 = vpop.f32.mrf.mxu0
        %v2151 = vadd.f32 0.0, %v2150
        %v2152 = vpop.f32.mrf.mxu0
        %v2153 = vadd.f32 0.0, %v2152
        %v2154 = vpop.f32.mrf.mxu0
        %v2155 = vadd.f32 0.0, %v2154
        %2156 = vmatprep.mubr.bf16.mxu0 %v661
        %2157 = vmatmul.mubr.bf16.gmra.mxu0 %v660
        %v2158 = vpop.f32.mrf.mxu0
        %v2159 = vadd.f32 0.0, %v2158
        %v2160 = vpop.f32.mrf.mxu0
        %v2161 = vadd.f32 0.0, %v2160
        %v2162 = vpop.f32.mrf.mxu0
        %v2163 = vadd.f32 0.0, %v2162
        %v2164 = vpop.f32.mrf.mxu0
        %v2165 = vadd.f32 0.0, %v2164
        %2166 = vmatprep.mubr.bf16.mxu0 %v666
        %2167 = vmatmul.mubr.bf16.gmra.mxu0 %v665
        %v2168 = vpop.f32.mrf.mxu0
        %v2169 = vadd.f32 0.0, %v2168
        %v2170 = vpop.f32.mrf.mxu0
        %v2171 = vadd.f32 0.0, %v2170
        %v2172 = vpop.f32.mrf.mxu0
        %v2173 = vadd.f32 0.0, %v2172
        %v2174 = vpop.f32.mrf.mxu0
        %v2175 = vadd.f32 0.0, %v2174
        %2176 = vmatprep.mubr.bf16.mxu0 %v671
        %2177 = vmatmul.mubr.bf16.gmra.mxu0 %v670
        %v2178 = vpop.f32.mrf.mxu0
        %v2179 = vadd.f32 0.0, %v2178
        %v2180 = vpop.f32.mrf.mxu0
        %v2181 = vadd.f32 0.0, %v2180
        %v2182 = vpop.f32.mrf.mxu0
        %v2183 = vadd.f32 0.0, %v2182
        %v2184 = vpop.f32.mrf.mxu0
        %v2185 = vadd.f32 0.0, %v2184
        %2186 = vmatprep.mubr.bf16.mxu0 %v676
        %2187 = vmatmul.mubr.bf16.gmra.mxu0 %v675
        %v2188 = vpop.f32.mrf.mxu0
        %v2189 = vadd.f32 0.0, %v2188
        %v2190 = vpop.f32.mrf.mxu0
        %v2191 = vadd.f32 0.0, %v2190
        %v2192 = vpop.f32.mrf.mxu0
        %v2193 = vadd.f32 0.0, %v2192
        %v2194 = vpop.f32.mrf.mxu0
        %v2195 = vadd.f32 0.0, %v2194
        %2196 = vmatprep.mubr.bf16.mxu0 %v681
        %2197 = vmatmul.mubr.bf16.gmra.mxu0 %v680
        %v2198 = vpop.f32.mrf.mxu0
        %v2199 = vadd.f32 0.0, %v2198
        %v2200 = vpop.f32.mrf.mxu0
        %v2201 = vadd.f32 0.0, %v2200
        %v2202 = vpop.f32.mrf.mxu0
        %v2203 = vadd.f32 0.0, %v2202
        %v2204 = vpop.f32.mrf.mxu0
        %v2205 = vadd.f32 0.0, %v2204
        %2206 = vmatprep.mubr.bf16.mxu0 %v686
        %2207 = vmatmul.mubr.bf16.gmra.mxu0 %v685
        %v2208 = vpop.f32.mrf.mxu0
        %v2209 = vadd.f32 0.0, %v2208
        %v2210 = vpop.f32.mrf.mxu0
        %v2211 = vadd.f32 0.0, %v2210
        %v2212 = vpop.f32.mrf.mxu0
        %v2213 = vadd.f32 0.0, %v2212
        %v2214 = vpop.f32.mrf.mxu0
        %v2215 = vadd.f32 0.0, %v2214
        %2216 = vmatprep.mubr.bf16.mxu0 %v691
        %2217 = vmatmul.mubr.bf16.gmra.mxu0 %v690
        %v2218 = vpop.f32.mrf.mxu0
        %v2219 = vadd.f32 0.0, %v2218
        %v2220 = vpop.f32.mrf.mxu0
        %v2221 = vadd.f32 0.0, %v2220
        %v2222 = vpop.f32.mrf.mxu0
        %v2223 = vadd.f32 0.0, %v2222
        %v2224 = vpop.f32.mrf.mxu0
        %v2225 = vadd.f32 0.0, %v2224
        %2226 = vdwg.mxu0
        %2227 = vmatprep.subr.bf16.mxu0 %v1493
        %2228 = vmatpush1.bf16.msra.mxu0 %v1492
        %2229 = vmatprep.subr.bf16.mxu0 %v1488
        %2230 = vmatpush1.bf16.msra.mxu0 %v1487
        %2231 = vmatprep.subr.bf16.mxu0 %v1483
        %2232 = vmatpush1.bf16.msra.mxu0 %v1482
        %2233 = vmatprep.subr.bf16.mxu0 %v1478
        %2234 = vmatpush1.bf16.msra.mxu0 %v1477
        %2235 = vmatprep.subr.bf16.mxu0 %v1473
        %2236 = vmatpush1.bf16.msra.mxu0 %v1472
        %2237 = vmatprep.subr.bf16.mxu0 %v1468
        %2238 = vmatpush1.bf16.msra.mxu0 %v1467
        %2239 = vmatprep.subr.bf16.mxu0 %v1463
        %2240 = vmatpush1.bf16.msra.mxu0 %v1462
        %2241 = vmatprep.subr.bf16.mxu0 %v1458
        %2242 = vmatpush1.bf16.msra.mxu0 %v1457
        %2243 = vmatprep.subr.bf16.mxu0 %v1533
        %2244 = vmatpush2.bf16.msra.mxu0 %v1532
        %2245 = vmatprep.subr.bf16.mxu0 %v1528
        %2246 = vmatpush2.bf16.msra.mxu0 %v1527
        %2247 = vmatprep.subr.bf16.mxu0 %v1523
        %2248 = vmatpush2.bf16.msra.mxu0 %v1522
        %2249 = vmatprep.subr.bf16.mxu0 %v1518
        %2250 = vmatpush2.bf16.msra.mxu0 %v1517
        %2251 = vmatprep.subr.bf16.mxu0 %v1513
        %2252 = vmatpush2.bf16.msra.mxu0 %v1512
        %2253 = vmatprep.subr.bf16.mxu0 %v1508
        %2254 = vmatpush2.bf16.msra.mxu0 %v1507
        %2255 = vmatprep.subr.bf16.mxu0 %v1503
        %2256 = vmatpush2.bf16.msra.mxu0 %v1502
        %2257 = vmatprep.subr.bf16.mxu0 %v1498
        %2258 = vmatpush2.bf16.msra.mxu0 %v1497
        %2259 = vmatprep.mubr.bf16.mxu0 %v658
        %2260 = vmatmul.mubr.bf16.gmra.mxu0 %v657
        %v2261 = vpop.f32.mrf.mxu0
        %v2262 = vadd.f32 %v2149, %v2261
        %v2263 = vpop.f32.mrf.mxu0
        %v2264 = vadd.f32 %v2151, %v2263
        %v2265 = vpop.f32.mrf.mxu0
        %v2266 = vadd.f32 %v2153, %v2265
        %v2267 = vpop.f32.mrf.mxu0
        %v2268 = vadd.f32 %v2155, %v2267
        %2269 = vmatprep.mubr.bf16.mxu0 %v663
        %2270 = vmatmul.mubr.bf16.gmra.mxu0 %v662
        %v2271 = vpop.f32.mrf.mxu0
        %v2272 = vadd.f32 %v2159, %v2271
        %v2273 = vpop.f32.mrf.mxu0
        %v2274 = vadd.f32 %v2161, %v2273
        %v2275 = vpop.f32.mrf.mxu0
        %v2276 = vadd.f32 %v2163, %v2275
        %v2277 = vpop.f32.mrf.mxu0
        %v2278 = vadd.f32 %v2165, %v2277
        %2279 = vmatprep.mubr.bf16.mxu0 %v668
        %2280 = vmatmul.mubr.bf16.gmra.mxu0 %v667
        %v2281 = vpop.f32.mrf.mxu0
        %v2282 = vadd.f32 %v2169, %v2281
        %v2283 = vpop.f32.mrf.mxu0
        %v2284 = vadd.f32 %v2171, %v2283
        %v2285 = vpop.f32.mrf.mxu0
        %v2286 = vadd.f32 %v2173, %v2285
        %v2287 = vpop.f32.mrf.mxu0
        %v2288 = vadd.f32 %v2175, %v2287
        %2289 = vmatprep.mubr.bf16.mxu0 %v673
        %2290 = vmatmul.mubr.bf16.gmra.mxu0 %v672
        %v2291 = vpop.f32.mrf.mxu0
        %v2292 = vadd.f32 %v2179, %v2291
        %v2293 = vpop.f32.mrf.mxu0
        %v2294 = vadd.f32 %v2181, %v2293
        %v2295 = vpop.f32.mrf.mxu0
        %v2296 = vadd.f32 %v2183, %v2295
        %v2297 = vpop.f32.mrf.mxu0
        %v2298 = vadd.f32 %v2185, %v2297
        %2299 = vmatprep.mubr.bf16.mxu0 %v678
        %2300 = vmatmul.mubr.bf16.gmra.mxu0 %v677
        %v2301 = vpop.f32.mrf.mxu0
        %v2302 = vadd.f32 %v2189, %v2301
        %v2303 = vpop.f32.mrf.mxu0
        %v2304 = vadd.f32 %v2191, %v2303
        %v2305 = vpop.f32.mrf.mxu0
        %v2306 = vadd.f32 %v2193, %v2305
        %v2307 = vpop.f32.mrf.mxu0
        %v2308 = vadd.f32 %v2195, %v2307
        %2309 = vmatprep.mubr.bf16.mxu0 %v683
        %2310 = vmatmul.mubr.bf16.gmra.mxu0 %v682
        %v2311 = vpop.f32.mrf.mxu0
        %v2312 = vadd.f32 %v2199, %v2311
        %v2313 = vpop.f32.mrf.mxu0
        %v2314 = vadd.f32 %v2201, %v2313
        %v2315 = vpop.f32.mrf.mxu0
        %v2316 = vadd.f32 %v2203, %v2315
        %v2317 = vpop.f32.mrf.mxu0
        %v2318 = vadd.f32 %v2205, %v2317
        %2319 = vmatprep.mubr.bf16.mxu0 %v688
        %2320 = vmatmul.mubr.bf16.gmra.mxu0 %v687
        %v2321 = vpop.f32.mrf.mxu0
        %v2322 = vadd.f32 %v2209, %v2321
        %v2323 = vpop.f32.mrf.mxu0
        %v2324 = vadd.f32 %v2211, %v2323
        %v2325 = vpop.f32.mrf.mxu0
        %v2326 = vadd.f32 %v2213, %v2325
        %v2327 = vpop.f32.mrf.mxu0
        %v2328 = vadd.f32 %v2215, %v2327
        %2329 = vmatprep.mubr.bf16.mxu0 %v693
        %2330 = vmatmul.mubr.bf16.gmra.mxu0 %v692
        %v2331 = vpop.f32.mrf.mxu0
        %v2332 = vadd.f32 %v2219, %v2331
        %v2333 = vpop.f32.mrf.mxu0
        %v2334 = vadd.f32 %v2221, %v2333
        %v2335 = vpop.f32.mrf.mxu0
        %v2336 = vadd.f32 %v2223, %v2335
        %v2337 = vpop.f32.mrf.mxu0
        %v2338 = vadd.f32 %v2225, %v2337
        %2339 = vdwg.mxu0
        %2340 = vmatprep.subr.bf16.mxu0 %v1573
        %2341 = vmatpush1.bf16.msra.mxu0 %v1572
        %2342 = vmatprep.subr.bf16.mxu0 %v1568
        %2343 = vmatpush1.bf16.msra.mxu0 %v1567
        %2344 = vmatprep.subr.bf16.mxu0 %v1563
        %2345 = vmatpush1.bf16.msra.mxu0 %v1562
        %2346 = vmatprep.subr.bf16.mxu0 %v1558
        %2347 = vmatpush1.bf16.msra.mxu0 %v1557
        %2348 = vmatprep.subr.bf16.mxu0 %v1553
        %2349 = vmatpush1.bf16.msra.mxu0 %v1552
        %2350 = vmatprep.subr.bf16.mxu0 %v1548
        %2351 = vmatpush1.bf16.msra.mxu0 %v1547
        %2352 = vmatprep.subr.bf16.mxu0 %v1543
        %2353 = vmatpush1.bf16.msra.mxu0 %v1542
        %2354 = vmatprep.subr.bf16.mxu0 %v1538
        %2355 = vmatpush1.bf16.msra.mxu0 %v1537
        %2356 = vmatprep.subr.bf16.mxu0 0
        %2357 = vmatpush2.bf16.msra.mxu0 0
        %2358 = vmatprep.subr.bf16.mxu0 0
        %2359 = vmatpush2.bf16.msra.mxu0 0
        %2360 = vmatprep.subr.bf16.mxu0 0
        %2361 = vmatpush2.bf16.msra.mxu0 0
        %2362 = vmatprep.subr.bf16.mxu0 0
        %2363 = vmatpush2.bf16.msra.mxu0 0
        %2364 = vmatprep.subr.bf16.mxu0 0
        %2365 = vmatpush2.bf16.msra.mxu0 0
        %2366 = vmatprep.subr.bf16.mxu0 0
        %2367 = vmatpush2.bf16.msra.mxu0 0
        %2368 = vmatprep.subr.bf16.mxu0 0
        %2369 = vmatpush2.bf16.msra.mxu0 0
        %2370 = vmatprep.subr.bf16.mxu0 0
        %2371 = vmatpush2.bf16.msra.mxu0 0
        %2372 = vmatprep.mubr.bf16.mxu0 0
        %2373 = vmatmul.mubr.bf16.gmra.mxu0 %v659
        %v2374 = vpop.f32.mrf.mxu0
        %v2375 = vadd.f32 %v2262, %v2374
        %v2376 = vpop.f32.mrf.mxu0
        %v2377 = vadd.f32 %v2264, %v2376
        %v2378 = vpop.f32.mrf.mxu0
        %v2379 = vadd.f32 %v2266, %v2378
        %v2380 = vpop.f32.mrf.mxu0
        %v2381 = vadd.f32 %v2268, %v2380
        %2382 = vmatprep.mubr.bf16.mxu0 0
        %2383 = vmatmul.mubr.bf16.gmra.mxu0 %v664
        %v2384 = vpop.f32.mrf.mxu0
        %v2385 = vadd.f32 %v2272, %v2384
        %v2386 = vpop.f32.mrf.mxu0
        %v2387 = vadd.f32 %v2274, %v2386
        %v2388 = vpop.f32.mrf.mxu0
        %v2389 = vadd.f32 %v2276, %v2388
        %v2390 = vpop.f32.mrf.mxu0
        %v2391 = vadd.f32 %v2278, %v2390
        %2392 = vmatprep.mubr.bf16.mxu0 0
        %2393 = vmatmul.mubr.bf16.gmra.mxu0 %v669
        %v2394 = vpop.f32.mrf.mxu0
        %v2395 = vadd.f32 %v2282, %v2394
        %v2396 = vpop.f32.mrf.mxu0
        %v2397 = vadd.f32 %v2284, %v2396
        %v2398 = vpop.f32.mrf.mxu0
        %v2399 = vadd.f32 %v2286, %v2398
        %v2400 = vpop.f32.mrf.mxu0
        %v2401 = vadd.f32 %v2288, %v2400
        %2402 = vmatprep.mubr.bf16.mxu0 0
        %2403 = vmatmul.mubr.bf16.gmra.mxu0 %v674
        %v2404 = vpop.f32.mrf.mxu0
        %v2405 = vadd.f32 %v2292, %v2404
        %v2406 = vpop.f32.mrf.mxu0
        %v2407 = vadd.f32 %v2294, %v2406
        %v2408 = vpop.f32.mrf.mxu0
        %v2409 = vadd.f32 %v2296, %v2408
        %v2410 = vpop.f32.mrf.mxu0
        %v2411 = vadd.f32 %v2298, %v2410
        %2412 = vmatprep.mubr.bf16.mxu0 0
        %2413 = vmatmul.mubr.bf16.gmra.mxu0 %v679
        %v2414 = vpop.f32.mrf.mxu0
        %v2415 = vadd.f32 %v2302, %v2414
        %v2416 = vpop.f32.mrf.mxu0
        %v2417 = vadd.f32 %v2304, %v2416
        %v2418 = vpop.f32.mrf.mxu0
        %v2419 = vadd.f32 %v2306, %v2418
        %v2420 = vpop.f32.mrf.mxu0
        %v2421 = vadd.f32 %v2308, %v2420
        %2422 = vmatprep.mubr.bf16.mxu0 0
        %2423 = vmatmul.mubr.bf16.gmra.mxu0 %v684
        %v2424 = vpop.f32.mrf.mxu0
        %v2425 = vadd.f32 %v2312, %v2424
        %v2426 = vpop.f32.mrf.mxu0
        %v2427 = vadd.f32 %v2314, %v2426
        %v2428 = vpop.f32.mrf.mxu0
        %v2429 = vadd.f32 %v2316, %v2428
        %v2430 = vpop.f32.mrf.mxu0
        %v2431 = vadd.f32 %v2318, %v2430
        %2432 = vmatprep.mubr.bf16.mxu0 0
        %2433 = vmatmul.mubr.bf16.gmra.mxu0 %v689
        %v2434 = vpop.f32.mrf.mxu0
        %v2435 = vadd.f32 %v2322, %v2434
        %v2436 = vpop.f32.mrf.mxu0
        %v2437 = vadd.f32 %v2324, %v2436
        %v2438 = vpop.f32.mrf.mxu0
        %v2439 = vadd.f32 %v2326, %v2438
        %v2440 = vpop.f32.mrf.mxu0
        %v2441 = vadd.f32 %v2328, %v2440
        %2442 = vmatprep.mubr.bf16.mxu0 0
        %2443 = vmatmul.mubr.bf16.gmra.mxu0 %v694
        %v2444 = vpop.f32.mrf.mxu0
        %v2445 = vadd.f32 %v2332, %v2444
        %v2446 = vpop.f32.mrf.mxu0
        %v2447 = vadd.f32 %v2334, %v2446
        %v2448 = vpop.f32.mrf.mxu0
        %v2449 = vadd.f32 %v2336, %v2448
        %v2450 = vpop.f32.mrf.mxu0
        %v2451 = vadd.f32 %v2338, %v2450
        %2452 = vdwg.mxu0
        %2453 = vmatprep.subr.bf16.mxu0 0
        %2454 = vmatpush1.bf16.msra.mxu0 %v1414
        %2455 = vmatprep.subr.bf16.mxu0 0
        %2456 = vmatpush1.bf16.msra.mxu0 %v1409
        %2457 = vmatprep.subr.bf16.mxu0 0
        %2458 = vmatpush1.bf16.msra.mxu0 %v1404
        %2459 = vmatprep.subr.bf16.mxu0 0
        %2460 = vmatpush1.bf16.msra.mxu0 %v1399
        %2461 = vmatprep.subr.bf16.mxu0 0
        %2462 = vmatpush1.bf16.msra.mxu0 %v1394
        %2463 = vmatprep.subr.bf16.mxu0 0
        %2464 = vmatpush1.bf16.msra.mxu0 %v1389
        %2465 = vmatprep.subr.bf16.mxu0 0
        %2466 = vmatpush1.bf16.msra.mxu0 %v1384
        %2467 = vmatprep.subr.bf16.mxu0 0
        %2468 = vmatpush1.bf16.msra.mxu0 %v1379
        %2469 = vmatprep.subr.bf16.mxu0 0
        %2470 = vmatpush2.bf16.msra.mxu0 %v1454
        %2471 = vmatprep.subr.bf16.mxu0 0
        %2472 = vmatpush2.bf16.msra.mxu0 %v1449
        %2473 = vmatprep.subr.bf16.mxu0 0
        %2474 = vmatpush2.bf16.msra.mxu0 %v1444
        %2475 = vmatprep.subr.bf16.mxu0 0
        %2476 = vmatpush2.bf16.msra.mxu0 %v1439
        %2477 = vmatprep.subr.bf16.mxu0 0
        %2478 = vmatpush2.bf16.msra.mxu0 %v1434
        %2479 = vmatprep.subr.bf16.mxu0 0
        %2480 = vmatpush2.bf16.msra.mxu0 %v1429
        %2481 = vmatprep.subr.bf16.mxu0 0
        %2482 = vmatpush2.bf16.msra.mxu0 %v1424
        %2483 = vmatprep.subr.bf16.mxu0 0
        %2484 = vmatpush2.bf16.msra.mxu0 %v1419
        %2485 = vmatprep.mubr.bf16.mxu0 %v656
        %2486 = vmatmul.mubr.bf16.gmra.mxu0 %v655
        %v2487 = vpop.f32.mrf.mxu0
        %v2488 = vadd.f32 0.0, %v2487
        %v2489 = vpop.f32.mrf.mxu0
        %v2490 = vpop.f32.mrf.mxu0
        %v2491 = vadd.f32 0.0, %v2490
        %v2492 = vpop.f32.mrf.mxu0
        %2493 = vmatprep.mubr.bf16.mxu0 %v661
        %2494 = vmatmul.mubr.bf16.gmra.mxu0 %v660
        %v2495 = vpop.f32.mrf.mxu0
        %v2496 = vadd.f32 0.0, %v2495
        %v2497 = vpop.f32.mrf.mxu0
        %v2498 = vpop.f32.mrf.mxu0
        %v2499 = vadd.f32 0.0, %v2498
        %v2500 = vpop.f32.mrf.mxu0
        %2501 = vmatprep.mubr.bf16.mxu0 %v666
        %2502 = vmatmul.mubr.bf16.gmra.mxu0 %v665
        %v2503 = vpop.f32.mrf.mxu0
        %v2504 = vadd.f32 0.0, %v2503
        %v2505 = vpop.f32.mrf.mxu0
        %v2506 = vpop.f32.mrf.mxu0
        %v2507 = vadd.f32 0.0, %v2506
        %v2508 = vpop.f32.mrf.mxu0
        %2509 = vmatprep.mubr.bf16.mxu0 %v671
        %2510 = vmatmul.mubr.bf16.gmra.mxu0 %v670
        %v2511 = vpop.f32.mrf.mxu0
        %v2512 = vadd.f32 0.0, %v2511
        %v2513 = vpop.f32.mrf.mxu0
        %v2514 = vpop.f32.mrf.mxu0
        %v2515 = vadd.f32 0.0, %v2514
        %v2516 = vpop.f32.mrf.mxu0
        %2517 = vmatprep.mubr.bf16.mxu0 %v676
        %2518 = vmatmul.mubr.bf16.gmra.mxu0 %v675
        %v2519 = vpop.f32.mrf.mxu0
        %v2520 = vadd.f32 0.0, %v2519
        %v2521 = vpop.f32.mrf.mxu0
        %v2522 = vpop.f32.mrf.mxu0
        %v2523 = vadd.f32 0.0, %v2522
        %v2524 = vpop.f32.mrf.mxu0
        %2525 = vmatprep.mubr.bf16.mxu0 %v681
        %2526 = vmatmul.mubr.bf16.gmra.mxu0 %v680
        %v2527 = vpop.f32.mrf.mxu0
        %v2528 = vadd.f32 0.0, %v2527
        %v2529 = vpop.f32.mrf.mxu0
        %v2530 = vpop.f32.mrf.mxu0
        %v2531 = vadd.f32 0.0, %v2530
        %v2532 = vpop.f32.mrf.mxu0
        %2533 = vmatprep.mubr.bf16.mxu0 %v686
        %2534 = vmatmul.mubr.bf16.gmra.mxu0 %v685
        %v2535 = vpop.f32.mrf.mxu0
        %v2536 = vadd.f32 0.0, %v2535
        %v2537 = vpop.f32.mrf.mxu0
        %v2538 = vpop.f32.mrf.mxu0
        %v2539 = vadd.f32 0.0, %v2538
        %v2540 = vpop.f32.mrf.mxu0
        %2541 = vmatprep.mubr.bf16.mxu0 %v691
        %2542 = vmatmul.mubr.bf16.gmra.mxu0 %v690
        %v2543 = vpop.f32.mrf.mxu0
        %v2544 = vadd.f32 0.0, %v2543
        %v2545 = vpop.f32.mrf.mxu0
        %v2546 = vpop.f32.mrf.mxu0
        %v2547 = vadd.f32 0.0, %v2546
        %v2548 = vpop.f32.mrf.mxu0
        %2549 = vdwg.mxu0
        %2550 = vmatprep.subr.bf16.mxu0 0
        %2551 = vmatpush1.bf16.msra.mxu0 %v1494
        %2552 = vmatprep.subr.bf16.mxu0 0
        %2553 = vmatpush1.bf16.msra.mxu0 %v1489
        %2554 = vmatprep.subr.bf16.mxu0 0
        %2555 = vmatpush1.bf16.msra.mxu0 %v1484
        %2556 = vmatprep.subr.bf16.mxu0 0
        %2557 = vmatpush1.bf16.msra.mxu0 %v1479
        %2558 = vmatprep.subr.bf16.mxu0 0
        %2559 = vmatpush1.bf16.msra.mxu0 %v1474
        %2560 = vmatprep.subr.bf16.mxu0 0
        %2561 = vmatpush1.bf16.msra.mxu0 %v1469
        %2562 = vmatprep.subr.bf16.mxu0 0
        %2563 = vmatpush1.bf16.msra.mxu0 %v1464
        %2564 = vmatprep.subr.bf16.mxu0 0
        %2565 = vmatpush1.bf16.msra.mxu0 %v1459
        %2566 = vmatprep.subr.bf16.mxu0 0
        %2567 = vmatpush2.bf16.msra.mxu0 %v1534
        %2568 = vmatprep.subr.bf16.mxu0 0
        %2569 = vmatpush2.bf16.msra.mxu0 %v1529
        %2570 = vmatprep.subr.bf16.mxu0 0
        %2571 = vmatpush2.bf16.msra.mxu0 %v1524
        %2572 = vmatprep.subr.bf16.mxu0 0
        %2573 = vmatpush2.bf16.msra.mxu0 %v1519
        %2574 = vmatprep.subr.bf16.mxu0 0
        %2575 = vmatpush2.bf16.msra.mxu0 %v1514
        %2576 = vmatprep.subr.bf16.mxu0 0
        %2577 = vmatpush2.bf16.msra.mxu0 %v1509
        %2578 = vmatprep.subr.bf16.mxu0 0
        %2579 = vmatpush2.bf16.msra.mxu0 %v1504
        %2580 = vmatprep.subr.bf16.mxu0 0
        %2581 = vmatpush2.bf16.msra.mxu0 %v1499
        %2582 = vmatprep.mubr.bf16.mxu0 %v658
        %2583 = vmatmul.mubr.bf16.gmra.mxu0 %v657
        %v2584 = vpop.f32.mrf.mxu0
        %v2585 = vadd.f32 %v2488, %v2584
        %v2586 = vpop.f32.mrf.mxu0
        %v2587 = vpop.f32.mrf.mxu0
        %v2588 = vadd.f32 %v2491, %v2587
        %v2589 = vpop.f32.mrf.mxu0
        %2590 = vmatprep.mubr.bf16.mxu0 %v663
        %2591 = vmatmul.mubr.bf16.gmra.mxu0 %v662
        %v2592 = vpop.f32.mrf.mxu0
        %v2593 = vadd.f32 %v2496, %v2592
        %v2594 = vpop.f32.mrf.mxu0
        %v2595 = vpop.f32.mrf.mxu0
        %v2596 = vadd.f32 %v2499, %v2595
        %v2597 = vpop.f32.mrf.mxu0
        %2598 = vmatprep.mubr.bf16.mxu0 %v668
        %2599 = vmatmul.mubr.bf16.gmra.mxu0 %v667
        %v2600 = vpop.f32.mrf.mxu0
        %v2601 = vadd.f32 %v2504, %v2600
        %v2602 = vpop.f32.mrf.mxu0
        %v2603 = vpop.f32.mrf.mxu0
        %v2604 = vadd.f32 %v2507, %v2603
        %v2605 = vpop.f32.mrf.mxu0
        %2606 = vmatprep.mubr.bf16.mxu0 %v673
        %2607 = vmatmul.mubr.bf16.gmra.mxu0 %v672
        %v2608 = vpop.f32.mrf.mxu0
        %v2609 = vadd.f32 %v2512, %v2608
        %v2610 = vpop.f32.mrf.mxu0
        %v2611 = vpop.f32.mrf.mxu0
        %v2612 = vadd.f32 %v2515, %v2611
        %v2613 = vpop.f32.mrf.mxu0
        %2614 = vmatprep.mubr.bf16.mxu0 %v678
        %2615 = vmatmul.mubr.bf16.gmra.mxu0 %v677
        %v2616 = vpop.f32.mrf.mxu0
        %v2617 = vadd.f32 %v2520, %v2616
        %v2618 = vpop.f32.mrf.mxu0
        %v2619 = vpop.f32.mrf.mxu0
        %v2620 = vadd.f32 %v2523, %v2619
        %v2621 = vpop.f32.mrf.mxu0
        %2622 = vmatprep.mubr.bf16.mxu0 %v683
        %2623 = vmatmul.mubr.bf16.gmra.mxu0 %v682
        %v2624 = vpop.f32.mrf.mxu0
        %v2625 = vadd.f32 %v2528, %v2624
        %v2626 = vpop.f32.mrf.mxu0
        %v2627 = vpop.f32.mrf.mxu0
        %v2628 = vadd.f32 %v2531, %v2627
        %v2629 = vpop.f32.mrf.mxu0
        %2630 = vmatprep.mubr.bf16.mxu0 %v688
        %2631 = vmatmul.mubr.bf16.gmra.mxu0 %v687
        %v2632 = vpop.f32.mrf.mxu0
        %v2633 = vadd.f32 %v2536, %v2632
        %v2634 = vpop.f32.mrf.mxu0
        %v2635 = vpop.f32.mrf.mxu0
        %v2636 = vadd.f32 %v2539, %v2635
        %v2637 = vpop.f32.mrf.mxu0
        %2638 = vmatprep.mubr.bf16.mxu0 %v693
        %2639 = vmatmul.mubr.bf16.gmra.mxu0 %v692
        %v2640 = vpop.f32.mrf.mxu0
        %v2641 = vadd.f32 %v2544, %v2640
        %v2642 = vpop.f32.mrf.mxu0
        %v2643 = vpop.f32.mrf.mxu0
        %v2644 = vadd.f32 %v2547, %v2643
        %v2645 = vpop.f32.mrf.mxu0
        %2646 = vdwg.mxu0
        %2647 = vmatprep.subr.bf16.mxu0 0
        %2648 = vmatpush1.bf16.msra.mxu0 %v1574
        %2649 = vmatprep.subr.bf16.mxu0 0
        %2650 = vmatpush1.bf16.msra.mxu0 %v1569
        %2651 = vmatprep.subr.bf16.mxu0 0
        %2652 = vmatpush1.bf16.msra.mxu0 %v1564
        %2653 = vmatprep.subr.bf16.mxu0 0
        %2654 = vmatpush1.bf16.msra.mxu0 %v1559
        %2655 = vmatprep.subr.bf16.mxu0 0
        %2656 = vmatpush1.bf16.msra.mxu0 %v1554
        %2657 = vmatprep.subr.bf16.mxu0 0
        %2658 = vmatpush1.bf16.msra.mxu0 %v1549
        %2659 = vmatprep.subr.bf16.mxu0 0
        %2660 = vmatpush1.bf16.msra.mxu0 %v1544
        %2661 = vmatprep.subr.bf16.mxu0 0
        %2662 = vmatpush1.bf16.msra.mxu0 %v1539
        %2663 = vmatprep.subr.bf16.mxu0 0
        %2664 = vmatpush2.bf16.msra.mxu0 0
        %2665 = vmatprep.subr.bf16.mxu0 0
        %2666 = vmatpush2.bf16.msra.mxu0 0
        %2667 = vmatprep.subr.bf16.mxu0 0
        %2668 = vmatpush2.bf16.msra.mxu0 0
        %2669 = vmatprep.subr.bf16.mxu0 0
        %2670 = vmatpush2.bf16.msra.mxu0 0
        %2671 = vmatprep.subr.bf16.mxu0 0
        %2672 = vmatpush2.bf16.msra.mxu0 0
        %2673 = vmatprep.subr.bf16.mxu0 0
        %2674 = vmatpush2.bf16.msra.mxu0 0
        %2675 = vmatprep.subr.bf16.mxu0 0
        %2676 = vmatpush2.bf16.msra.mxu0 0
        %2677 = vmatprep.subr.bf16.mxu0 0
        %2678 = vmatpush2.bf16.msra.mxu0 0
        %2679 = vmatprep.mubr.bf16.mxu0 0
        %2680 = vmatmul.mubr.bf16.gmra.mxu0 %v659
        %v2681 = vpop.f32.mrf.mxu0
        %v2682 = vadd.f32 %v2585, %v2681
        %v2683 = vpop.f32.mrf.mxu0
        %v2684 = vpop.f32.mrf.mxu0
        %v2685 = vadd.f32 %v2588, %v2684
        %v2686 = vpop.f32.mrf.mxu0
        %2687 = vmatprep.mubr.bf16.mxu0 0
        %2688 = vmatmul.mubr.bf16.gmra.mxu0 %v664
        %v2689 = vpop.f32.mrf.mxu0
        %v2690 = vadd.f32 %v2593, %v2689
        %v2691 = vpop.f32.mrf.mxu0
        %v2692 = vpop.f32.mrf.mxu0
        %v2693 = vadd.f32 %v2596, %v2692
        %v2694 = vpop.f32.mrf.mxu0
        %2695 = vmatprep.mubr.bf16.mxu0 0
        %2696 = vmatmul.mubr.bf16.gmra.mxu0 %v669
        %v2697 = vpop.f32.mrf.mxu0
        %v2698 = vadd.f32 %v2601, %v2697
        %v2699 = vpop.f32.mrf.mxu0
        %v2700 = vpop.f32.mrf.mxu0
        %v2701 = vadd.f32 %v2604, %v2700
        %v2702 = vpop.f32.mrf.mxu0
        %2703 = vmatprep.mubr.bf16.mxu0 0
        %2704 = vmatmul.mubr.bf16.gmra.mxu0 %v674
        %v2705 = vpop.f32.mrf.mxu0
        %v2706 = vadd.f32 %v2609, %v2705
        %v2707 = vpop.f32.mrf.mxu0
        %v2708 = vpop.f32.mrf.mxu0
        %v2709 = vadd.f32 %v2612, %v2708
        %v2710 = vpop.f32.mrf.mxu0
        %2711 = vmatprep.mubr.bf16.mxu0 0
        %2712 = vmatmul.mubr.bf16.gmra.mxu0 %v679
        %v2713 = vpop.f32.mrf.mxu0
        %v2714 = vadd.f32 %v2617, %v2713
        %v2715 = vpop.f32.mrf.mxu0
        %v2716 = vpop.f32.mrf.mxu0
        %v2717 = vadd.f32 %v2620, %v2716
        %v2718 = vpop.f32.mrf.mxu0
        %2719 = vmatprep.mubr.bf16.mxu0 0
        %2720 = vmatmul.mubr.bf16.gmra.mxu0 %v684
        %v2721 = vpop.f32.mrf.mxu0
        %v2722 = vadd.f32 %v2625, %v2721
        %v2723 = vpop.f32.mrf.mxu0
        %v2724 = vpop.f32.mrf.mxu0
        %v2725 = vadd.f32 %v2628, %v2724
        %v2726 = vpop.f32.mrf.mxu0
        %2727 = vmatprep.mubr.bf16.mxu0 0
        %2728 = vmatmul.mubr.bf16.gmra.mxu0 %v689
        %v2729 = vpop.f32.mrf.mxu0
        %v2730 = vadd.f32 %v2633, %v2729
        %v2731 = vpop.f32.mrf.mxu0
        %v2732 = vpop.f32.mrf.mxu0
        %v2733 = vadd.f32 %v2636, %v2732
        %v2734 = vpop.f32.mrf.mxu0
        %2735 = vmatprep.mubr.bf16.mxu0 0
        %2736 = vmatmul.mubr.bf16.gmra.mxu0 %v694
        %v2737 = vpop.f32.mrf.mxu0
        %v2738 = vadd.f32 %v2641, %v2737
        %v2739 = vpop.f32.mrf.mxu0
        %v2740 = vpop.f32.mrf.mxu0
        %v2741 = vadd.f32 %v2644, %v2740
        %v2742 = vpop.f32.mrf.mxu0
        %2743 = vdwg.mxu0
        %v2744 = vmul.f32 %v2036, %v2036
        %v2745 = vmul.f32 %v2038, %v2038
        %v2746 = vmul.f32 %v2040, %v2040
        %v2747 = vmul.f32 %v2042, %v2042
        %v2748 = vmul.f32 %v2046, %v2046
        %v2749 = vmul.f32 %v2048, %v2048
        %v2750 = vmul.f32 %v2050, %v2050
        %v2751 = vmul.f32 %v2052, %v2052
        %v2752 = vmul.f32 %v2056, %v2056
        %v2753 = vmul.f32 %v2058, %v2058
        %v2754 = vmul.f32 %v2060, %v2060
        %v2755 = vmul.f32 %v2062, %v2062
        %v2756 = vmul.f32 %v2066, %v2066
        %v2757 = vmul.f32 %v2068, %v2068
        %v2758 = vmul.f32 %v2070, %v2070
        %v2759 = vmul.f32 %v2072, %v2072
        %v2760 = vmul.f32 %v2076, %v2076
        %v2761 = vmul.f32 %v2078, %v2078
        %v2762 = vmul.f32 %v2080, %v2080
        %v2763 = vmul.f32 %v2082, %v2082
        %v2764 = vmul.f32 %v2086, %v2086
        %v2765 = vmul.f32 %v2088, %v2088
        %v2766 = vmul.f32 %v2090, %v2090
        %v2767 = vmul.f32 %v2092, %v2092
        %v2768 = vmul.f32 %v2096, %v2096
        %v2769 = vmul.f32 %v2098, %v2098
        %v2770 = vmul.f32 %v2100, %v2100
        %v2771 = vmul.f32 %v2102, %v2102
        %v2772 = vmul.f32 %v2106, %v2106
        %v2773 = vmul.f32 %v2108, %v2108
        %v2774 = vmul.f32 %v2110, %v2110
        %v2775 = vmul.f32 %v2112, %v2112
        %v2776 = vmul.f32 %v2375, %v2375
        %v2777 = vmul.f32 %v2377, %v2377
        %v2778 = vmul.f32 %v2379, %v2379
        %v2779 = vmul.f32 %v2381, %v2381
        %v2780 = vmul.f32 %v2385, %v2385
        %v2781 = vmul.f32 %v2387, %v2387
        %v2782 = vmul.f32 %v2389, %v2389
        %v2783 = vmul.f32 %v2391, %v2391
        %v2784 = vmul.f32 %v2395, %v2395
        %v2785 = vmul.f32 %v2397, %v2397
        %v2786 = vmul.f32 %v2399, %v2399
        %v2787 = vmul.f32 %v2401, %v2401
        %v2788 = vmul.f32 %v2405, %v2405
        %v2789 = vmul.f32 %v2407, %v2407
        %v2790 = vmul.f32 %v2409, %v2409
        %v2791 = vmul.f32 %v2411, %v2411
        %v2792 = vmul.f32 %v2415, %v2415
        %v2793 = vmul.f32 %v2417, %v2417
        %v2794 = vmul.f32 %v2419, %v2419
        %v2795 = vmul.f32 %v2421, %v2421
        %v2796 = vmul.f32 %v2425, %v2425
        %v2797 = vmul.f32 %v2427, %v2427
        %v2798 = vmul.f32 %v2429, %v2429
        %v2799 = vmul.f32 %v2431, %v2431
        %v2800 = vmul.f32 %v2435, %v2435
        %v2801 = vmul.f32 %v2437, %v2437
        %v2802 = vmul.f32 %v2439, %v2439
        %v2803 = vmul.f32 %v2441, %v2441
        %v2804 = vmul.f32 %v2445, %v2445
        %v2805 = vmul.f32 %v2447, %v2447
        %v2806 = vmul.f32 %v2449, %v2449
        %v2807 = vmul.f32 %v2451, %v2451
        %v2808 = vadd.f32 %v2744, %v2776
        %v2809 = vadd.f32 %v2745, %v2777
        %v2810 = vadd.f32 %v2746, %v2778
        %v2811 = vadd.f32 %v2747, %v2779
        %v2812 = vadd.f32 %v2748, %v2780
        %v2813 = vadd.f32 %v2749, %v2781
        %v2814 = vadd.f32 %v2750, %v2782
        %v2815 = vadd.f32 %v2751, %v2783
        %v2816 = vadd.f32 %v2752, %v2784
        %v2817 = vadd.f32 %v2753, %v2785
        %v2818 = vadd.f32 %v2754, %v2786
        %v2819 = vadd.f32 %v2755, %v2787
        %v2820 = vadd.f32 %v2756, %v2788
        %v2821 = vadd.f32 %v2757, %v2789
        %v2822 = vadd.f32 %v2758, %v2790
        %v2823 = vadd.f32 %v2759, %v2791
        %v2824 = vadd.f32 %v2760, %v2792
        %v2825 = vadd.f32 %v2761, %v2793
        %v2826 = vadd.f32 %v2762, %v2794
        %v2827 = vadd.f32 %v2763, %v2795
        %v2828 = vadd.f32 %v2764, %v2796
        %v2829 = vadd.f32 %v2765, %v2797
        %v2830 = vadd.f32 %v2766, %v2798
        %v2831 = vadd.f32 %v2767, %v2799
        %v2832 = vadd.f32 %v2768, %v2800
        %v2833 = vadd.f32 %v2769, %v2801
        %v2834 = vadd.f32 %v2770, %v2802
        %v2835 = vadd.f32 %v2771, %v2803
        %v2836 = vadd.f32 %v2772, %v2804
        %v2837 = vadd.f32 %v2773, %v2805
        %v2838 = vadd.f32 %v2774, %v2806
        %v2839 = vadd.f32 %v2775, %v2807
        %v2840 = vmul.f32 %v2682, %v2682
        %v2841 = vmul.f32 %v2685, %v2685
        %v2842 = vmul.f32 %v2690, %v2690
        %v2843 = vmul.f32 %v2693, %v2693
        %v2844 = vmul.f32 %v2698, %v2698
        %v2845 = vmul.f32 %v2701, %v2701
        %v2846 = vmul.f32 %v2706, %v2706
        %v2847 = vmul.f32 %v2709, %v2709
        %v2848 = vmul.f32 %v2714, %v2714
        %v2849 = vmul.f32 %v2717, %v2717
        %v2850 = vmul.f32 %v2722, %v2722
        %v2851 = vmul.f32 %v2725, %v2725
        %v2852 = vmul.f32 %v2730, %v2730
        %v2853 = vmul.f32 %v2733, %v2733
        %v2854 = vmul.f32 %v2738, %v2738
        %v2855 = vmul.f32 %v2741, %v2741
        %v2856 = vpack.c.bf16 %v2810, %v2808
        %v2857 = vpack.c.bf16 %v2811, %v2809
        %v2858 = vpack.c.bf16 %v2841, %v2840
        %v2859 = vpack.c.bf16 %v2814, %v2812
        %v2860 = vpack.c.bf16 %v2815, %v2813
        %v2861 = vpack.c.bf16 %v2843, %v2842
        %v2862 = vpack.c.bf16 %v2818, %v2816
        %v2863 = vpack.c.bf16 %v2819, %v2817
        %v2864 = vpack.c.bf16 %v2845, %v2844
        %v2865 = vpack.c.bf16 %v2822, %v2820
        %v2866 = vpack.c.bf16 %v2823, %v2821
        %v2867 = vpack.c.bf16 %v2847, %v2846
        %v2868 = vpack.c.bf16 %v2826, %v2824
        %v2869 = vpack.c.bf16 %v2827, %v2825
        %v2870 = vpack.c.bf16 %v2849, %v2848
        %v2871 = vpack.c.bf16 %v2830, %v2828
        %v2872 = vpack.c.bf16 %v2831, %v2829
        %v2873 = vpack.c.bf16 %v2851, %v2850
        %v2874 = vpack.c.bf16 %v2834, %v2832
        %v2875 = vpack.c.bf16 %v2835, %v2833
        %v2876 = vpack.c.bf16 %v2853, %v2852
        %v2877 = vpack.c.bf16 %v2838, %v2836
        %v2878 = vpack.c.bf16 %v2839, %v2837
        %v2879 = vpack.c.bf16 %v2855, %v2854
        %v2880 = vld [vmem:[#allocation7] sm:$0xff]
        %v2881 = vld [vmem:[#allocation7 + $0x8] sm:$0xff]
        %v2882 = vld [vmem:[#allocation7 + $0x10] sm:$0xff]
        %v2883 = vld [vmem:[#allocation7 + $0x18] sm:$0xff]
        %v2884 = vld [vmem:[#allocation7 + $0x20] sm:$0xff]
        %v2885 = vld [vmem:[#allocation7 + $0x28] sm:$0xff]
        %v2886 = vld [vmem:[#allocation7 + $0x30] sm:$0xff]
        %v2887 = vld [vmem:[#allocation7 + $0x38] sm:$0xff]
        %v2888 = vld [vmem:[#allocation7 + $0x40] sm:$0xff]
        %v2889 = vld [vmem:[#allocation7 + $0x48] sm:$0xff]
        %v2890 = vld [vmem:[#allocation7 + $0x50] sm:$0xff]
        %v2891 = vld [vmem:[#allocation7 + $0x58] sm:$0xff]
        %v2892 = vld [vmem:[#allocation7 + $0x60] sm:$0xff]
        %v2893 = vld [vmem:[#allocation7 + $0x68] sm:$0xff]
        %v2894 = vld [vmem:[#allocation7 + $0x70] sm:$0xff]
        %v2895 = vld [vmem:[#allocation7 + $0x78] sm:$0xff]
        %v2896 = vld [vmem:[#allocation7 + $0x80] sm:$0xff]
        %v2897 = vld [vmem:[#allocation7 + $0x88] sm:$0xff]
        %v2898 = vld [vmem:[#allocation7 + $0x90] sm:$0xff]
        %v2899 = vld [vmem:[#allocation7 + $0x98] sm:$0xff]
        %v2900 = vld [vmem:[#allocation7 + $0xa0] sm:$0xff]
        %v2901 = vld [vmem:[#allocation7 + $0xa8] sm:$0xff]
        %v2902 = vld [vmem:[#allocation7 + $0xb0] sm:$0xff]
        %v2903 = vld [vmem:[#allocation7 + $0xb8] sm:$0xff]
        %v2904 = vld [vmem:[#allocation7 + $0xc0] sm:$0xff]
        %v2905 = vld [vmem:[#allocation7 + $0xc8] sm:$0xff]
        %v2906 = vld [vmem:[#allocation7 + $0xd0] sm:$0xff]
        %v2907 = vld [vmem:[#allocation7 + $0xd8] sm:$0xff]
        %v2908 = vld [vmem:[#allocation7 + $0xe0] sm:$0xff]
        %v2909 = vld [vmem:[#allocation7 + $0xe8] sm:$0xff]
        %v2910 = vld [vmem:[#allocation7 + $0xf0] sm:$0xff]
        %v2911 = vld [vmem:[#allocation7 + $0xf8] sm:$0xff]
        %v2912 = vld [vmem:[#allocation7 + $0x100] sm:$0xff]
        %v2913 = vld [vmem:[#allocation7 + $0x108] sm:$0xff]
        %v2914 = vld [vmem:[#allocation7 + $0x110] sm:$0xff]
        %v2915 = vld [vmem:[#allocation7 + $0x118] sm:$0xff]
        %v2916 = vld [vmem:[#allocation7 + $0x120] sm:$0xff]
        %v2917 = vld [vmem:[#allocation7 + $0x128] sm:$0xff]
        %v2918 = vld [vmem:[#allocation7 + $0x130] sm:$0xff]
        %v2919 = vld [vmem:[#allocation7 + $0x138] sm:$0xff]
        %v2920 = vld [vmem:[#allocation7 + $0x140] sm:$0xff]
        %v2921 = vld [vmem:[#allocation7 + $0x148] sm:$0xff]
        %v2922 = vld [vmem:[#allocation7 + $0x150] sm:$0xff]
        %v2923 = vld [vmem:[#allocation7 + $0x158] sm:$0xff]
        %v2924 = vld [vmem:[#allocation7 + $0x160] sm:$0xff]
        %v2925 = vld [vmem:[#allocation7 + $0x168] sm:$0xff]
        %v2926 = vld [vmem:[#allocation7 + $0x170] sm:$0xff]
        %v2927 = vld [vmem:[#allocation7 + $0x178] sm:$0xff]
        %v2928 = vld [vmem:[#allocation7 + $0x180] sm:$0xff]
        %v2929 = vld [vmem:[#allocation7 + $0x188] sm:$0xff]
        %v2930 = vld [vmem:[#allocation7 + $0x190] sm:$0xff]
        %v2931 = vld [vmem:[#allocation7 + $0x198] sm:$0xff]
        %v2932 = vld [vmem:[#allocation7 + $0x1a0] sm:$0xff]
        %v2933 = vld [vmem:[#allocation7 + $0x1a8] sm:$0xff]
        %v2934 = vld [vmem:[#allocation7 + $0x1b0] sm:$0xff]
        %v2935 = vld [vmem:[#allocation7 + $0x1b8] sm:$0xff]
        %v2936 = vld [vmem:[#allocation7 + $0x1c0] sm:$0xff]
        %v2937 = vld [vmem:[#allocation7 + $0x1c8] sm:$0xff]
        %v2938 = vld [vmem:[#allocation7 + $0x1d0] sm:$0xff]
        %v2939 = vld [vmem:[#allocation7 + $0x1d8] sm:$0xff]
        %v2940 = vld [vmem:[#allocation7 + $0x1e0] sm:$0xff]
        %v2941 = vld [vmem:[#allocation7 + $0x1e8] sm:$0xff]
        %v2942 = vld [vmem:[#allocation7 + $0x1f0] sm:$0xff]
        %v2943 = vld [vmem:[#allocation7 + $0x1f8] sm:$0xff]
        %v2944 = vld [vmem:[#allocation7 + $0x200] sm:$0xff]
        %v2945 = vld [vmem:[#allocation7 + $0x208] sm:$0xff]
        %v2946 = vld [vmem:[#allocation7 + $0x210] sm:$0xff]
        %v2947 = vld [vmem:[#allocation7 + $0x218] sm:$0xff]
        %v2948 = vld [vmem:[#allocation7 + $0x220] sm:$0xff]
        %v2949 = vld [vmem:[#allocation7 + $0x228] sm:$0xff]
        %v2950 = vld [vmem:[#allocation7 + $0x230] sm:$0xff]
        %v2951 = vld [vmem:[#allocation7 + $0x238] sm:$0xff]
        %v2952 = vld [vmem:[#allocation7 + $0x240] sm:$0xff]
        %v2953 = vld [vmem:[#allocation7 + $0x248] sm:$0xff]
        %v2954 = vld [vmem:[#allocation7 + $0x250] sm:$0xff]
        %v2955 = vld [vmem:[#allocation7 + $0x258] sm:$0xff]
        %v2956 = vld [vmem:[#allocation7 + $0x260] sm:$0xff]
        %v2957 = vld [vmem:[#allocation7 + $0x268] sm:$0xff]
        %v2958 = vld [vmem:[#allocation7 + $0x270] sm:$0xff]
        %v2959 = vld [vmem:[#allocation7 + $0x278] sm:$0xff]
        %v2960 = vld [vmem:[#allocation7 + $0x280] sm:$0xff]
        %v2961 = vld [vmem:[#allocation7 + $0x288] sm:$0xff]
        %v2962 = vld [vmem:[#allocation7 + $0x290] sm:$0xff]
        %v2963 = vld [vmem:[#allocation7 + $0x298] sm:$0xff]
        %v2964 = vld [vmem:[#allocation7 + $0x2a0] sm:$0xff]
        %v2965 = vld [vmem:[#allocation7 + $0x2a8] sm:$0xff]
        %v2966 = vld [vmem:[#allocation7 + $0x2b0] sm:$0xff]
        %v2967 = vld [vmem:[#allocation7 + $0x2b8] sm:$0xff]
        %v2968 = vld [vmem:[#allocation7 + $0x2c0] sm:$0xff]
        %v2969 = vld [vmem:[#allocation7 + $0x2c8] sm:$0xff]
        %v2970 = vld [vmem:[#allocation7 + $0x2d0] sm:$0xff]
        %v2971 = vld [vmem:[#allocation7 + $0x2d8] sm:$0xff]
        %v2972 = vld [vmem:[#allocation7 + $0x2e0] sm:$0xff]
        %v2973 = vld [vmem:[#allocation7 + $0x2e8] sm:$0xff]
        %v2974 = vld [vmem:[#allocation7 + $0x2f0] sm:$0xff]
        %v2975 = vld [vmem:[#allocation7 + $0x2f8] sm:$0xff]
        %v2976 = vld [vmem:[#allocation7 + $0x300] sm:$0xff]
        %v2977 = vld [vmem:[#allocation7 + $0x308] sm:$0xff]
        %v2978 = vld [vmem:[#allocation7 + $0x310] sm:$0xff]
        %v2979 = vld [vmem:[#allocation7 + $0x318] sm:$0xff]
        %v2980 = vld [vmem:[#allocation7 + $0x320] sm:$0xff]
        %v2981 = vld [vmem:[#allocation7 + $0x328] sm:$0xff]
        %v2982 = vld [vmem:[#allocation7 + $0x330] sm:$0xff]
        %v2983 = vld [vmem:[#allocation7 + $0x338] sm:$0xff]
        %v2984 = vld [vmem:[#allocation7 + $0x340] sm:$0xff]
        %v2985 = vld [vmem:[#allocation7 + $0x348] sm:$0xff]
        %v2986 = vld [vmem:[#allocation7 + $0x350] sm:$0xff]
        %v2987 = vld [vmem:[#allocation7 + $0x358] sm:$0xff]
        %v2988 = vld [vmem:[#allocation7 + $0x360] sm:$0xff]
        %v2989 = vld [vmem:[#allocation7 + $0x368] sm:$0xff]
        %v2990 = vld [vmem:[#allocation7 + $0x370] sm:$0xff]
        %v2991 = vld [vmem:[#allocation7 + $0x378] sm:$0xff]
        %v2992 = vld [vmem:[#allocation7 + $0x380] sm:$0xff]
        %v2993 = vld [vmem:[#allocation7 + $0x388] sm:$0xff]
        %v2994 = vld [vmem:[#allocation7 + $0x390] sm:$0xff]
        %v2995 = vld [vmem:[#allocation7 + $0x398] sm:$0xff]
        %v2996 = vld [vmem:[#allocation7 + $0x3a0] sm:$0xff]
        %v2997 = vld [vmem:[#allocation7 + $0x3a8] sm:$0xff]
        %v2998 = vld [vmem:[#allocation7 + $0x3b0] sm:$0xff]
        %v2999 = vld [vmem:[#allocation7 + $0x3b8] sm:$0xff]
        %v3000 = vld [vmem:[#allocation7 + $0x3c0] sm:$0xff]
        %v3001 = vld [vmem:[#allocation7 + $0x3c8] sm:$0xff]
        %v3002 = vld [vmem:[#allocation7 + $0x3d0] sm:$0xff]
        %v3003 = vld [vmem:[#allocation7 + $0x3d8] sm:$0xff]
        %v3004 = vld [vmem:[#allocation7 + $0x3e0] sm:$0xff]
        %v3005 = vld [vmem:[#allocation7 + $0x3e8] sm:$0xff]
        %v3006 = vld [vmem:[#allocation7 + $0x3f0] sm:$0xff]
        %v3007 = vld [vmem:[#allocation7 + $0x3f8] sm:$0xff]
        %v3008 = vld [vmem:[#allocation7 + $0x400] sm:$0xff]
        %v3009 = vld [vmem:[#allocation7 + $0x408] sm:$0xff]
        %v3010 = vld [vmem:[#allocation7 + $0x410] sm:$0xff]
        %v3011 = vld [vmem:[#allocation7 + $0x418] sm:$0xff]
        %v3012 = vld [vmem:[#allocation7 + $0x420] sm:$0xff]
        %v3013 = vld [vmem:[#allocation7 + $0x428] sm:$0xff]
        %v3014 = vld [vmem:[#allocation7 + $0x430] sm:$0xff]
        %v3015 = vld [vmem:[#allocation7 + $0x438] sm:$0xff]
        %v3016 = vld [vmem:[#allocation7 + $0x440] sm:$0xff]
        %v3017 = vld [vmem:[#allocation7 + $0x448] sm:$0xff]
        %v3018 = vld [vmem:[#allocation7 + $0x450] sm:$0xff]
        %v3019 = vld [vmem:[#allocation7 + $0x458] sm:$0xff]
        %v3020 = vld [vmem:[#allocation7 + $0x460] sm:$0xff]
        %v3021 = vld [vmem:[#allocation7 + $0x468] sm:$0xff]
        %v3022 = vld [vmem:[#allocation7 + $0x470] sm:$0xff]
        %v3023 = vld [vmem:[#allocation7 + $0x478] sm:$0xff]
        %v3168 = vunpack.c.l.b16 %v2880
        %v3169 = vunpack.c.h.b16 %v2880
        %v3170 = vunpack.c.l.b16 %v2881
        %v3171 = vunpack.c.h.b16 %v2881
        %v3172 = vunpack.c.l.b16 %v2882
        %v3173 = vunpack.c.h.b16 %v2882
        %v3174 = vunpack.c.l.b16 %v2883
        %v3175 = vunpack.c.h.b16 %v2883
        %v3176 = vunpack.c.l.b16 %v2884
        %v3177 = vunpack.c.h.b16 %v2884
        %v3178 = vunpack.c.l.b16 %v2885
        %v3179 = vunpack.c.h.b16 %v2885
        %v3180 = vunpack.c.l.b16 %v2886
        %v3181 = vunpack.c.h.b16 %v2886
        %v3182 = vunpack.c.l.b16 %v2887
        %v3183 = vunpack.c.h.b16 %v2887
        %v3184 = vunpack.c.l.b16 %v2888
        %v3185 = vunpack.c.h.b16 %v2888
        %v3186 = vunpack.c.l.b16 %v2889
        %v3187 = vunpack.c.h.b16 %v2889
        %v3188 = vunpack.c.l.b16 %v2890
        %v3189 = vunpack.c.h.b16 %v2890
        %v3190 = vunpack.c.l.b16 %v2891
        %v3191 = vunpack.c.h.b16 %v2891
        %v3192 = vunpack.c.l.b16 %v2892
        %v3193 = vunpack.c.h.b16 %v2892
        %v3194 = vunpack.c.l.b16 %v2893
        %v3195 = vunpack.c.h.b16 %v2893
        %v3196 = vunpack.c.l.b16 %v2894
        %v3197 = vunpack.c.h.b16 %v2894
        %v3198 = vunpack.c.l.b16 %v2895
        %v3199 = vunpack.c.h.b16 %v2895
        %v3200 = vunpack.c.l.b16 %v2896
        %v3201 = vunpack.c.h.b16 %v2896
        %v3202 = vunpack.c.l.b16 %v2897
        %v3203 = vunpack.c.h.b16 %v2897
        %v3204 = vunpack.c.l.b16 %v2898
        %v3205 = vunpack.c.h.b16 %v2898
        %v3206 = vunpack.c.l.b16 %v2899
        %v3207 = vunpack.c.h.b16 %v2899
        %v3208 = vunpack.c.l.b16 %v2900
        %v3209 = vunpack.c.h.b16 %v2900
        %v3210 = vunpack.c.l.b16 %v2901
        %v3211 = vunpack.c.h.b16 %v2901
        %v3212 = vunpack.c.l.b16 %v2902
        %v3213 = vunpack.c.h.b16 %v2902
        %v3214 = vunpack.c.l.b16 %v2903
        %v3215 = vunpack.c.h.b16 %v2903
        %v3216 = vunpack.c.l.b16 %v2904
        %v3217 = vunpack.c.h.b16 %v2904
        %v3218 = vunpack.c.l.b16 %v2905
        %v3219 = vunpack.c.h.b16 %v2905
        %v3220 = vunpack.c.l.b16 %v2906
        %v3221 = vunpack.c.h.b16 %v2906
        %v3222 = vunpack.c.l.b16 %v2907
        %v3223 = vunpack.c.h.b16 %v2907
        %v3224 = vunpack.c.l.b16 %v2908
        %v3225 = vunpack.c.h.b16 %v2908
        %v3226 = vunpack.c.l.b16 %v2909
        %v3227 = vunpack.c.h.b16 %v2909
        %v3228 = vunpack.c.l.b16 %v2910
        %v3229 = vunpack.c.h.b16 %v2910
        %v3230 = vunpack.c.l.b16 %v2911
        %v3231 = vunpack.c.h.b16 %v2911
        %v3232 = vunpack.c.l.b16 %v2912
        %v3233 = vunpack.c.h.b16 %v2912
        %v3234 = vunpack.c.l.b16 %v2913
        %v3235 = vunpack.c.h.b16 %v2913
        %v3236 = vunpack.c.l.b16 %v2914
        %v3237 = vunpack.c.h.b16 %v2914
        %v3238 = vunpack.c.l.b16 %v2915
        %v3239 = vunpack.c.h.b16 %v2915
        %v3240 = vunpack.c.l.b16 %v2916
        %v3241 = vunpack.c.h.b16 %v2916
        %v3242 = vunpack.c.l.b16 %v2917
        %v3243 = vunpack.c.h.b16 %v2917
        %v3244 = vunpack.c.l.b16 %v2918
        %v3245 = vunpack.c.h.b16 %v2918
        %v3246 = vunpack.c.l.b16 %v2919
        %v3247 = vunpack.c.h.b16 %v2919
        %v3248 = vunpack.c.l.b16 %v2920
        %v3249 = vunpack.c.h.b16 %v2920
        %v3250 = vunpack.c.l.b16 %v2921
        %v3251 = vunpack.c.h.b16 %v2921
        %v3252 = vunpack.c.l.b16 %v2922
        %v3253 = vunpack.c.h.b16 %v2922
        %v3254 = vunpack.c.l.b16 %v2923
        %v3255 = vunpack.c.h.b16 %v2923
        %v3256 = vunpack.c.l.b16 %v2924
        %v3257 = vunpack.c.h.b16 %v2924
        %v3258 = vunpack.c.l.b16 %v2925
        %v3259 = vunpack.c.h.b16 %v2925
        %v3260 = vunpack.c.l.b16 %v2926
        %v3261 = vunpack.c.h.b16 %v2926
        %v3262 = vunpack.c.l.b16 %v2927
        %v3263 = vunpack.c.h.b16 %v2927
        %v3264 = vunpack.c.l.b16 %v2928
        %v3265 = vunpack.c.h.b16 %v2928
        %v3266 = vunpack.c.l.b16 %v2929
        %v3267 = vunpack.c.h.b16 %v2929
        %v3268 = vunpack.c.l.b16 %v2930
        %v3269 = vunpack.c.h.b16 %v2930
        %v3270 = vunpack.c.l.b16 %v2931
        %v3271 = vunpack.c.h.b16 %v2931
        %v3272 = vunpack.c.l.b16 %v2932
        %v3273 = vunpack.c.h.b16 %v2932
        %v3274 = vunpack.c.l.b16 %v2933
        %v3275 = vunpack.c.h.b16 %v2933
        %v3276 = vunpack.c.l.b16 %v2934
        %v3277 = vunpack.c.h.b16 %v2934
        %v3278 = vunpack.c.l.b16 %v2935
        %v3279 = vunpack.c.h.b16 %v2935
        %v3280 = vunpack.c.l.b16 %v2936
        %v3281 = vunpack.c.h.b16 %v2936
        %v3282 = vunpack.c.l.b16 %v2937
        %v3283 = vunpack.c.h.b16 %v2937
        %v3284 = vunpack.c.l.b16 %v2938
        %v3285 = vunpack.c.h.b16 %v2938
        %v3286 = vunpack.c.l.b16 %v2939
        %v3287 = vunpack.c.h.b16 %v2939
        %v3288 = vunpack.c.l.b16 %v2940
        %v3289 = vunpack.c.h.b16 %v2940
        %v3290 = vunpack.c.l.b16 %v2941
        %v3291 = vunpack.c.h.b16 %v2941
        %v3292 = vunpack.c.l.b16 %v2942
        %v3293 = vunpack.c.h.b16 %v2942
        %v3294 = vunpack.c.l.b16 %v2943
        %v3295 = vunpack.c.h.b16 %v2943
        %v3296 = vunpack.c.l.b16 %v2944
        %v3297 = vunpack.c.h.b16 %v2944
        %v3298 = vunpack.c.l.b16 %v2945
        %v3299 = vunpack.c.h.b16 %v2945
        %v3300 = vunpack.c.l.b16 %v2946
        %v3301 = vunpack.c.h.b16 %v2946
        %v3302 = vunpack.c.l.b16 %v2947
        %v3303 = vunpack.c.h.b16 %v2947
        %v3304 = vunpack.c.l.b16 %v2948
        %v3305 = vunpack.c.h.b16 %v2948
        %v3306 = vunpack.c.l.b16 %v2949
        %v3307 = vunpack.c.h.b16 %v2949
        %v3308 = vunpack.c.l.b16 %v2950
        %v3309 = vunpack.c.h.b16 %v2950
        %v3310 = vunpack.c.l.b16 %v2951
        %v3311 = vunpack.c.h.b16 %v2951
        %v3312 = vunpack.c.l.b16 %v2952
        %v3313 = vunpack.c.h.b16 %v2952
        %v3314 = vunpack.c.l.b16 %v2953
        %v3315 = vunpack.c.h.b16 %v2953
        %v3316 = vunpack.c.l.b16 %v2954
        %v3317 = vunpack.c.h.b16 %v2954
        %v3318 = vunpack.c.l.b16 %v2955
        %v3319 = vunpack.c.h.b16 %v2955
        %v3320 = vunpack.c.l.b16 %v2956
        %v3321 = vunpack.c.h.b16 %v2956
        %v3322 = vunpack.c.l.b16 %v2957
        %v3323 = vunpack.c.h.b16 %v2957
        %v3324 = vunpack.c.l.b16 %v2958
        %v3325 = vunpack.c.h.b16 %v2958
        %v3326 = vunpack.c.l.b16 %v2959
        %v3327 = vunpack.c.h.b16 %v2959
        %v3328 = vunpack.c.l.b16 %v2960
        %v3329 = vunpack.c.h.b16 %v2960
        %v3330 = vunpack.c.l.b16 %v2961
        %v3331 = vunpack.c.h.b16 %v2961
        %v3332 = vunpack.c.l.b16 %v2962
        %v3333 = vunpack.c.h.b16 %v2962
        %v3334 = vunpack.c.l.b16 %v2963
        %v3335 = vunpack.c.h.b16 %v2963
        %v3336 = vunpack.c.l.b16 %v2964
        %v3337 = vunpack.c.h.b16 %v2964
        %v3338 = vunpack.c.l.b16 %v2965
        %v3339 = vunpack.c.h.b16 %v2965
        %v3340 = vunpack.c.l.b16 %v2966
        %v3341 = vunpack.c.h.b16 %v2966
        %v3342 = vunpack.c.l.b16 %v2967
        %v3343 = vunpack.c.h.b16 %v2967
        %v3344 = vunpack.c.l.b16 %v2968
        %v3345 = vunpack.c.h.b16 %v2968
        %v3346 = vunpack.c.l.b16 %v2969
        %v3347 = vunpack.c.h.b16 %v2969
        %v3348 = vunpack.c.l.b16 %v2970
        %v3349 = vunpack.c.h.b16 %v2970
        %v3350 = vunpack.c.l.b16 %v2971
        %v3351 = vunpack.c.h.b16 %v2971
        %v3352 = vunpack.c.l.b16 %v2972
        %v3353 = vunpack.c.h.b16 %v2972
        %v3354 = vunpack.c.l.b16 %v2973
        %v3355 = vunpack.c.h.b16 %v2973
        %v3356 = vunpack.c.l.b16 %v2974
        %v3357 = vunpack.c.h.b16 %v2974
        %v3358 = vunpack.c.l.b16 %v2975
        %v3359 = vunpack.c.h.b16 %v2975
        %v3360 = vunpack.c.l.b16 %v2976
        %v3361 = vunpack.c.h.b16 %v2976
        %v3362 = vunpack.c.l.b16 %v2977
        %v3363 = vunpack.c.h.b16 %v2977
        %v3364 = vunpack.c.l.b16 %v2978
        %v3365 = vunpack.c.h.b16 %v2978
        %v3366 = vunpack.c.l.b16 %v2979
        %v3367 = vunpack.c.h.b16 %v2979
        %v3368 = vunpack.c.l.b16 %v2980
        %v3369 = vunpack.c.h.b16 %v2980
        %v3370 = vunpack.c.l.b16 %v2981
        %v3371 = vunpack.c.h.b16 %v2981
        %v3372 = vunpack.c.l.b16 %v2982
        %v3373 = vunpack.c.h.b16 %v2982
        %v3374 = vunpack.c.l.b16 %v2983
        %v3375 = vunpack.c.h.b16 %v2983
        %v3376 = vunpack.c.l.b16 %v2984
        %v3377 = vunpack.c.h.b16 %v2984
        %v3378 = vunpack.c.l.b16 %v2985
        %v3379 = vunpack.c.h.b16 %v2985
        %v3380 = vunpack.c.l.b16 %v2986
        %v3381 = vunpack.c.h.b16 %v2986
        %v3382 = vunpack.c.l.b16 %v2987
        %v3383 = vunpack.c.h.b16 %v2987
        %v3384 = vunpack.c.l.b16 %v2988
        %v3385 = vunpack.c.h.b16 %v2988
        %v3386 = vunpack.c.l.b16 %v2989
        %v3387 = vunpack.c.h.b16 %v2989
        %v3388 = vunpack.c.l.b16 %v2990
        %v3389 = vunpack.c.h.b16 %v2990
        %v3390 = vunpack.c.l.b16 %v2991
        %v3391 = vunpack.c.h.b16 %v2991
        %v3392 = vunpack.c.l.b16 %v2992
        %v3393 = vunpack.c.h.b16 %v2992
        %v3394 = vunpack.c.l.b16 %v2993
        %v3395 = vunpack.c.h.b16 %v2993
        %v3396 = vunpack.c.l.b16 %v2994
        %v3397 = vunpack.c.h.b16 %v2994
        %v3398 = vunpack.c.l.b16 %v2995
        %v3399 = vunpack.c.h.b16 %v2995
        %v3400 = vunpack.c.l.b16 %v2996
        %v3401 = vunpack.c.h.b16 %v2996
        %v3402 = vunpack.c.l.b16 %v2997
        %v3403 = vunpack.c.h.b16 %v2997
        %v3404 = vunpack.c.l.b16 %v2998
        %v3405 = vunpack.c.h.b16 %v2998
        %v3406 = vunpack.c.l.b16 %v2999
        %v3407 = vunpack.c.h.b16 %v2999
        %v3408 = vunpack.c.l.b16 %v3000
        %v3409 = vunpack.c.h.b16 %v3000
        %v3410 = vunpack.c.l.b16 %v3001
        %v3411 = vunpack.c.h.b16 %v3001
        %v3412 = vunpack.c.l.b16 %v3002
        %v3413 = vunpack.c.h.b16 %v3002
        %v3414 = vunpack.c.l.b16 %v3003
        %v3415 = vunpack.c.h.b16 %v3003
        %v3416 = vunpack.c.l.b16 %v3004
        %v3417 = vunpack.c.h.b16 %v3004
        %v3418 = vunpack.c.l.b16 %v3005
        %v3419 = vunpack.c.h.b16 %v3005
        %v3420 = vunpack.c.l.b16 %v3006
        %v3421 = vunpack.c.h.b16 %v3006
        %v3422 = vunpack.c.l.b16 %v3007
        %v3423 = vunpack.c.h.b16 %v3007
        %v3424 = vunpack.c.l.b16 %v3008
        %v3425 = vunpack.c.h.b16 %v3008
        %v3426 = vunpack.c.l.b16 %v3009
        %v3427 = vunpack.c.h.b16 %v3009
        %v3428 = vunpack.c.l.b16 %v3010
        %v3429 = vunpack.c.h.b16 %v3010
        %v3430 = vunpack.c.l.b16 %v3011
        %v3431 = vunpack.c.h.b16 %v3011
        %v3432 = vunpack.c.l.b16 %v3012
        %v3433 = vunpack.c.h.b16 %v3012
        %v3434 = vunpack.c.l.b16 %v3013
        %v3435 = vunpack.c.h.b16 %v3013
        %v3436 = vunpack.c.l.b16 %v3014
        %v3437 = vunpack.c.h.b16 %v3014
        %v3438 = vunpack.c.l.b16 %v3015
        %v3439 = vunpack.c.h.b16 %v3015
        %v3440 = vunpack.c.l.b16 %v3016
        %v3441 = vunpack.c.h.b16 %v3016
        %v3442 = vunpack.c.l.b16 %v3017
        %v3443 = vunpack.c.h.b16 %v3017
        %v3444 = vunpack.c.l.b16 %v3018
        %v3445 = vunpack.c.h.b16 %v3018
        %v3446 = vunpack.c.l.b16 %v3019
        %v3447 = vunpack.c.h.b16 %v3019
        %v3448 = vunpack.c.l.b16 %v3020
        %v3449 = vunpack.c.h.b16 %v3020
        %v3450 = vunpack.c.l.b16 %v3021
        %v3451 = vunpack.c.h.b16 %v3021
        %v3452 = vunpack.c.l.b16 %v3022
        %v3453 = vunpack.c.h.b16 %v3022
        %v3454 = vunpack.c.l.b16 %v3023
        %v3455 = vunpack.c.h.b16 %v3023
        %v3456 = vpack.c.b16 %v3174, %v3168
        %v3457 = vpack.c.b16 %v3175, %v3169
        %v3458 = vpack.c.b16 %v3176, %v3170
        %v3459 = vpack.c.b16 %v3177, %v3171
        %v3460 = vpack.c.b16 %v3178, %v3172
        %v3461 = vpack.c.b16 %v3179, %v3173
        %v3462 = vpack.c.b16 %v3186, %v3180
        %v3463 = vpack.c.b16 %v3187, %v3181
        %v3464 = vpack.c.b16 %v3188, %v3182
        %v3465 = vpack.c.b16 %v3189, %v3183
        %v3466 = vpack.c.b16 %v3190, %v3184
        %v3467 = vpack.c.b16 %v3191, %v3185
        %v3468 = vpack.c.b16 %v3198, %v3192
        %v3469 = vpack.c.b16 %v3199, %v3193
        %v3470 = vpack.c.b16 %v3200, %v3194
        %v3471 = vpack.c.b16 %v3201, %v3195
        %v3472 = vpack.c.b16 %v3202, %v3196
        %v3473 = vpack.c.b16 %v3203, %v3197
        %v3474 = vpack.c.b16 %v3210, %v3204
        %v3475 = vpack.c.b16 %v3211, %v3205
        %v3476 = vpack.c.b16 %v3212, %v3206
        %v3477 = vpack.c.b16 %v3213, %v3207
        %v3478 = vpack.c.b16 %v3214, %v3208
        %v3479 = vpack.c.b16 %v3215, %v3209
        %v3480 = vpack.c.b16 %v3222, %v3216
        %v3481 = vpack.c.b16 %v3223, %v3217
        %v3482 = vpack.c.b16 %v3224, %v3218
        %v3483 = vpack.c.b16 %v3225, %v3219
        %v3484 = vpack.c.b16 %v3226, %v3220
        %v3485 = vpack.c.b16 %v3227, %v3221
        %v3486 = vpack.c.b16 %v3234, %v3228
        %v3487 = vpack.c.b16 %v3235, %v3229
        %v3488 = vpack.c.b16 %v3236, %v3230
        %v3489 = vpack.c.b16 %v3237, %v3231
        %v3490 = vpack.c.b16 %v3238, %v3232
        %v3491 = vpack.c.b16 %v3239, %v3233
        %v3492 = vpack.c.b16 %v3246, %v3240
        %v3493 = vpack.c.b16 %v3247, %v3241
        %v3494 = vpack.c.b16 %v3248, %v3242
        %v3495 = vpack.c.b16 %v3249, %v3243
        %v3496 = vpack.c.b16 %v3250, %v3244
        %v3497 = vpack.c.b16 %v3251, %v3245
        %v3498 = vpack.c.b16 %v3258, %v3252
        %v3499 = vpack.c.b16 %v3259, %v3253
        %v3500 = vpack.c.b16 %v3260, %v3254
        %v3501 = vpack.c.b16 %v3261, %v3255
        %v3502 = vpack.c.b16 %v3262, %v3256
        %v3503 = vpack.c.b16 %v3263, %v3257
        %v3504 = vpack.c.b16 %v3270, %v3264
        %v3505 = vpack.c.b16 %v3271, %v3265
        %v3506 = vpack.c.b16 %v3272, %v3266
        %v3507 = vpack.c.b16 %v3273, %v3267
        %v3508 = vpack.c.b16 %v3274, %v3268
        %v3509 = vpack.c.b16 %v3275, %v3269
        %v3510 = vpack.c.b16 %v3282, %v3276
        %v3511 = vpack.c.b16 %v3283, %v3277
        %v3512 = vpack.c.b16 %v3284, %v3278
        %v3513 = vpack.c.b16 %v3285, %v3279
        %v3514 = vpack.c.b16 %v3286, %v3280
        %v3515 = vpack.c.b16 %v3287, %v3281
        %v3516 = vpack.c.b16 %v3294, %v3288
        %v3517 = vpack.c.b16 %v3295, %v3289
        %v3518 = vpack.c.b16 %v3296, %v3290
        %v3519 = vpack.c.b16 %v3297, %v3291
        %v3520 = vpack.c.b16 %v3298, %v3292
        %v3521 = vpack.c.b16 %v3299, %v3293
        %v3522 = vpack.c.b16 %v3306, %v3300
        %v3523 = vpack.c.b16 %v3307, %v3301
        %v3524 = vpack.c.b16 %v3308, %v3302
        %v3525 = vpack.c.b16 %v3309, %v3303
        %v3526 = vpack.c.b16 %v3310, %v3304
        %v3527 = vpack.c.b16 %v3311, %v3305
        %v3528 = vpack.c.b16 %v3318, %v3312
        %v3529 = vpack.c.b16 %v3319, %v3313
        %v3530 = vpack.c.b16 %v3320, %v3314
        %v3531 = vpack.c.b16 %v3321, %v3315
        %v3532 = vpack.c.b16 %v3322, %v3316
        %v3533 = vpack.c.b16 %v3323, %v3317
        %v3534 = vpack.c.b16 %v3330, %v3324
        %v3535 = vpack.c.b16 %v3331, %v3325
        %v3536 = vpack.c.b16 %v3332, %v3326
        %v3537 = vpack.c.b16 %v3333, %v3327
        %v3538 = vpack.c.b16 %v3334, %v3328
        %v3539 = vpack.c.b16 %v3335, %v3329
        %v3540 = vpack.c.b16 %v3342, %v3336
        %v3541 = vpack.c.b16 %v3343, %v3337
        %v3542 = vpack.c.b16 %v3344, %v3338
        %v3543 = vpack.c.b16 %v3345, %v3339
        %v3544 = vpack.c.b16 %v3346, %v3340
        %v3545 = vpack.c.b16 %v3347, %v3341
        %v3546 = vpack.c.b16 %v3354, %v3348
        %v3547 = vpack.c.b16 %v3355, %v3349
        %v3548 = vpack.c.b16 %v3356, %v3350
        %v3549 = vpack.c.b16 %v3357, %v3351
        %v3550 = vpack.c.b16 %v3358, %v3352
        %v3551 = vpack.c.b16 %v3359, %v3353
        %v3552 = vpack.c.b16 %v3366, %v3360
        %v3553 = vpack.c.b16 %v3367, %v3361
        %v3554 = vpack.c.b16 %v3368, %v3362
        %v3555 = vpack.c.b16 %v3369, %v3363
        %v3556 = vpack.c.b16 %v3370, %v3364
        %v3557 = vpack.c.b16 %v3371, %v3365
        %v3558 = vpack.c.b16 %v3378, %v3372
        %v3559 = vpack.c.b16 %v3379, %v3373
        %v3560 = vpack.c.b16 %v3380, %v3374
        %v3561 = vpack.c.b16 %v3381, %v3375
        %v3562 = vpack.c.b16 %v3382, %v3376
        %v3563 = vpack.c.b16 %v3383, %v3377
        %v3564 = vpack.c.b16 %v3390, %v3384
        %v3565 = vpack.c.b16 %v3391, %v3385
        %v3566 = vpack.c.b16 %v3392, %v3386
        %v3567 = vpack.c.b16 %v3393, %v3387
        %v3568 = vpack.c.b16 %v3394, %v3388
        %v3569 = vpack.c.b16 %v3395, %v3389
        %v3570 = vpack.c.b16 %v3402, %v3396
        %v3571 = vpack.c.b16 %v3403, %v3397
        %v3572 = vpack.c.b16 %v3404, %v3398
        %v3573 = vpack.c.b16 %v3405, %v3399
        %v3574 = vpack.c.b16 %v3406, %v3400
        %v3575 = vpack.c.b16 %v3407, %v3401
        %v3576 = vpack.c.b16 %v3414, %v3408
        %v3577 = vpack.c.b16 %v3415, %v3409
        %v3578 = vpack.c.b16 %v3416, %v3410
        %v3579 = vpack.c.b16 %v3417, %v3411
        %v3580 = vpack.c.b16 %v3418, %v3412
        %v3581 = vpack.c.b16 %v3419, %v3413
        %v3582 = vpack.c.b16 %v3426, %v3420
        %v3583 = vpack.c.b16 %v3427, %v3421
        %v3584 = vpack.c.b16 %v3428, %v3422
        %v3585 = vpack.c.b16 %v3429, %v3423
        %v3586 = vpack.c.b16 %v3430, %v3424
        %v3587 = vpack.c.b16 %v3431, %v3425
        %v3588 = vpack.c.b16 %v3438, %v3432
        %v3589 = vpack.c.b16 %v3439, %v3433
        %v3590 = vpack.c.b16 %v3440, %v3434
        %v3591 = vpack.c.b16 %v3441, %v3435
        %v3592 = vpack.c.b16 %v3442, %v3436
        %v3593 = vpack.c.b16 %v3443, %v3437
        %v3594 = vpack.c.b16 %v3450, %v3444
        %v3595 = vpack.c.b16 %v3451, %v3445
        %v3596 = vpack.c.b16 %v3452, %v3446
        %v3597 = vpack.c.b16 %v3453, %v3447
        %v3598 = vpack.c.b16 %v3454, %v3448
        %v3599 = vpack.c.b16 %v3455, %v3449
        %3744 = vmatprep.subr.bf16.mxu0 %v3499
        %3745 = vmatpush1.bf16.msra.mxu0 %v3498
        %3746 = vmatprep.subr.bf16.mxu0 %v3493
        %3747 = vmatpush1.bf16.msra.mxu0 %v3492
        %3748 = vmatprep.subr.bf16.mxu0 %v3487
        %3749 = vmatpush1.bf16.msra.mxu0 %v3486
        %3750 = vmatprep.subr.bf16.mxu0 %v3481
        %3751 = vmatpush1.bf16.msra.mxu0 %v3480
        %3752 = vmatprep.subr.bf16.mxu0 %v3475
        %3753 = vmatpush1.bf16.msra.mxu0 %v3474
        %3754 = vmatprep.subr.bf16.mxu0 %v3469
        %3755 = vmatpush1.bf16.msra.mxu0 %v3468
        %3756 = vmatprep.subr.bf16.mxu0 %v3463
        %3757 = vmatpush1.bf16.msra.mxu0 %v3462
        %3758 = vmatprep.subr.bf16.mxu0 %v3457
        %3759 = vmatpush1.bf16.msra.mxu0 %v3456
        %3760 = vmatprep.subr.bf16.mxu0 %v3547
        %3761 = vmatpush2.bf16.msra.mxu0 %v3546
        %3762 = vmatprep.subr.bf16.mxu0 %v3541
        %3763 = vmatpush2.bf16.msra.mxu0 %v3540
        %3764 = vmatprep.subr.bf16.mxu0 %v3535
        %3765 = vmatpush2.bf16.msra.mxu0 %v3534
        %3766 = vmatprep.subr.bf16.mxu0 %v3529
        %3767 = vmatpush2.bf16.msra.mxu0 %v3528
        %3768 = vmatprep.subr.bf16.mxu0 %v3523
        %3769 = vmatpush2.bf16.msra.mxu0 %v3522
        %3770 = vmatprep.subr.bf16.mxu0 %v3517
        %3771 = vmatpush2.bf16.msra.mxu0 %v3516
        %3772 = vmatprep.subr.bf16.mxu0 %v3511
        %3773 = vmatpush2.bf16.msra.mxu0 %v3510
        %3774 = vmatprep.subr.bf16.mxu0 %v3505
        %3775 = vmatpush2.bf16.msra.mxu0 %v3504
        %3776 = vmatprep.mubr.bf16.mxu0 %v2857
        %3777 = vmatmul.mubr.bf16.gmra.mxu0 %v2856
        %v3778 = vpop.f32.mrf.mxu0
        %v3779 = vadd.f32 0.0, %v3778
        %v3780 = vpop.f32.mrf.mxu0
        %v3781 = vadd.f32 0.0, %v3780
        %v3782 = vpop.f32.mrf.mxu0
        %v3783 = vadd.f32 0.0, %v3782
        %v3784 = vpop.f32.mrf.mxu0
        %v3785 = vadd.f32 0.0, %v3784
        %3786 = vmatprep.mubr.bf16.mxu0 %v2860
        %3787 = vmatmul.mubr.bf16.gmra.mxu0 %v2859
        %v3788 = vpop.f32.mrf.mxu0
        %v3789 = vadd.f32 0.0, %v3788
        %v3790 = vpop.f32.mrf.mxu0
        %v3791 = vadd.f32 0.0, %v3790
        %v3792 = vpop.f32.mrf.mxu0
        %v3793 = vadd.f32 0.0, %v3792
        %v3794 = vpop.f32.mrf.mxu0
        %v3795 = vadd.f32 0.0, %v3794
        %3796 = vmatprep.mubr.bf16.mxu0 %v2863
        %3797 = vmatmul.mubr.bf16.gmra.mxu0 %v2862
        %v3798 = vpop.f32.mrf.mxu0
        %v3799 = vadd.f32 0.0, %v3798
        %v3800 = vpop.f32.mrf.mxu0
        %v3801 = vadd.f32 0.0, %v3800
        %v3802 = vpop.f32.mrf.mxu0
        %v3803 = vadd.f32 0.0, %v3802
        %v3804 = vpop.f32.mrf.mxu0
        %v3805 = vadd.f32 0.0, %v3804
        %3806 = vmatprep.mubr.bf16.mxu0 %v2866
        %3807 = vmatmul.mubr.bf16.gmra.mxu0 %v2865
        %v3808 = vpop.f32.mrf.mxu0
        %v3809 = vadd.f32 0.0, %v3808
        %v3810 = vpop.f32.mrf.mxu0
        %v3811 = vadd.f32 0.0, %v3810
        %v3812 = vpop.f32.mrf.mxu0
        %v3813 = vadd.f32 0.0, %v3812
        %v3814 = vpop.f32.mrf.mxu0
        %v3815 = vadd.f32 0.0, %v3814
        %3816 = vmatprep.mubr.bf16.mxu0 %v2869
        %3817 = vmatmul.mubr.bf16.gmra.mxu0 %v2868
        %v3818 = vpop.f32.mrf.mxu0
        %v3819 = vadd.f32 0.0, %v3818
        %v3820 = vpop.f32.mrf.mxu0
        %v3821 = vadd.f32 0.0, %v3820
        %v3822 = vpop.f32.mrf.mxu0
        %v3823 = vadd.f32 0.0, %v3822
        %v3824 = vpop.f32.mrf.mxu0
        %v3825 = vadd.f32 0.0, %v3824
        %3826 = vmatprep.mubr.bf16.mxu0 %v2872
        %3827 = vmatmul.mubr.bf16.gmra.mxu0 %v2871
        %v3828 = vpop.f32.mrf.mxu0
        %v3829 = vadd.f32 0.0, %v3828
        %v3830 = vpop.f32.mrf.mxu0
        %v3831 = vadd.f32 0.0, %v3830
        %v3832 = vpop.f32.mrf.mxu0
        %v3833 = vadd.f32 0.0, %v3832
        %v3834 = vpop.f32.mrf.mxu0
        %v3835 = vadd.f32 0.0, %v3834
        %3836 = vmatprep.mubr.bf16.mxu0 %v2875
        %3837 = vmatmul.mubr.bf16.gmra.mxu0 %v2874
        %v3838 = vpop.f32.mrf.mxu0
        %v3839 = vadd.f32 0.0, %v3838
        %v3840 = vpop.f32.mrf.mxu0
        %v3841 = vadd.f32 0.0, %v3840
        %v3842 = vpop.f32.mrf.mxu0
        %v3843 = vadd.f32 0.0, %v3842
        %v3844 = vpop.f32.mrf.mxu0
        %v3845 = vadd.f32 0.0, %v3844
        %3846 = vmatprep.mubr.bf16.mxu0 %v2878
        %3847 = vmatmul.mubr.bf16.gmra.mxu0 %v2877
        %v3848 = vpop.f32.mrf.mxu0
        %v3849 = vadd.f32 0.0, %v3848
        %v3850 = vpop.f32.mrf.mxu0
        %v3851 = vadd.f32 0.0, %v3850
        %v3852 = vpop.f32.mrf.mxu0
        %v3853 = vadd.f32 0.0, %v3852
        %v3854 = vpop.f32.mrf.mxu0
        %v3855 = vadd.f32 0.0, %v3854
        %3856 = vdwg.mxu0
        %3857 = vmatprep.subr.bf16.mxu0 %v3595
        %3858 = vmatpush1.bf16.msra.mxu0 %v3594
        %3859 = vmatprep.subr.bf16.mxu0 %v3589
        %3860 = vmatpush1.bf16.msra.mxu0 %v3588
        %3861 = vmatprep.subr.bf16.mxu0 %v3583
        %3862 = vmatpush1.bf16.msra.mxu0 %v3582
        %3863 = vmatprep.subr.bf16.mxu0 %v3577
        %3864 = vmatpush1.bf16.msra.mxu0 %v3576
        %3865 = vmatprep.subr.bf16.mxu0 %v3571
        %3866 = vmatpush1.bf16.msra.mxu0 %v3570
        %3867 = vmatprep.subr.bf16.mxu0 %v3565
        %3868 = vmatpush1.bf16.msra.mxu0 %v3564
        %3869 = vmatprep.subr.bf16.mxu0 %v3559
        %3870 = vmatpush1.bf16.msra.mxu0 %v3558
        %3871 = vmatprep.subr.bf16.mxu0 %v3553
        %3872 = vmatpush1.bf16.msra.mxu0 %v3552
        %3873 = vmatprep.subr.bf16.mxu0 0
        %3874 = vmatpush2.bf16.msra.mxu0 0
        %3875 = vmatprep.subr.bf16.mxu0 0
        %3876 = vmatpush2.bf16.msra.mxu0 0
        %3877 = vmatprep.subr.bf16.mxu0 0
        %3878 = vmatpush2.bf16.msra.mxu0 0
        %3879 = vmatprep.subr.bf16.mxu0 0
        %3880 = vmatpush2.bf16.msra.mxu0 0
        %3881 = vmatprep.subr.bf16.mxu0 0
        %3882 = vmatpush2.bf16.msra.mxu0 0
        %3883 = vmatprep.subr.bf16.mxu0 0
        %3884 = vmatpush2.bf16.msra.mxu0 0
        %3885 = vmatprep.subr.bf16.mxu0 0
        %3886 = vmatpush2.bf16.msra.mxu0 0
        %3887 = vmatprep.subr.bf16.mxu0 0
        %3888 = vmatpush2.bf16.msra.mxu0 0
        %3889 = vmatprep.mubr.bf16.mxu0 0
        %3890 = vmatmul.mubr.bf16.gmra.mxu0 %v2858
        %v3891 = vpop.f32.mrf.mxu0
        %v3892 = vadd.f32 %v3779, %v3891
        %v3893 = vpop.f32.mrf.mxu0
        %v3894 = vadd.f32 %v3781, %v3893
        %v3895 = vpop.f32.mrf.mxu0
        %v3896 = vadd.f32 %v3783, %v3895
        %v3897 = vpop.f32.mrf.mxu0
        %v3898 = vadd.f32 %v3785, %v3897
        %3899 = vmatprep.mubr.bf16.mxu0 0
        %3900 = vmatmul.mubr.bf16.gmra.mxu0 %v2861
        %v3901 = vpop.f32.mrf.mxu0
        %v3902 = vadd.f32 %v3789, %v3901
        %v3903 = vpop.f32.mrf.mxu0
        %v3904 = vadd.f32 %v3791, %v3903
        %v3905 = vpop.f32.mrf.mxu0
        %v3906 = vadd.f32 %v3793, %v3905
        %v3907 = vpop.f32.mrf.mxu0
        %v3908 = vadd.f32 %v3795, %v3907
        %3909 = vmatprep.mubr.bf16.mxu0 0
        %3910 = vmatmul.mubr.bf16.gmra.mxu0 %v2864
        %v3911 = vpop.f32.mrf.mxu0
        %v3912 = vadd.f32 %v3799, %v3911
        %v3913 = vpop.f32.mrf.mxu0
        %v3914 = vadd.f32 %v3801, %v3913
        %v3915 = vpop.f32.mrf.mxu0
        %v3916 = vadd.f32 %v3803, %v3915
        %v3917 = vpop.f32.mrf.mxu0
        %v3918 = vadd.f32 %v3805, %v3917
        %3919 = vmatprep.mubr.bf16.mxu0 0
        %3920 = vmatmul.mubr.bf16.gmra.mxu0 %v2867
        %v3921 = vpop.f32.mrf.mxu0
        %v3922 = vadd.f32 %v3809, %v3921
        %v3923 = vpop.f32.mrf.mxu0
        %v3924 = vadd.f32 %v3811, %v3923
        %v3925 = vpop.f32.mrf.mxu0
        %v3926 = vadd.f32 %v3813, %v3925
        %v3927 = vpop.f32.mrf.mxu0
        %v3928 = vadd.f32 %v3815, %v3927
        %3929 = vmatprep.mubr.bf16.mxu0 0
        %3930 = vmatmul.mubr.bf16.gmra.mxu0 %v2870
        %v3931 = vpop.f32.mrf.mxu0
        %v3932 = vadd.f32 %v3819, %v3931
        %v3933 = vpop.f32.mrf.mxu0
        %v3934 = vadd.f32 %v3821, %v3933
        %v3935 = vpop.f32.mrf.mxu0
        %v3936 = vadd.f32 %v3823, %v3935
        %v3937 = vpop.f32.mrf.mxu0
        %v3938 = vadd.f32 %v3825, %v3937
        %3939 = vmatprep.mubr.bf16.mxu0 0
        %3940 = vmatmul.mubr.bf16.gmra.mxu0 %v2873
        %v3941 = vpop.f32.mrf.mxu0
        %v3942 = vadd.f32 %v3829, %v3941
        %v3943 = vpop.f32.mrf.mxu0
        %v3944 = vadd.f32 %v3831, %v3943
        %v3945 = vpop.f32.mrf.mxu0
        %v3946 = vadd.f32 %v3833, %v3945
        %v3947 = vpop.f32.mrf.mxu0
        %v3948 = vadd.f32 %v3835, %v3947
        %3949 = vmatprep.mubr.bf16.mxu0 0
        %3950 = vmatmul.mubr.bf16.gmra.mxu0 %v2876
        %v3951 = vpop.f32.mrf.mxu0
        %v3952 = vadd.f32 %v3839, %v3951
        %v3953 = vpop.f32.mrf.mxu0
        %v3954 = vadd.f32 %v3841, %v3953
        %v3955 = vpop.f32.mrf.mxu0
        %v3956 = vadd.f32 %v3843, %v3955
        %v3957 = vpop.f32.mrf.mxu0
        %v3958 = vadd.f32 %v3845, %v3957
        %3959 = vmatprep.mubr.bf16.mxu0 0
        %3960 = vmatmul.mubr.bf16.gmra.mxu0 %v2879
        %v3961 = vpop.f32.mrf.mxu0
        %v3962 = vadd.f32 %v3849, %v3961
        %v3963 = vpop.f32.mrf.mxu0
        %v3964 = vadd.f32 %v3851, %v3963
        %v3965 = vpop.f32.mrf.mxu0
        %v3966 = vadd.f32 %v3853, %v3965
        %v3967 = vpop.f32.mrf.mxu0
        %v3968 = vadd.f32 %v3855, %v3967
        %3969 = vdwg.mxu0
        %3970 = vmatprep.subr.bf16.mxu0 %v3501
        %3971 = vmatpush1.bf16.msra.mxu0 %v3500
        %3972 = vmatprep.subr.bf16.mxu0 %v3495
        %3973 = vmatpush1.bf16.msra.mxu0 %v3494
        %3974 = vmatprep.subr.bf16.mxu0 %v3489
        %3975 = vmatpush1.bf16.msra.mxu0 %v3488
        %3976 = vmatprep.subr.bf16.mxu0 %v3483
        %3977 = vmatpush1.bf16.msra.mxu0 %v3482
        %3978 = vmatprep.subr.bf16.mxu0 %v3477
        %3979 = vmatpush1.bf16.msra.mxu0 %v3476
        %3980 = vmatprep.subr.bf16.mxu0 %v3471
        %3981 = vmatpush1.bf16.msra.mxu0 %v3470
        %3982 = vmatprep.subr.bf16.mxu0 %v3465
        %3983 = vmatpush1.bf16.msra.mxu0 %v3464
        %3984 = vmatprep.subr.bf16.mxu0 %v3459
        %3985 = vmatpush1.bf16.msra.mxu0 %v3458
        %3986 = vmatprep.subr.bf16.mxu0 %v3549
        %3987 = vmatpush2.bf16.msra.mxu0 %v3548
        %3988 = vmatprep.subr.bf16.mxu0 %v3543
        %3989 = vmatpush2.bf16.msra.mxu0 %v3542
        %3990 = vmatprep.subr.bf16.mxu0 %v3537
        %3991 = vmatpush2.bf16.msra.mxu0 %v3536
        %3992 = vmatprep.subr.bf16.mxu0 %v3531
        %3993 = vmatpush2.bf16.msra.mxu0 %v3530
        %3994 = vmatprep.subr.bf16.mxu0 %v3525
        %3995 = vmatpush2.bf16.msra.mxu0 %v3524
        %3996 = vmatprep.subr.bf16.mxu0 %v3519
        %3997 = vmatpush2.bf16.msra.mxu0 %v3518
        %3998 = vmatprep.subr.bf16.mxu0 %v3513
        %3999 = vmatpush2.bf16.msra.mxu0 %v3512
        %4000 = vmatprep.subr.bf16.mxu0 %v3507
        %4001 = vmatpush2.bf16.msra.mxu0 %v3506
        %4002 = vmatprep.mubr.bf16.mxu0 %v2857
        %4003 = vmatmul.mubr.bf16.gmra.mxu0 %v2856
        %v4004 = vpop.f32.mrf.mxu0
        %v4005 = vadd.f32 0.0, %v4004
        %v4006 = vpop.f32.mrf.mxu0
        %v4007 = vadd.f32 0.0, %v4006
        %v4008 = vpop.f32.mrf.mxu0
        %v4009 = vadd.f32 0.0, %v4008
        %v4010 = vpop.f32.mrf.mxu0
        %v4011 = vadd.f32 0.0, %v4010
        %4012 = vmatprep.mubr.bf16.mxu0 %v2860
        %4013 = vmatmul.mubr.bf16.gmra.mxu0 %v2859
        %v4014 = vpop.f32.mrf.mxu0
        %v4015 = vadd.f32 0.0, %v4014
        %v4016 = vpop.f32.mrf.mxu0
        %v4017 = vadd.f32 0.0, %v4016
        %v4018 = vpop.f32.mrf.mxu0
        %v4019 = vadd.f32 0.0, %v4018
        %v4020 = vpop.f32.mrf.mxu0
        %v4021 = vadd.f32 0.0, %v4020
        %4022 = vmatprep.mubr.bf16.mxu0 %v2863
        %4023 = vmatmul.mubr.bf16.gmra.mxu0 %v2862
        %v4024 = vpop.f32.mrf.mxu0
        %v4025 = vadd.f32 0.0, %v4024
        %v4026 = vpop.f32.mrf.mxu0
        %v4027 = vadd.f32 0.0, %v4026
        %v4028 = vpop.f32.mrf.mxu0
        %v4029 = vadd.f32 0.0, %v4028
        %v4030 = vpop.f32.mrf.mxu0
        %v4031 = vadd.f32 0.0, %v4030
        %4032 = vmatprep.mubr.bf16.mxu0 %v2866
        %4033 = vmatmul.mubr.bf16.gmra.mxu0 %v2865
        %v4034 = vpop.f32.mrf.mxu0
        %v4035 = vadd.f32 0.0, %v4034
        %v4036 = vpop.f32.mrf.mxu0
        %v4037 = vadd.f32 0.0, %v4036
        %v4038 = vpop.f32.mrf.mxu0
        %v4039 = vadd.f32 0.0, %v4038
        %v4040 = vpop.f32.mrf.mxu0
        %v4041 = vadd.f32 0.0, %v4040
        %4042 = vmatprep.mubr.bf16.mxu0 %v2869
        %4043 = vmatmul.mubr.bf16.gmra.mxu0 %v2868
        %v4044 = vpop.f32.mrf.mxu0
        %v4045 = vadd.f32 0.0, %v4044
        %v4046 = vpop.f32.mrf.mxu0
        %v4047 = vadd.f32 0.0, %v4046
        %v4048 = vpop.f32.mrf.mxu0
        %v4049 = vadd.f32 0.0, %v4048
        %v4050 = vpop.f32.mrf.mxu0
        %v4051 = vadd.f32 0.0, %v4050
        %4052 = vmatprep.mubr.bf16.mxu0 %v2872
        %4053 = vmatmul.mubr.bf16.gmra.mxu0 %v2871
        %v4054 = vpop.f32.mrf.mxu0
        %v4055 = vadd.f32 0.0, %v4054
        %v4056 = vpop.f32.mrf.mxu0
        %v4057 = vadd.f32 0.0, %v4056
        %v4058 = vpop.f32.mrf.mxu0
        %v4059 = vadd.f32 0.0, %v4058
        %v4060 = vpop.f32.mrf.mxu0
        %v4061 = vadd.f32 0.0, %v4060
        %4062 = vmatprep.mubr.bf16.mxu0 %v2875
        %4063 = vmatmul.mubr.bf16.gmra.mxu0 %v2874
        %v4064 = vpop.f32.mrf.mxu0
        %v4065 = vadd.f32 0.0, %v4064
        %v4066 = vpop.f32.mrf.mxu0
        %v4067 = vadd.f32 0.0, %v4066
        %v4068 = vpop.f32.mrf.mxu0
        %v4069 = vadd.f32 0.0, %v4068
        %v4070 = vpop.f32.mrf.mxu0
        %v4071 = vadd.f32 0.0, %v4070
        %4072 = vmatprep.mubr.bf16.mxu0 %v2878
        %4073 = vmatmul.mubr.bf16.gmra.mxu0 %v2877
        %v4074 = vpop.f32.mrf.mxu0
        %v4075 = vadd.f32 0.0, %v4074
        %v4076 = vpop.f32.mrf.mxu0
        %v4077 = vadd.f32 0.0, %v4076
        %v4078 = vpop.f32.mrf.mxu0
        %v4079 = vadd.f32 0.0, %v4078
        %v4080 = vpop.f32.mrf.mxu0
        %v4081 = vadd.f32 0.0, %v4080
        %4082 = vdwg.mxu0
        %4083 = vmatprep.subr.bf16.mxu0 %v3597
        %4084 = vmatpush1.bf16.msra.mxu0 %v3596
        %4085 = vmatprep.subr.bf16.mxu0 %v3591
        %4086 = vmatpush1.bf16.msra.mxu0 %v3590
        %4087 = vmatprep.subr.bf16.mxu0 %v3585
        %4088 = vmatpush1.bf16.msra.mxu0 %v3584
        %4089 = vmatprep.subr.bf16.mxu0 %v3579
        %4090 = vmatpush1.bf16.msra.mxu0 %v3578
        %4091 = vmatprep.subr.bf16.mxu0 %v3573
        %4092 = vmatpush1.bf16.msra.mxu0 %v3572
        %4093 = vmatprep.subr.bf16.mxu0 %v3567
        %4094 = vmatpush1.bf16.msra.mxu0 %v3566
        %4095 = vmatprep.subr.bf16.mxu0 %v3561
        %4096 = vmatpush1.bf16.msra.mxu0 %v3560
        %4097 = vmatprep.subr.bf16.mxu0 %v3555
        %4098 = vmatpush1.bf16.msra.mxu0 %v3554
        %4099 = vmatprep.subr.bf16.mxu0 0
        %4100 = vmatpush2.bf16.msra.mxu0 0
        %4101 = vmatprep.subr.bf16.mxu0 0
        %4102 = vmatpush2.bf16.msra.mxu0 0
        %4103 = vmatprep.subr.bf16.mxu0 0
        %4104 = vmatpush2.bf16.msra.mxu0 0
        %4105 = vmatprep.subr.bf16.mxu0 0
        %4106 = vmatpush2.bf16.msra.mxu0 0
        %4107 = vmatprep.subr.bf16.mxu0 0
        %4108 = vmatpush2.bf16.msra.mxu0 0
        %4109 = vmatprep.subr.bf16.mxu0 0
        %4110 = vmatpush2.bf16.msra.mxu0 0
        %4111 = vmatprep.subr.bf16.mxu0 0
        %4112 = vmatpush2.bf16.msra.mxu0 0
        %4113 = vmatprep.subr.bf16.mxu0 0
        %4114 = vmatpush2.bf16.msra.mxu0 0
        %4115 = vmatprep.mubr.bf16.mxu0 0
        %4116 = vmatmul.mubr.bf16.gmra.mxu0 %v2858
        %v4117 = vpop.f32.mrf.mxu0
        %v4118 = vadd.f32 %v4005, %v4117
        %v4119 = vpop.f32.mrf.mxu0
        %v4120 = vadd.f32 %v4007, %v4119
        %v4121 = vpop.f32.mrf.mxu0
        %v4122 = vadd.f32 %v4009, %v4121
        %v4123 = vpop.f32.mrf.mxu0
        %v4124 = vadd.f32 %v4011, %v4123
        %4125 = vmatprep.mubr.bf16.mxu0 0
        %4126 = vmatmul.mubr.bf16.gmra.mxu0 %v2861
        %v4127 = vpop.f32.mrf.mxu0
        %v4128 = vadd.f32 %v4015, %v4127
        %v4129 = vpop.f32.mrf.mxu0
        %v4130 = vadd.f32 %v4017, %v4129
        %v4131 = vpop.f32.mrf.mxu0
        %v4132 = vadd.f32 %v4019, %v4131
        %v4133 = vpop.f32.mrf.mxu0
        %v4134 = vadd.f32 %v4021, %v4133
        %4135 = vmatprep.mubr.bf16.mxu0 0
        %4136 = vmatmul.mubr.bf16.gmra.mxu0 %v2864
        %v4137 = vpop.f32.mrf.mxu0
        %v4138 = vadd.f32 %v4025, %v4137
        %v4139 = vpop.f32.mrf.mxu0
        %v4140 = vadd.f32 %v4027, %v4139
        %v4141 = vpop.f32.mrf.mxu0
        %v4142 = vadd.f32 %v4029, %v4141
        %v4143 = vpop.f32.mrf.mxu0
        %v4144 = vadd.f32 %v4031, %v4143
        %4145 = vmatprep.mubr.bf16.mxu0 0
        %4146 = vmatmul.mubr.bf16.gmra.mxu0 %v2867
        %v4147 = vpop.f32.mrf.mxu0
        %v4148 = vadd.f32 %v4035, %v4147
        %v4149 = vpop.f32.mrf.mxu0
        %v4150 = vadd.f32 %v4037, %v4149
        %v4151 = vpop.f32.mrf.mxu0
        %v4152 = vadd.f32 %v4039, %v4151
        %v4153 = vpop.f32.mrf.mxu0
        %v4154 = vadd.f32 %v4041, %v4153
        %4155 = vmatprep.mubr.bf16.mxu0 0
        %4156 = vmatmul.mubr.bf16.gmra.mxu0 %v2870
        %v4157 = vpop.f32.mrf.mxu0
        %v4158 = vadd.f32 %v4045, %v4157
        %v4159 = vpop.f32.mrf.mxu0
        %v4160 = vadd.f32 %v4047, %v4159
        %v4161 = vpop.f32.mrf.mxu0
        %v4162 = vadd.f32 %v4049, %v4161
        %v4163 = vpop.f32.mrf.mxu0
        %v4164 = vadd.f32 %v4051, %v4163
        %4165 = vmatprep.mubr.bf16.mxu0 0
        %4166 = vmatmul.mubr.bf16.gmra.mxu0 %v2873
        %v4167 = vpop.f32.mrf.mxu0
        %v4168 = vadd.f32 %v4055, %v4167
        %v4169 = vpop.f32.mrf.mxu0
        %v4170 = vadd.f32 %v4057, %v4169
        %v4171 = vpop.f32.mrf.mxu0
        %v4172 = vadd.f32 %v4059, %v4171
        %v4173 = vpop.f32.mrf.mxu0
        %v4174 = vadd.f32 %v4061, %v4173
        %4175 = vmatprep.mubr.bf16.mxu0 0
        %4176 = vmatmul.mubr.bf16.gmra.mxu0 %v2876
        %v4177 = vpop.f32.mrf.mxu0
        %v4178 = vadd.f32 %v4065, %v4177
        %v4179 = vpop.f32.mrf.mxu0
        %v4180 = vadd.f32 %v4067, %v4179
        %v4181 = vpop.f32.mrf.mxu0
        %v4182 = vadd.f32 %v4069, %v4181
        %v4183 = vpop.f32.mrf.mxu0
        %v4184 = vadd.f32 %v4071, %v4183
        %4185 = vmatprep.mubr.bf16.mxu0 0
        %4186 = vmatmul.mubr.bf16.gmra.mxu0 %v2879
        %v4187 = vpop.f32.mrf.mxu0
        %v4188 = vadd.f32 %v4075, %v4187
        %v4189 = vpop.f32.mrf.mxu0
        %v4190 = vadd.f32 %v4077, %v4189
        %v4191 = vpop.f32.mrf.mxu0
        %v4192 = vadd.f32 %v4079, %v4191
        %v4193 = vpop.f32.mrf.mxu0
        %v4194 = vadd.f32 %v4081, %v4193
        %4195 = vdwg.mxu0
        %4196 = vmatprep.subr.bf16.mxu0 %v3503
        %4197 = vmatpush1.bf16.msra.mxu0 %v3502
        %4198 = vmatprep.subr.bf16.mxu0 %v3497
        %4199 = vmatpush1.bf16.msra.mxu0 %v3496
        %4200 = vmatprep.subr.bf16.mxu0 %v3491
        %4201 = vmatpush1.bf16.msra.mxu0 %v3490
        %4202 = vmatprep.subr.bf16.mxu0 %v3485
        %4203 = vmatpush1.bf16.msra.mxu0 %v3484
        %4204 = vmatprep.subr.bf16.mxu0 %v3479
        %4205 = vmatpush1.bf16.msra.mxu0 %v3478
        %4206 = vmatprep.subr.bf16.mxu0 %v3473
        %4207 = vmatpush1.bf16.msra.mxu0 %v3472
        %4208 = vmatprep.subr.bf16.mxu0 %v3467
        %4209 = vmatpush1.bf16.msra.mxu0 %v3466
        %4210 = vmatprep.subr.bf16.mxu0 %v3461
        %4211 = vmatpush1.bf16.msra.mxu0 %v3460
        %4212 = vmatprep.subr.bf16.mxu0 %v3551
        %4213 = vmatpush2.bf16.msra.mxu0 %v3550
        %4214 = vmatprep.subr.bf16.mxu0 %v3545
        %4215 = vmatpush2.bf16.msra.mxu0 %v3544
        %4216 = vmatprep.subr.bf16.mxu0 %v3539
        %4217 = vmatpush2.bf16.msra.mxu0 %v3538
        %4218 = vmatprep.subr.bf16.mxu0 %v3533
        %4219 = vmatpush2.bf16.msra.mxu0 %v3532
        %4220 = vmatprep.subr.bf16.mxu0 %v3527
        %4221 = vmatpush2.bf16.msra.mxu0 %v3526
        %4222 = vmatprep.subr.bf16.mxu0 %v3521
        %4223 = vmatpush2.bf16.msra.mxu0 %v3520
        %4224 = vmatprep.subr.bf16.mxu0 %v3515
        %4225 = vmatpush2.bf16.msra.mxu0 %v3514
        %4226 = vmatprep.subr.bf16.mxu0 %v3509
        %4227 = vmatpush2.bf16.msra.mxu0 %v3508
        %4228 = vmatprep.mubr.bf16.mxu0 %v2857
        %4229 = vmatmul.mubr.bf16.gmra.mxu0 %v2856
        %v4230 = vpop.f32.mrf.mxu0
        %v4231 = vadd.f32 0.0, %v4230
        %v4232 = vpop.f32.mrf.mxu0
        %v4233 = vadd.f32 0.0, %v4232
        %v4234 = vpop.f32.mrf.mxu0
        %v4235 = vadd.f32 0.0, %v4234
        %v4236 = vpop.f32.mrf.mxu0
        %v4237 = vadd.f32 0.0, %v4236
        %4238 = vmatprep.mubr.bf16.mxu0 %v2860
        %4239 = vmatmul.mubr.bf16.gmra.mxu0 %v2859
        %v4240 = vpop.f32.mrf.mxu0
        %v4241 = vadd.f32 0.0, %v4240
        %v4242 = vpop.f32.mrf.mxu0
        %v4243 = vadd.f32 0.0, %v4242
        %v4244 = vpop.f32.mrf.mxu0
        %v4245 = vadd.f32 0.0, %v4244
        %v4246 = vpop.f32.mrf.mxu0
        %v4247 = vadd.f32 0.0, %v4246
        %4248 = vmatprep.mubr.bf16.mxu0 %v2863
        %4249 = vmatmul.mubr.bf16.gmra.mxu0 %v2862
        %v4250 = vpop.f32.mrf.mxu0
        %v4251 = vadd.f32 0.0, %v4250
        %v4252 = vpop.f32.mrf.mxu0
        %v4253 = vadd.f32 0.0, %v4252
        %v4254 = vpop.f32.mrf.mxu0
        %v4255 = vadd.f32 0.0, %v4254
        %v4256 = vpop.f32.mrf.mxu0
        %v4257 = vadd.f32 0.0, %v4256
        %4258 = vmatprep.mubr.bf16.mxu0 %v2866
        %4259 = vmatmul.mubr.bf16.gmra.mxu0 %v2865
        %v4260 = vpop.f32.mrf.mxu0
        %v4261 = vadd.f32 0.0, %v4260
        %v4262 = vpop.f32.mrf.mxu0
        %v4263 = vadd.f32 0.0, %v4262
        %v4264 = vpop.f32.mrf.mxu0
        %v4265 = vadd.f32 0.0, %v4264
        %v4266 = vpop.f32.mrf.mxu0
        %v4267 = vadd.f32 0.0, %v4266
        %4268 = vmatprep.mubr.bf16.mxu0 %v2869
        %4269 = vmatmul.mubr.bf16.gmra.mxu0 %v2868
        %v4270 = vpop.f32.mrf.mxu0
        %v4271 = vadd.f32 0.0, %v4270
        %v4272 = vpop.f32.mrf.mxu0
        %v4273 = vadd.f32 0.0, %v4272
        %v4274 = vpop.f32.mrf.mxu0
        %v4275 = vadd.f32 0.0, %v4274
        %v4276 = vpop.f32.mrf.mxu0
        %v4277 = vadd.f32 0.0, %v4276
        %4278 = vmatprep.mubr.bf16.mxu0 %v2872
        %4279 = vmatmul.mubr.bf16.gmra.mxu0 %v2871
        %v4280 = vpop.f32.mrf.mxu0
        %v4281 = vadd.f32 0.0, %v4280
        %v4282 = vpop.f32.mrf.mxu0
        %v4283 = vadd.f32 0.0, %v4282
        %v4284 = vpop.f32.mrf.mxu0
        %v4285 = vadd.f32 0.0, %v4284
        %v4286 = vpop.f32.mrf.mxu0
        %v4287 = vadd.f32 0.0, %v4286
        %4288 = vmatprep.mubr.bf16.mxu0 %v2875
        %4289 = vmatmul.mubr.bf16.gmra.mxu0 %v2874
        %v4290 = vpop.f32.mrf.mxu0
        %v4291 = vadd.f32 0.0, %v4290
        %v4292 = vpop.f32.mrf.mxu0
        %v4293 = vadd.f32 0.0, %v4292
        %v4294 = vpop.f32.mrf.mxu0
        %v4295 = vadd.f32 0.0, %v4294
        %v4296 = vpop.f32.mrf.mxu0
        %v4297 = vadd.f32 0.0, %v4296
        %4298 = vmatprep.mubr.bf16.mxu0 %v2878
        %4299 = vmatmul.mubr.bf16.gmra.mxu0 %v2877
        %v4300 = vpop.f32.mrf.mxu0
        %v4301 = vadd.f32 0.0, %v4300
        %v4302 = vpop.f32.mrf.mxu0
        %v4303 = vadd.f32 0.0, %v4302
        %v4304 = vpop.f32.mrf.mxu0
        %v4305 = vadd.f32 0.0, %v4304
        %v4306 = vpop.f32.mrf.mxu0
        %v4307 = vadd.f32 0.0, %v4306
        %4308 = vdwg.mxu0
        %4309 = vmatprep.subr.bf16.mxu0 %v3599
        %4310 = vmatpush1.bf16.msra.mxu0 %v3598
        %4311 = vmatprep.subr.bf16.mxu0 %v3593
        %4312 = vmatpush1.bf16.msra.mxu0 %v3592
        %4313 = vmatprep.subr.bf16.mxu0 %v3587
        %4314 = vmatpush1.bf16.msra.mxu0 %v3586
        %4315 = vmatprep.subr.bf16.mxu0 %v3581
        %4316 = vmatpush1.bf16.msra.mxu0 %v3580
        %4317 = vmatprep.subr.bf16.mxu0 %v3575
        %4318 = vmatpush1.bf16.msra.mxu0 %v3574
        %4319 = vmatprep.subr.bf16.mxu0 %v3569
        %4320 = vmatpush1.bf16.msra.mxu0 %v3568
        %4321 = vmatprep.subr.bf16.mxu0 %v3563
        %4322 = vmatpush1.bf16.msra.mxu0 %v3562
        %4323 = vmatprep.subr.bf16.mxu0 %v3557
        %4324 = vmatpush1.bf16.msra.mxu0 %v3556
        %4325 = vmatprep.subr.bf16.mxu0 0
        %4326 = vmatpush2.bf16.msra.mxu0 0
        %4327 = vmatprep.subr.bf16.mxu0 0
        %4328 = vmatpush2.bf16.msra.mxu0 0
        %4329 = vmatprep.subr.bf16.mxu0 0
        %4330 = vmatpush2.bf16.msra.mxu0 0
        %4331 = vmatprep.subr.bf16.mxu0 0
        %4332 = vmatpush2.bf16.msra.mxu0 0
        %4333 = vmatprep.subr.bf16.mxu0 0
        %4334 = vmatpush2.bf16.msra.mxu0 0
        %4335 = vmatprep.subr.bf16.mxu0 0
        %4336 = vmatpush2.bf16.msra.mxu0 0
        %4337 = vmatprep.subr.bf16.mxu0 0
        %4338 = vmatpush2.bf16.msra.mxu0 0
        %4339 = vmatprep.subr.bf16.mxu0 0
        %4340 = vmatpush2.bf16.msra.mxu0 0
        %4341 = vmatprep.mubr.bf16.mxu0 0
        %4342 = vmatmul.mubr.bf16.gmra.mxu0 %v2858
        %v4343 = vpop.f32.mrf.mxu0
        %v4344 = vadd.f32 %v4231, %v4343
        %v4345 = vpop.f32.mrf.mxu0
        %v4346 = vadd.f32 %v4233, %v4345
        %v4347 = vpop.f32.mrf.mxu0
        %v4348 = vadd.f32 %v4235, %v4347
        %v4349 = vpop.f32.mrf.mxu0
        %v4350 = vadd.f32 %v4237, %v4349
        %4351 = vmatprep.mubr.bf16.mxu0 0
        %4352 = vmatmul.mubr.bf16.gmra.mxu0 %v2861
        %v4353 = vpop.f32.mrf.mxu0
        %v4354 = vadd.f32 %v4241, %v4353
        %v4355 = vpop.f32.mrf.mxu0
        %v4356 = vadd.f32 %v4243, %v4355
        %v4357 = vpop.f32.mrf.mxu0
        %v4358 = vadd.f32 %v4245, %v4357
        %v4359 = vpop.f32.mrf.mxu0
        %v4360 = vadd.f32 %v4247, %v4359
        %4361 = vmatprep.mubr.bf16.mxu0 0
        %4362 = vmatmul.mubr.bf16.gmra.mxu0 %v2864
        %v4363 = vpop.f32.mrf.mxu0
        %v4364 = vadd.f32 %v4251, %v4363
        %v4365 = vpop.f32.mrf.mxu0
        %v4366 = vadd.f32 %v4253, %v4365
        %v4367 = vpop.f32.mrf.mxu0
        %v4368 = vadd.f32 %v4255, %v4367
        %v4369 = vpop.f32.mrf.mxu0
        %v4370 = vadd.f32 %v4257, %v4369
        %4371 = vmatprep.mubr.bf16.mxu0 0
        %4372 = vmatmul.mubr.bf16.gmra.mxu0 %v2867
        %v4373 = vpop.f32.mrf.mxu0
        %v4374 = vadd.f32 %v4261, %v4373
        %v4375 = vpop.f32.mrf.mxu0
        %v4376 = vadd.f32 %v4263, %v4375
        %v4377 = vpop.f32.mrf.mxu0
        %v4378 = vadd.f32 %v4265, %v4377
        %v4379 = vpop.f32.mrf.mxu0
        %v4380 = vadd.f32 %v4267, %v4379
        %4381 = vmatprep.mubr.bf16.mxu0 0
        %4382 = vmatmul.mubr.bf16.gmra.mxu0 %v2870
        %v4383 = vpop.f32.mrf.mxu0
        %v4384 = vadd.f32 %v4271, %v4383
        %v4385 = vpop.f32.mrf.mxu0
        %v4386 = vadd.f32 %v4273, %v4385
        %v4387 = vpop.f32.mrf.mxu0
        %v4388 = vadd.f32 %v4275, %v4387
        %v4389 = vpop.f32.mrf.mxu0
        %v4390 = vadd.f32 %v4277, %v4389
        %4391 = vmatprep.mubr.bf16.mxu0 0
        %4392 = vmatmul.mubr.bf16.gmra.mxu0 %v2873
        %v4393 = vpop.f32.mrf.mxu0
        %v4394 = vadd.f32 %v4281, %v4393
        %v4395 = vpop.f32.mrf.mxu0
        %v4396 = vadd.f32 %v4283, %v4395
        %v4397 = vpop.f32.mrf.mxu0
        %v4398 = vadd.f32 %v4285, %v4397
        %v4399 = vpop.f32.mrf.mxu0
        %v4400 = vadd.f32 %v4287, %v4399
        %4401 = vmatprep.mubr.bf16.mxu0 0
        %4402 = vmatmul.mubr.bf16.gmra.mxu0 %v2876
        %v4403 = vpop.f32.mrf.mxu0
        %v4404 = vadd.f32 %v4291, %v4403
        %v4405 = vpop.f32.mrf.mxu0
        %v4406 = vadd.f32 %v4293, %v4405
        %v4407 = vpop.f32.mrf.mxu0
        %v4408 = vadd.f32 %v4295, %v4407
        %v4409 = vpop.f32.mrf.mxu0
        %v4410 = vadd.f32 %v4297, %v4409
        %4411 = vmatprep.mubr.bf16.mxu0 0
        %4412 = vmatmul.mubr.bf16.gmra.mxu0 %v2879
        %v4413 = vpop.f32.mrf.mxu0
        %v4414 = vadd.f32 %v4301, %v4413
        %v4415 = vpop.f32.mrf.mxu0
        %v4416 = vadd.f32 %v4303, %v4415
        %v4417 = vpop.f32.mrf.mxu0
        %v4418 = vadd.f32 %v4305, %v4417
        %v4419 = vpop.f32.mrf.mxu0
        %v4420 = vadd.f32 %v4307, %v4419
        %4421 = vdwg.mxu0
        %v4422 = vmax.f32 %v3892, 1e-10
        %v4423 = vmax.f32 %v3894, 1e-10
        %v4424 = vmax.f32 %v4118, 1e-10
        %v4425 = vmax.f32 %v4120, 1e-10
        %v4426 = vmax.f32 %v4344, 1e-10
        %v4427 = vmax.f32 %v4346, 1e-10
        %v4428 = vmax.f32 %v3896, 1e-10
        %v4429 = vmax.f32 %v3898, 1e-10
        %v4430 = vmax.f32 %v4122, 1e-10
        %v4431 = vmax.f32 %v4124, 1e-10
        %v4432 = vmax.f32 %v4348, 1e-10
        %v4433 = vmax.f32 %v4350, 1e-10
        %v4434 = vmax.f32 %v3902, 1e-10
        %v4435 = vmax.f32 %v3904, 1e-10
        %v4436 = vmax.f32 %v4128, 1e-10
        %v4437 = vmax.f32 %v4130, 1e-10
        %v4438 = vmax.f32 %v4354, 1e-10
        %v4439 = vmax.f32 %v4356, 1e-10
        %v4440 = vmax.f32 %v3906, 1e-10
        %v4441 = vmax.f32 %v3908, 1e-10
        %v4442 = vmax.f32 %v4132, 1e-10
        %v4443 = vmax.f32 %v4134, 1e-10
        %v4444 = vmax.f32 %v4358, 1e-10
        %v4445 = vmax.f32 %v4360, 1e-10
        %v4446 = vmax.f32 %v3912, 1e-10
        %v4447 = vmax.f32 %v3914, 1e-10
        %v4448 = vmax.f32 %v4138, 1e-10
        %v4449 = vmax.f32 %v4140, 1e-10
        %v4450 = vmax.f32 %v4364, 1e-10
        %v4451 = vmax.f32 %v4366, 1e-10
        %v4452 = vmax.f32 %v3916, 1e-10
        %v4453 = vmax.f32 %v3918, 1e-10
        %v4454 = vmax.f32 %v4142, 1e-10
        %v4455 = vmax.f32 %v4144, 1e-10
        %v4456 = vmax.f32 %v4368, 1e-10
        %v4457 = vmax.f32 %v4370, 1e-10
        %v4458 = vmax.f32 %v3922, 1e-10
        %v4459 = vmax.f32 %v3924, 1e-10
        %v4460 = vmax.f32 %v4148, 1e-10
        %v4461 = vmax.f32 %v4150, 1e-10
        %v4462 = vmax.f32 %v4374, 1e-10
        %v4463 = vmax.f32 %v4376, 1e-10
        %v4464 = vmax.f32 %v3926, 1e-10
        %v4465 = vmax.f32 %v3928, 1e-10
        %v4466 = vmax.f32 %v4152, 1e-10
        %v4467 = vmax.f32 %v4154, 1e-10
        %v4468 = vmax.f32 %v4378, 1e-10
        %v4469 = vmax.f32 %v4380, 1e-10
        %v4470 = vmax.f32 %v3932, 1e-10
        %v4471 = vmax.f32 %v3934, 1e-10
        %v4472 = vmax.f32 %v4158, 1e-10
        %v4473 = vmax.f32 %v4160, 1e-10
        %v4474 = vmax.f32 %v4384, 1e-10
        %v4475 = vmax.f32 %v4386, 1e-10
        %v4476 = vmax.f32 %v3936, 1e-10
        %v4477 = vmax.f32 %v3938, 1e-10
        %v4478 = vmax.f32 %v4162, 1e-10
        %v4479 = vmax.f32 %v4164, 1e-10
        %v4480 = vmax.f32 %v4388, 1e-10
        %v4481 = vmax.f32 %v4390, 1e-10
        %v4482 = vmax.f32 %v3942, 1e-10
        %v4483 = vmax.f32 %v3944, 1e-10
        %v4484 = vmax.f32 %v4168, 1e-10
        %v4485 = vmax.f32 %v4170, 1e-10
        %v4486 = vmax.f32 %v4394, 1e-10
        %v4487 = vmax.f32 %v4396, 1e-10
        %v4488 = vmax.f32 %v3946, 1e-10
        %v4489 = vmax.f32 %v3948, 1e-10
        %v4490 = vmax.f32 %v4172, 1e-10
        %v4491 = vmax.f32 %v4174, 1e-10
        %v4492 = vmax.f32 %v4398, 1e-10
        %v4493 = vmax.f32 %v4400, 1e-10
        %v4494 = vmax.f32 %v3952, 1e-10
        %v4495 = vmax.f32 %v3954, 1e-10
        %v4496 = vmax.f32 %v4178, 1e-10
        %v4497 = vmax.f32 %v4180, 1e-10
        %v4498 = vmax.f32 %v4404, 1e-10
        %v4499 = vmax.f32 %v4406, 1e-10
        %v4500 = vmax.f32 %v3956, 1e-10
        %v4501 = vmax.f32 %v3958, 1e-10
        %v4502 = vmax.f32 %v4182, 1e-10
        %v4503 = vmax.f32 %v4184, 1e-10
        %v4504 = vmax.f32 %v4408, 1e-10
        %v4505 = vmax.f32 %v4410, 1e-10
        %v4506 = vmax.f32 %v3962, 1e-10
        %v4507 = vmax.f32 %v3964, 1e-10
        %v4508 = vmax.f32 %v4188, 1e-10
        %v4509 = vmax.f32 %v4190, 1e-10
        %v4510 = vmax.f32 %v4414, 1e-10
        %v4511 = vmax.f32 %v4416, 1e-10
        %v4512 = vmax.f32 %v3966, 1e-10
        %v4513 = vmax.f32 %v3968, 1e-10
        %v4514 = vmax.f32 %v4192, 1e-10
        %v4515 = vmax.f32 %v4194, 1e-10
        %v4516 = vmax.f32 %v4418, 1e-10
        %v4517 = vmax.f32 %v4420, 1e-10
        %v4518 = vlog2.pop %v4422
        %v4519 = vmul.f32 %v4518, 0.6931472
        %v4520 = vlog2.pop %v4423
        %v4521 = vmul.f32 %v4520, 0.6931472
        %v4522 = vlog2.pop %v4424
        %v4523 = vmul.f32 %v4522, 0.6931472
        %v4524 = vlog2.pop %v4425
        %v4525 = vmul.f32 %v4524, 0.6931472
        %v4526 = vlog2.pop %v4426
        %v4527 = vmul.f32 %v4526, 0.6931472
        %v4528 = vlog2.pop %v4427
        %v4529 = vmul.f32 %v4528, 0.6931472
        %v4530 = vlog2.pop %v4428
        %v4531 = vmul.f32 %v4530, 0.6931472
        %v4532 = vlog2.pop %v4429
        %v4533 = vmul.f32 %v4532, 0.6931472
        %v4534 = vlog2.pop %v4430
        %v4535 = vmul.f32 %v4534, 0.6931472
        %v4536 = vlog2.pop %v4431
        %v4537 = vmul.f32 %v4536, 0.6931472
        %v4538 = vlog2.pop %v4432
        %v4539 = vmul.f32 %v4538, 0.6931472
        %v4540 = vlog2.pop %v4433
        %v4541 = vmul.f32 %v4540, 0.6931472
        %v4542 = vlog2.pop %v4434
        %v4543 = vmul.f32 %v4542, 0.6931472
        %v4544 = vlog2.pop %v4435
        %v4545 = vmul.f32 %v4544, 0.6931472
        %v4546 = vlog2.pop %v4436
        %v4547 = vmul.f32 %v4546, 0.6931472
        %v4548 = vlog2.pop %v4437
        %v4549 = vmul.f32 %v4548, 0.6931472
        %v4550 = vlog2.pop %v4438
        %v4551 = vmul.f32 %v4550, 0.6931472
        %v4552 = vlog2.pop %v4439
        %v4553 = vmul.f32 %v4552, 0.6931472
        %v4554 = vlog2.pop %v4440
        %v4555 = vmul.f32 %v4554, 0.6931472
        %v4556 = vlog2.pop %v4441
        %v4557 = vmul.f32 %v4556, 0.6931472
        %v4558 = vlog2.pop %v4442
        %v4559 = vmul.f32 %v4558, 0.6931472
        %v4560 = vlog2.pop %v4443
        %v4561 = vmul.f32 %v4560, 0.6931472
        %v4562 = vlog2.pop %v4444
        %v4563 = vmul.f32 %v4562, 0.6931472
        %v4564 = vlog2.pop %v4445
        %v4565 = vmul.f32 %v4564, 0.6931472
        %v4566 = vlog2.pop %v4446
        %v4567 = vmul.f32 %v4566, 0.6931472
        %v4568 = vlog2.pop %v4447
        %v4569 = vmul.f32 %v4568, 0.6931472
        %v4570 = vlog2.pop %v4448
        %v4571 = vmul.f32 %v4570, 0.6931472
        %v4572 = vlog2.pop %v4449
        %v4573 = vmul.f32 %v4572, 0.6931472
        %v4574 = vlog2.pop %v4450
        %v4575 = vmul.f32 %v4574, 0.6931472
        %v4576 = vlog2.pop %v4451
        %v4577 = vmul.f32 %v4576, 0.6931472
        %v4578 = vlog2.pop %v4452
        %v4579 = vmul.f32 %v4578, 0.6931472
        %v4580 = vlog2.pop %v4453
        %v4581 = vmul.f32 %v4580, 0.6931472
        %v4582 = vlog2.pop %v4454
        %v4583 = vmul.f32 %v4582, 0.6931472
        %v4584 = vlog2.pop %v4455
        %v4585 = vmul.f32 %v4584, 0.6931472
        %v4586 = vlog2.pop %v4456
        %v4587 = vmul.f32 %v4586, 0.6931472
        %v4588 = vlog2.pop %v4457
        %v4589 = vmul.f32 %v4588, 0.6931472
        %v4590 = vlog2.pop %v4458
        %v4591 = vmul.f32 %v4590, 0.6931472
        %v4592 = vlog2.pop %v4459
        %v4593 = vmul.f32 %v4592, 0.6931472
        %v4594 = vlog2.pop %v4460
        %v4595 = vmul.f32 %v4594, 0.6931472
        %v4596 = vlog2.pop %v4461
        %v4597 = vmul.f32 %v4596, 0.6931472
        %v4598 = vlog2.pop %v4462
        %v4599 = vmul.f32 %v4598, 0.6931472
        %v4600 = vlog2.pop %v4463
        %v4601 = vmul.f32 %v4600, 0.6931472
        %v4602 = vlog2.pop %v4464
        %v4603 = vmul.f32 %v4602, 0.6931472
        %v4604 = vlog2.pop %v4465
        %v4605 = vmul.f32 %v4604, 0.6931472
        %v4606 = vlog2.pop %v4466
        %v4607 = vmul.f32 %v4606, 0.6931472
        %v4608 = vlog2.pop %v4467
        %v4609 = vmul.f32 %v4608, 0.6931472
        %v4610 = vlog2.pop %v4468
        %v4611 = vmul.f32 %v4610, 0.6931472
        %v4612 = vlog2.pop %v4469
        %v4613 = vmul.f32 %v4612, 0.6931472
        %v4614 = vlog2.pop %v4470
        %v4615 = vmul.f32 %v4614, 0.6931472
        %v4616 = vlog2.pop %v4471
        %v4617 = vmul.f32 %v4616, 0.6931472
        %v4618 = vlog2.pop %v4472
        %v4619 = vmul.f32 %v4618, 0.6931472
        %v4620 = vlog2.pop %v4473
        %v4621 = vmul.f32 %v4620, 0.6931472
        %v4622 = vlog2.pop %v4474
        %v4623 = vmul.f32 %v4622, 0.6931472
        %v4624 = vlog2.pop %v4475
        %v4625 = vmul.f32 %v4624, 0.6931472
        %v4626 = vlog2.pop %v4476
        %v4627 = vmul.f32 %v4626, 0.6931472
        %v4628 = vlog2.pop %v4477
        %v4629 = vmul.f32 %v4628, 0.6931472
        %v4630 = vlog2.pop %v4478
        %v4631 = vmul.f32 %v4630, 0.6931472
        %v4632 = vlog2.pop %v4479
        %v4633 = vmul.f32 %v4632, 0.6931472
        %v4634 = vlog2.pop %v4480
        %v4635 = vmul.f32 %v4634, 0.6931472
        %v4636 = vlog2.pop %v4481
        %v4637 = vmul.f32 %v4636, 0.6931472
        %v4638 = vlog2.pop %v4482
        %v4639 = vmul.f32 %v4638, 0.6931472
        %v4640 = vlog2.pop %v4483
        %v4641 = vmul.f32 %v4640, 0.6931472
        %v4642 = vlog2.pop %v4484
        %v4643 = vmul.f32 %v4642, 0.6931472
        %v4644 = vlog2.pop %v4485
        %v4645 = vmul.f32 %v4644, 0.6931472
        %v4646 = vlog2.pop %v4486
        %v4647 = vmul.f32 %v4646, 0.6931472
        %v4648 = vlog2.pop %v4487
        %v4649 = vmul.f32 %v4648, 0.6931472
        %v4650 = vlog2.pop %v4488
        %v4651 = vmul.f32 %v4650, 0.6931472
        %v4652 = vlog2.pop %v4489
        %v4653 = vmul.f32 %v4652, 0.6931472
        %v4654 = vlog2.pop %v4490
        %v4655 = vmul.f32 %v4654, 0.6931472
        %v4656 = vlog2.pop %v4491
        %v4657 = vmul.f32 %v4656, 0.6931472
        %v4658 = vlog2.pop %v4492
        %v4659 = vmul.f32 %v4658, 0.6931472
        %v4660 = vlog2.pop %v4493
        %v4661 = vmul.f32 %v4660, 0.6931472
        %v4662 = vlog2.pop %v4494
        %v4663 = vmul.f32 %v4662, 0.6931472
        %v4664 = vlog2.pop %v4495
        %v4665 = vmul.f32 %v4664, 0.6931472
        %v4666 = vlog2.pop %v4496
        %v4667 = vmul.f32 %v4666, 0.6931472
        %v4668 = vlog2.pop %v4497
        %v4669 = vmul.f32 %v4668, 0.6931472
        %v4670 = vlog2.pop %v4498
        %v4671 = vmul.f32 %v4670, 0.6931472
        %v4672 = vlog2.pop %v4499
        %v4673 = vmul.f32 %v4672, 0.6931472
        %v4674 = vlog2.pop %v4500
        %v4675 = vmul.f32 %v4674, 0.6931472
        %v4676 = vlog2.pop %v4501
        %v4677 = vmul.f32 %v4676, 0.6931472
        %v4678 = vlog2.pop %v4502
        %v4679 = vmul.f32 %v4678, 0.6931472
        %v4680 = vlog2.pop %v4503
        %v4681 = vmul.f32 %v4680, 0.6931472
        %v4682 = vlog2.pop %v4504
        %v4683 = vmul.f32 %v4682, 0.6931472
        %v4684 = vlog2.pop %v4505
        %v4685 = vmul.f32 %v4684, 0.6931472
        %v4686 = vlog2.pop %v4506
        %v4687 = vmul.f32 %v4686, 0.6931472
        %v4688 = vlog2.pop %v4507
        %v4689 = vmul.f32 %v4688, 0.6931472
        %v4690 = vlog2.pop %v4508
        %v4691 = vmul.f32 %v4690, 0.6931472
        %v4692 = vlog2.pop %v4509
        %v4693 = vmul.f32 %v4692, 0.6931472
        %v4694 = vlog2.pop %v4510
        %v4695 = vmul.f32 %v4694, 0.6931472
        %v4696 = vlog2.pop %v4511
        %v4697 = vmul.f32 %v4696, 0.6931472
        %v4698 = vlog2.pop %v4512
        %v4699 = vmul.f32 %v4698, 0.6931472
        %v4700 = vlog2.pop %v4513
        %v4701 = vmul.f32 %v4700, 0.6931472
        %v4702 = vlog2.pop %v4514
        %v4703 = vmul.f32 %v4702, 0.6931472
        %v4704 = vlog2.pop %v4515
        %v4705 = vmul.f32 %v4704, 0.6931472
        %v4706 = vlog2.pop %v4516
        %v4707 = vmul.f32 %v4706, 0.6931472
        %v4708 = vlog2.pop %v4517
        %v4709 = vmul.f32 %v4708, 0.6931472
        %v4710 = vmul.f32 %v4519, 0.4342945
        %v4711 = vmul.f32 %v4521, 0.4342945
        %v4712 = vmul.f32 %v4523, 0.4342945
        %v4713 = vmul.f32 %v4525, 0.4342945
        %v4714 = vmul.f32 %v4527, 0.4342945
        %v4715 = vmul.f32 %v4529, 0.4342945
        %v4716 = vmul.f32 %v4531, 0.4342945
        %v4717 = vmul.f32 %v4533, 0.4342945
        %v4718 = vmul.f32 %v4535, 0.4342945
        %v4719 = vmul.f32 %v4537, 0.4342945
        %v4720 = vmul.f32 %v4539, 0.4342945
        %v4721 = vmul.f32 %v4541, 0.4342945
        %v4722 = vmul.f32 %v4543, 0.4342945
        %v4723 = vmul.f32 %v4545, 0.4342945
        %v4724 = vmul.f32 %v4547, 0.4342945
        %v4725 = vmul.f32 %v4549, 0.4342945
        %v4726 = vmul.f32 %v4551, 0.4342945
        %v4727 = vmul.f32 %v4553, 0.4342945
        %v4728 = vmul.f32 %v4555, 0.4342945
        %v4729 = vmul.f32 %v4557, 0.4342945
        %v4730 = vmul.f32 %v4559, 0.4342945
        %v4731 = vmul.f32 %v4561, 0.4342945
        %v4732 = vmul.f32 %v4563, 0.4342945
        %v4733 = vmul.f32 %v4565, 0.4342945
        %v4734 = vmul.f32 %v4567, 0.4342945
        %v4735 = vmul.f32 %v4569, 0.4342945
        %v4736 = vmul.f32 %v4571, 0.4342945
        %v4737 = vmul.f32 %v4573, 0.4342945
        %v4738 = vmul.f32 %v4575, 0.4342945
        %v4739 = vmul.f32 %v4577, 0.4342945
        %v4740 = vmul.f32 %v4579, 0.4342945
        %v4741 = vmul.f32 %v4581, 0.4342945
        %v4742 = vmul.f32 %v4583, 0.4342945
        %v4743 = vmul.f32 %v4585, 0.4342945
        %v4744 = vmul.f32 %v4587, 0.4342945
        %v4745 = vmul.f32 %v4589, 0.4342945
        %v4746 = vmul.f32 %v4591, 0.4342945
        %v4747 = vmul.f32 %v4593, 0.4342945
        %v4748 = vmul.f32 %v4595, 0.4342945
        %v4749 = vmul.f32 %v4597, 0.4342945
        %v4750 = vmul.f32 %v4599, 0.4342945
        %v4751 = vmul.f32 %v4601, 0.4342945
        %v4752 = vmul.f32 %v4603, 0.4342945
        %v4753 = vmul.f32 %v4605, 0.4342945
        %v4754 = vmul.f32 %v4607, 0.4342945
        %v4755 = vmul.f32 %v4609, 0.4342945
        %v4756 = vmul.f32 %v4611, 0.4342945
        %v4757 = vmul.f32 %v4613, 0.4342945
        %v4758 = vmul.f32 %v4615, 0.4342945
        %v4759 = vmul.f32 %v4617, 0.4342945
        %v4760 = vmul.f32 %v4619, 0.4342945
        %v4761 = vmul.f32 %v4621, 0.4342945
        %v4762 = vmul.f32 %v4623, 0.4342945
        %v4763 = vmul.f32 %v4625, 0.4342945
        %v4764 = vmul.f32 %v4627, 0.4342945
        %v4765 = vmul.f32 %v4629, 0.4342945
        %v4766 = vmul.f32 %v4631, 0.4342945
        %v4767 = vmul.f32 %v4633, 0.4342945
        %v4768 = vmul.f32 %v4635, 0.4342945
        %v4769 = vmul.f32 %v4637, 0.4342945
        %v4770 = vmul.f32 %v4639, 0.4342945
        %v4771 = vmul.f32 %v4641, 0.4342945
        %v4772 = vmul.f32 %v4643, 0.4342945
        %v4773 = vmul.f32 %v4645, 0.4342945
        %v4774 = vmul.f32 %v4647, 0.4342945
        %v4775 = vmul.f32 %v4649, 0.4342945
        %v4776 = vmul.f32 %v4651, 0.4342945
        %v4777 = vmul.f32 %v4653, 0.4342945
        %v4778 = vmul.f32 %v4655, 0.4342945
        %v4779 = vmul.f32 %v4657, 0.4342945
        %v4780 = vmul.f32 %v4659, 0.4342945
        %v4781 = vmul.f32 %v4661, 0.4342945
        %v4782 = vmul.f32 %v4663, 0.4342945
        %v4783 = vmul.f32 %v4665, 0.4342945
        %v4784 = vmul.f32 %v4667, 0.4342945
        %v4785 = vmul.f32 %v4669, 0.4342945
        %v4786 = vmul.f32 %v4671, 0.4342945
        %v4787 = vmul.f32 %v4673, 0.4342945
        %v4788 = vmul.f32 %v4675, 0.4342945
        %v4789 = vmul.f32 %v4677, 0.4342945
        %v4790 = vmul.f32 %v4679, 0.4342945
        %v4791 = vmul.f32 %v4681, 0.4342945
        %v4792 = vmul.f32 %v4683, 0.4342945
        %v4793 = vmul.f32 %v4685, 0.4342945
        %v4794 = vmul.f32 %v4687, 0.4342945
        %v4795 = vmul.f32 %v4689, 0.4342945
        %v4796 = vmul.f32 %v4691, 0.4342945
        %v4797 = vmul.f32 %v4693, 0.4342945
        %v4798 = vmul.f32 %v4695, 0.4342945
        %v4799 = vmul.f32 %v4697, 0.4342945
        %v4800 = vmul.f32 %v4699, 0.4342945
        %v4801 = vmul.f32 %v4701, 0.4342945
        %v4802 = vmul.f32 %v4703, 0.4342945
        %v4803 = vmul.f32 %v4705, 0.4342945
        %v4804 = vmul.f32 %v4707, 0.4342945
        %v4805 = vmul.f32 %v4709, 0.4342945
        %v4806 = vmul.f32 %v4710, 10.0
        %v4807 = vmul.f32 %v4711, 10.0
        %v4808 = vmul.f32 %v4712, 10.0
        %v4809 = vmul.f32 %v4713, 10.0
        %v4810 = vmul.f32 %v4714, 10.0
        %v4811 = vmul.f32 %v4715, 10.0
        %v4812 = vmul.f32 %v4716, 10.0
        %v4813 = vmul.f32 %v4717, 10.0
        %v4814 = vmul.f32 %v4718, 10.0
        %v4815 = vmul.f32 %v4719, 10.0
        %v4816 = vmul.f32 %v4720, 10.0
        %v4817 = vmul.f32 %v4721, 10.0
        %v4818 = vmul.f32 %v4722, 10.0
        %v4819 = vmul.f32 %v4723, 10.0
        %v4820 = vmul.f32 %v4724, 10.0
        %v4821 = vmul.f32 %v4725, 10.0
        %v4822 = vmul.f32 %v4726, 10.0
        %v4823 = vmul.f32 %v4727, 10.0
        %v4824 = vmul.f32 %v4728, 10.0
        %v4825 = vmul.f32 %v4729, 10.0
        %v4826 = vmul.f32 %v4730, 10.0
        %v4827 = vmul.f32 %v4731, 10.0
        %v4828 = vmul.f32 %v4732, 10.0
        %v4829 = vmul.f32 %v4733, 10.0
        %v4830 = vmul.f32 %v4734, 10.0
        %v4831 = vmul.f32 %v4735, 10.0
        %v4832 = vmul.f32 %v4736, 10.0
        %v4833 = vmul.f32 %v4737, 10.0
        %v4834 = vmul.f32 %v4738, 10.0
        %v4835 = vmul.f32 %v4739, 10.0
        %v4836 = vmul.f32 %v4740, 10.0
        %v4837 = vmul.f32 %v4741, 10.0
        %v4838 = vmul.f32 %v4742, 10.0
        %v4839 = vmul.f32 %v4743, 10.0
        %v4840 = vmul.f32 %v4744, 10.0
        %v4841 = vmul.f32 %v4745, 10.0
        %v4842 = vmul.f32 %v4746, 10.0
        %v4843 = vmul.f32 %v4747, 10.0
        %v4844 = vmul.f32 %v4748, 10.0
        %v4845 = vmul.f32 %v4749, 10.0
        %v4846 = vmul.f32 %v4750, 10.0
        %v4847 = vmul.f32 %v4751, 10.0
        %v4848 = vmul.f32 %v4752, 10.0
        %v4849 = vmul.f32 %v4753, 10.0
        %v4850 = vmul.f32 %v4754, 10.0
        %v4851 = vmul.f32 %v4755, 10.0
        %v4852 = vmul.f32 %v4756, 10.0
        %v4853 = vmul.f32 %v4757, 10.0
        %v4854 = vmul.f32 %v4758, 10.0
        %v4855 = vmul.f32 %v4759, 10.0
        %v4856 = vmul.f32 %v4760, 10.0
        %v4857 = vmul.f32 %v4761, 10.0
        %v4858 = vmul.f32 %v4762, 10.0
        %v4859 = vmul.f32 %v4763, 10.0
        %v4860 = vmul.f32 %v4764, 10.0
        %v4861 = vmul.f32 %v4765, 10.0
        %v4862 = vmul.f32 %v4766, 10.0
        %v4863 = vmul.f32 %v4767, 10.0
        %v4864 = vmul.f32 %v4768, 10.0
        %v4865 = vmul.f32 %v4769, 10.0
        %v4866 = vmul.f32 %v4770, 10.0
        %v4867 = vmul.f32 %v4771, 10.0
        %v4868 = vmul.f32 %v4772, 10.0
        %v4869 = vmul.f32 %v4773, 10.0
        %v4870 = vmul.f32 %v4774, 10.0
        %v4871 = vmul.f32 %v4775, 10.0
        %v4872 = vmul.f32 %v4776, 10.0
        %v4873 = vmul.f32 %v4777, 10.0
        %v4874 = vmul.f32 %v4778, 10.0
        %v4875 = vmul.f32 %v4779, 10.0
        %v4876 = vmul.f32 %v4780, 10.0
        %v4877 = vmul.f32 %v4781, 10.0
        %v4878 = vmul.f32 %v4782, 10.0
        %v4879 = vmul.f32 %v4783, 10.0
        %v4880 = vmul.f32 %v4784, 10.0
        %v4881 = vmul.f32 %v4785, 10.0
        %v4882 = vmul.f32 %v4786, 10.0
        %v4883 = vmul.f32 %v4787, 10.0
        %v4884 = vmul.f32 %v4788, 10.0
        %v4885 = vmul.f32 %v4789, 10.0
        %v4886 = vmul.f32 %v4790, 10.0
        %v4887 = vmul.f32 %v4791, 10.0
        %v4888 = vmul.f32 %v4792, 10.0
        %v4889 = vmul.f32 %v4793, 10.0
        %v4890 = vmul.f32 %v4794, 10.0
        %v4891 = vmul.f32 %v4795, 10.0
        %v4892 = vmul.f32 %v4796, 10.0
        %v4893 = vmul.f32 %v4797, 10.0
        %v4894 = vmul.f32 %v4798, 10.0
        %v4895 = vmul.f32 %v4799, 10.0
        %v4896 = vmul.f32 %v4800, 10.0
        %v4897 = vmul.f32 %v4801, 10.0
        %v4898 = vmul.f32 %v4802, 10.0
        %v4899 = vmul.f32 %v4803, 10.0
        %v4900 = vmul.f32 %v4804, 10.0
        %v4901 = vmul.f32 %v4805, 10.0
        %4902 = vxpose.xlu0.b32.start [1/16] %v4806, 128
        %4903 = vxpose.xlu0.b32.cont [2/16] %v4812, 128
        %4904 = vxpose.xlu0.b32.cont [3/16] %v4818, 128
        %4905 = vxpose.xlu0.b32.cont [4/16] %v4824, 128
        %4906 = vxpose.xlu0.b32.cont [5/16] %v4830, 128
        %4907 = vxpose.xlu0.b32.cont [6/16] %v4836, 128
        %4908 = vxpose.xlu0.b32.cont [7/16] %v4842, 128
        %4909 = vxpose.xlu0.b32.cont [8/16] %v4848, 128
        %4910 = vxpose.xlu0.b32.cont [9/16] %v4854, 128
        %4911 = vxpose.xlu0.b32.cont [10/16] %v4860, 128
        %4912 = vxpose.xlu0.b32.cont [11/16] %v4866, 128
        %4913 = vxpose.xlu0.b32.cont [12/16] %v4872, 128
        %4914 = vxpose.xlu0.b32.cont [13/16] %v4878, 128
        %4915 = vxpose.xlu0.b32.cont [14/16] %v4884, 128
        %4916 = vxpose.xlu0.b32.cont [15/16] %v4890, 128
        %4917 = vxpose.xlu0.b32.end [16/16] %v4896, 128
        %v4918 = vpop.trf.xlu0
        %v4919 = vpop.trf.xlu0
        %v4920 = vpop.trf.xlu0
        %v4921 = vpop.trf.xlu0
        %v4922 = vpop.trf.xlu0
        %v4923 = vpop.trf.xlu0
        %v4924 = vpop.trf.xlu0
        %v4925 = vpop.trf.xlu0
        %v4926 = vpop.trf.xlu0
        %v4927 = vpop.trf.xlu0
        %v4928 = vpop.trf.xlu0
        %v4929 = vpop.trf.xlu0
        %v4930 = vpop.trf.xlu0
        %v4931 = vpop.trf.xlu0
        %v4932 = vpop.trf.xlu0
        %v4933 = vpop.trf.xlu0
        %4934 = vxpose.xlu0.b32.start [1/16] %v4807, 128
        %4935 = vxpose.xlu0.b32.cont [2/16] %v4813, 128
        %4936 = vxpose.xlu0.b32.cont [3/16] %v4819, 128
        %4937 = vxpose.xlu0.b32.cont [4/16] %v4825, 128
        %4938 = vxpose.xlu0.b32.cont [5/16] %v4831, 128
        %4939 = vxpose.xlu0.b32.cont [6/16] %v4837, 128
        %4940 = vxpose.xlu0.b32.cont [7/16] %v4843, 128
        %4941 = vxpose.xlu0.b32.cont [8/16] %v4849, 128
        %4942 = vxpose.xlu0.b32.cont [9/16] %v4855, 128
        %4943 = vxpose.xlu0.b32.cont [10/16] %v4861, 128
        %4944 = vxpose.xlu0.b32.cont [11/16] %v4867, 128
        %4945 = vxpose.xlu0.b32.cont [12/16] %v4873, 128
        %4946 = vxpose.xlu0.b32.cont [13/16] %v4879, 128
        %4947 = vxpose.xlu0.b32.cont [14/16] %v4885, 128
        %4948 = vxpose.xlu0.b32.cont [15/16] %v4891, 128
        %4949 = vxpose.xlu0.b32.end [16/16] %v4897, 128
        %v4950 = vpop.trf.xlu0
        %v4951 = vpop.trf.xlu0
        %v4952 = vpop.trf.xlu0
        %v4953 = vpop.trf.xlu0
        %v4954 = vpop.trf.xlu0
        %v4955 = vpop.trf.xlu0
        %v4956 = vpop.trf.xlu0
        %v4957 = vpop.trf.xlu0
        %v4958 = vpop.trf.xlu0
        %v4959 = vpop.trf.xlu0
        %v4960 = vpop.trf.xlu0
        %v4961 = vpop.trf.xlu0
        %v4962 = vpop.trf.xlu0
        %v4963 = vpop.trf.xlu0
        %v4964 = vpop.trf.xlu0
        %v4965 = vpop.trf.xlu0
        %4966 = vxpose.xlu0.b32.start [1/16] %v4808, 128
        %4967 = vxpose.xlu0.b32.cont [2/16] %v4814, 128
        %4968 = vxpose.xlu0.b32.cont [3/16] %v4820, 128
        %4969 = vxpose.xlu0.b32.cont [4/16] %v4826, 128
        %4970 = vxpose.xlu0.b32.cont [5/16] %v4832, 128
        %4971 = vxpose.xlu0.b32.cont [6/16] %v4838, 128
        %4972 = vxpose.xlu0.b32.cont [7/16] %v4844, 128
        %4973 = vxpose.xlu0.b32.cont [8/16] %v4850, 128
        %4974 = vxpose.xlu0.b32.cont [9/16] %v4856, 128
        %4975 = vxpose.xlu0.b32.cont [10/16] %v4862, 128
        %4976 = vxpose.xlu0.b32.cont [11/16] %v4868, 128
        %4977 = vxpose.xlu0.b32.cont [12/16] %v4874, 128
        %4978 = vxpose.xlu0.b32.cont [13/16] %v4880, 128
        %4979 = vxpose.xlu0.b32.cont [14/16] %v4886, 128
        %4980 = vxpose.xlu0.b32.cont [15/16] %v4892, 128
        %4981 = vxpose.xlu0.b32.end [16/16] %v4898, 128
        %v4982 = vpop.trf.xlu0
        %v4983 = vpop.trf.xlu0
        %v4984 = vpop.trf.xlu0
        %v4985 = vpop.trf.xlu0
        %v4986 = vpop.trf.xlu0
        %v4987 = vpop.trf.xlu0
        %v4988 = vpop.trf.xlu0
        %v4989 = vpop.trf.xlu0
        %v4990 = vpop.trf.xlu0
        %v4991 = vpop.trf.xlu0
        %v4992 = vpop.trf.xlu0
        %v4993 = vpop.trf.xlu0
        %v4994 = vpop.trf.xlu0
        %v4995 = vpop.trf.xlu0
        %v4996 = vpop.trf.xlu0
        %v4997 = vpop.trf.xlu0
        %4998 = vxpose.xlu0.b32.start [1/16] %v4809, 128
        %4999 = vxpose.xlu0.b32.cont [2/16] %v4815, 128
        %5000 = vxpose.xlu0.b32.cont [3/16] %v4821, 128
        %5001 = vxpose.xlu0.b32.cont [4/16] %v4827, 128
        %5002 = vxpose.xlu0.b32.cont [5/16] %v4833, 128
        %5003 = vxpose.xlu0.b32.cont [6/16] %v4839, 128
        %5004 = vxpose.xlu0.b32.cont [7/16] %v4845, 128
        %5005 = vxpose.xlu0.b32.cont [8/16] %v4851, 128
        %5006 = vxpose.xlu0.b32.cont [9/16] %v4857, 128
        %5007 = vxpose.xlu0.b32.cont [10/16] %v4863, 128
        %5008 = vxpose.xlu0.b32.cont [11/16] %v4869, 128
        %5009 = vxpose.xlu0.b32.cont [12/16] %v4875, 128
        %5010 = vxpose.xlu0.b32.cont [13/16] %v4881, 128
        %5011 = vxpose.xlu0.b32.cont [14/16] %v4887, 128
        %5012 = vxpose.xlu0.b32.cont [15/16] %v4893, 128
        %5013 = vxpose.xlu0.b32.end [16/16] %v4899, 128
        %v5014 = vpop.trf.xlu0
        %v5015 = vpop.trf.xlu0
        %v5016 = vpop.trf.xlu0
        %v5017 = vpop.trf.xlu0
        %v5018 = vpop.trf.xlu0
        %v5019 = vpop.trf.xlu0
        %v5020 = vpop.trf.xlu0
        %v5021 = vpop.trf.xlu0
        %v5022 = vpop.trf.xlu0
        %v5023 = vpop.trf.xlu0
        %v5024 = vpop.trf.xlu0
        %v5025 = vpop.trf.xlu0
        %v5026 = vpop.trf.xlu0
        %v5027 = vpop.trf.xlu0
        %v5028 = vpop.trf.xlu0
        %v5029 = vpop.trf.xlu0
        %5030 = vxpose.xlu0.b32.start [1/16] %v4810, 128
        %5031 = vxpose.xlu0.b32.cont [2/16] %v4816, 128
        %5032 = vxpose.xlu0.b32.cont [3/16] %v4822, 128
        %5033 = vxpose.xlu0.b32.cont [4/16] %v4828, 128
        %5034 = vxpose.xlu0.b32.cont [5/16] %v4834, 128
        %5035 = vxpose.xlu0.b32.cont [6/16] %v4840, 128
        %5036 = vxpose.xlu0.b32.cont [7/16] %v4846, 128
        %5037 = vxpose.xlu0.b32.cont [8/16] %v4852, 128
        %5038 = vxpose.xlu0.b32.cont [9/16] %v4858, 128
        %5039 = vxpose.xlu0.b32.cont [10/16] %v4864, 128
        %5040 = vxpose.xlu0.b32.cont [11/16] %v4870, 128
        %5041 = vxpose.xlu0.b32.cont [12/16] %v4876, 128
        %5042 = vxpose.xlu0.b32.cont [13/16] %v4882, 128
        %5043 = vxpose.xlu0.b32.cont [14/16] %v4888, 128
        %5044 = vxpose.xlu0.b32.cont [15/16] %v4894, 128
        %5045 = vxpose.xlu0.b32.end [16/16] %v4900, 128
        %v5046 = vpop.trf.xlu0
        %v5047 = vpop.trf.xlu0
        %v5048 = vpop.trf.xlu0
        %v5049 = vpop.trf.xlu0
        %v5050 = vpop.trf.xlu0
        %v5051 = vpop.trf.xlu0
        %v5052 = vpop.trf.xlu0
        %v5053 = vpop.trf.xlu0
        %v5054 = vpop.trf.xlu0
        %v5055 = vpop.trf.xlu0
        %v5056 = vpop.trf.xlu0
        %v5057 = vpop.trf.xlu0
        %v5058 = vpop.trf.xlu0
        %v5059 = vpop.trf.xlu0
        %v5060 = vpop.trf.xlu0
        %v5061 = vpop.trf.xlu0
        %5062 = vxpose.xlu0.b32.start [1/16] %v4811, 128
        %5063 = vxpose.xlu0.b32.cont [2/16] %v4817, 128
        %5064 = vxpose.xlu0.b32.cont [3/16] %v4823, 128
        %5065 = vxpose.xlu0.b32.cont [4/16] %v4829, 128
        %5066 = vxpose.xlu0.b32.cont [5/16] %v4835, 128
        %5067 = vxpose.xlu0.b32.cont [6/16] %v4841, 128
        %5068 = vxpose.xlu0.b32.cont [7/16] %v4847, 128
        %5069 = vxpose.xlu0.b32.cont [8/16] %v4853, 128
        %5070 = vxpose.xlu0.b32.cont [9/16] %v4859, 128
        %5071 = vxpose.xlu0.b32.cont [10/16] %v4865, 128
        %5072 = vxpose.xlu0.b32.cont [11/16] %v4871, 128
        %5073 = vxpose.xlu0.b32.cont [12/16] %v4877, 128
        %5074 = vxpose.xlu0.b32.cont [13/16] %v4883, 128
        %5075 = vxpose.xlu0.b32.cont [14/16] %v4889, 128
        %5076 = vxpose.xlu0.b32.cont [15/16] %v4895, 128
        %5077 = vxpose.xlu0.b32.end [16/16] %v4901, 128
        %v5078 = vpop.trf.xlu0
        %v5079 = vpop.trf.xlu0
        %v5080 = vpop.trf.xlu0
        %v5081 = vpop.trf.xlu0
        %v5082 = vpop.trf.xlu0
        %v5083 = vpop.trf.xlu0
        %v5084 = vpop.trf.xlu0
        %v5085 = vpop.trf.xlu0
        %v5086 = vpop.trf.xlu0
        %v5087 = vpop.trf.xlu0
        %v5088 = vpop.trf.xlu0
        %v5089 = vpop.trf.xlu0
        %v5090 = vpop.trf.xlu0
        %v5091 = vpop.trf.xlu0
        %v5092 = vpop.trf.xlu0
        %v5093 = vpop.trf.xlu0
        %5094 = vst [vmem:[%s236] sm:$0xff] %v4918
        %5095 = vst [vmem:[%s236 + $0x8] sm:$0xff] %v4919
        %5096 = vst [vmem:[%s236 + $0x10] sm:$0xff] %v4920
        %5097 = vst [vmem:[%s236 + $0x18] sm:$0xff] %v4921
        %5098 = vst [vmem:[%s236 + $0x20] sm:$0xff] %v4922
        %5099 = vst [vmem:[%s236 + $0x28] sm:$0xff] %v4923
        %5100 = vst [vmem:[%s236 + $0x30] sm:$0xff] %v4924
        %5101 = vst [vmem:[%s236 + $0x38] sm:$0xff] %v4925
        %5102 = vst [vmem:[%s236 + $0x40] sm:$0xff] %v4926
        %5103 = vst [vmem:[%s236 + $0x48] sm:$0xff] %v4927
        %5104 = vst [vmem:[%s236 + $0x50] sm:$0xff] %v4928
        %5105 = vst [vmem:[%s236 + $0x58] sm:$0xff] %v4929
        %5106 = vst [vmem:[%s236 + $0x60] sm:$0xff] %v4930
        %5107 = vst [vmem:[%s236 + $0x68] sm:$0xff] %v4931
        %5108 = vst [vmem:[%s236 + $0x70] sm:$0xff] %v4932
        %5109 = vst [vmem:[%s236 + $0x78] sm:$0xff] %v4933
        %5110 = vst [vmem:[%s236 + $0x80] sm:$0xff] %v4950
        %5111 = vst [vmem:[%s236 + $0x88] sm:$0xff] %v4951
        %5112 = vst [vmem:[%s236 + $0x90] sm:$0xff] %v4952
        %5113 = vst [vmem:[%s236 + $0x98] sm:$0xff] %v4953
        %5114 = vst [vmem:[%s236 + $0xa0] sm:$0xff] %v4954
        %5115 = vst [vmem:[%s236 + $0xa8] sm:$0xff] %v4955
        %5116 = vst [vmem:[%s236 + $0xb0] sm:$0xff] %v4956
        %5117 = vst [vmem:[%s236 + $0xb8] sm:$0xff] %v4957
        %5118 = vst [vmem:[%s236 + $0xc0] sm:$0xff] %v4958
        %5119 = vst [vmem:[%s236 + $0xc8] sm:$0xff] %v4959
        %5120 = vst [vmem:[%s236 + $0xd0] sm:$0xff] %v4960
        %5121 = vst [vmem:[%s236 + $0xd8] sm:$0xff] %v4961
        %5122 = vst [vmem:[%s236 + $0xe0] sm:$0xff] %v4962
        %5123 = vst [vmem:[%s236 + $0xe8] sm:$0xff] %v4963
        %5124 = vst [vmem:[%s236 + $0xf0] sm:$0xff] %v4964
        %5125 = vst [vmem:[%s236 + $0xf8] sm:$0xff] %v4965
        %5126 = vst [vmem:[%s236 + $0x100] sm:$0xff] %v4982
        %5127 = vst [vmem:[%s236 + $0x108] sm:$0xff] %v4983
        %5128 = vst [vmem:[%s236 + $0x110] sm:$0xff] %v4984
        %5129 = vst [vmem:[%s236 + $0x118] sm:$0xff] %v4985
        %5130 = vst [vmem:[%s236 + $0x120] sm:$0xff] %v4986
        %5131 = vst [vmem:[%s236 + $0x128] sm:$0xff] %v4987
        %5132 = vst [vmem:[%s236 + $0x130] sm:$0xff] %v4988
        %5133 = vst [vmem:[%s236 + $0x138] sm:$0xff] %v4989
        %5134 = vst [vmem:[%s236 + $0x140] sm:$0xff] %v4990
        %5135 = vst [vmem:[%s236 + $0x148] sm:$0xff] %v4991
        %5136 = vst [vmem:[%s236 + $0x150] sm:$0xff] %v4992
        %5137 = vst [vmem:[%s236 + $0x158] sm:$0xff] %v4993
        %5138 = vst [vmem:[%s236 + $0x160] sm:$0xff] %v4994
        %5139 = vst [vmem:[%s236 + $0x168] sm:$0xff] %v4995
        %5140 = vst [vmem:[%s236 + $0x170] sm:$0xff] %v4996
        %5141 = vst [vmem:[%s236 + $0x178] sm:$0xff] %v4997
        %5142 = vst [vmem:[%s236 + $0x180] sm:$0xff] %v5014
        %5143 = vst [vmem:[%s236 + $0x188] sm:$0xff] %v5015
        %5144 = vst [vmem:[%s236 + $0x190] sm:$0xff] %v5016
        %5145 = vst [vmem:[%s236 + $0x198] sm:$0xff] %v5017
        %5146 = vst [vmem:[%s236 + $0x1a0] sm:$0xff] %v5018
        %5147 = vst [vmem:[%s236 + $0x1a8] sm:$0xff] %v5019
        %5148 = vst [vmem:[%s236 + $0x1b0] sm:$0xff] %v5020
        %5149 = vst [vmem:[%s236 + $0x1b8] sm:$0xff] %v5021
        %5150 = vst [vmem:[%s236 + $0x1c0] sm:$0xff] %v5022
        %5151 = vst [vmem:[%s236 + $0x1c8] sm:$0xff] %v5023
        %5152 = vst [vmem:[%s236 + $0x1d0] sm:$0xff] %v5024
        %5153 = vst [vmem:[%s236 + $0x1d8] sm:$0xff] %v5025
        %5154 = vst [vmem:[%s236 + $0x1e0] sm:$0xff] %v5026
        %5155 = vst [vmem:[%s236 + $0x1e8] sm:$0xff] %v5027
        %5156 = vst [vmem:[%s236 + $0x1f0] sm:$0xff] %v5028
        %5157 = vst [vmem:[%s236 + $0x1f8] sm:$0xff] %v5029
        %5158 = vst [vmem:[%s236 + $0x200] sm:$0xff] %v5046
        %5159 = vst [vmem:[%s236 + $0x208] sm:$0xff] %v5047
        %5160 = vst [vmem:[%s236 + $0x210] sm:$0xff] %v5048
        %5161 = vst [vmem:[%s236 + $0x218] sm:$0xff] %v5049
        %5162 = vst [vmem:[%s236 + $0x220] sm:$0xff] %v5050
        %5163 = vst [vmem:[%s236 + $0x228] sm:$0xff] %v5051
        %5164 = vst [vmem:[%s236 + $0x230] sm:$0xff] %v5052
        %5165 = vst [vmem:[%s236 + $0x238] sm:$0xff] %v5053
        %5166 = vst [vmem:[%s236 + $0x240] sm:$0xff] %v5054
        %5167 = vst [vmem:[%s236 + $0x248] sm:$0xff] %v5055
        %5168 = vst [vmem:[%s236 + $0x250] sm:$0xff] %v5056
        %5169 = vst [vmem:[%s236 + $0x258] sm:$0xff] %v5057
        %5170 = vst [vmem:[%s236 + $0x260] sm:$0xff] %v5058
        %5171 = vst [vmem:[%s236 + $0x268] sm:$0xff] %v5059
        %5172 = vst [vmem:[%s236 + $0x270] sm:$0xff] %v5060
        %5173 = vst [vmem:[%s236 + $0x278] sm:$0xff] %v5061
        %5174 = vst [vmem:[%s236 + $0x280] sm:$0xff] %v5078
        %5175 = vst [vmem:[%s236 + $0x288] sm:$0xff] %v5079
        %5176 = vst [vmem:[%s236 + $0x290] sm:$0xff] %v5080
        %5177 = vst [vmem:[%s236 + $0x298] sm:$0xff] %v5081
        %5178 = vst [vmem:[%s236 + $0x2a0] sm:$0xff] %v5082
        %5179 = vst [vmem:[%s236 + $0x2a8] sm:$0xff] %v5083
        %5180 = vst [vmem:[%s236 + $0x2b0] sm:$0xff] %v5084
        %5181 = vst [vmem:[%s236 + $0x2b8] sm:$0xff] %v5085
        %5182 = vst [vmem:[%s236 + $0x2c0] sm:$0xff] %v5086
        %5183 = vst [vmem:[%s236 + $0x2c8] sm:$0xff] %v5087
        %5184 = vst [vmem:[%s236 + $0x2d0] sm:$0xff] %v5088
        %5185 = vst [vmem:[%s236 + $0x2d8] sm:$0xff] %v5089
        %5186 = vst [vmem:[%s236 + $0x2e0] sm:$0xff] %v5090
        %5187 = vst [vmem:[%s236 + $0x2e8] sm:$0xff] %v5091
        %5188 = vst [vmem:[%s236 + $0x2f0] sm:$0xff] %v5092
        %5189 = vst [vmem:[%s236 + $0x2f8] sm:$0xff] %v5093
        %s5190 = sand.u32 %s113, 1
        %s5191 = scalar_lea.sflag [#allocation4], %s5190
        %s5192 = sand.u32 %s113, 1
        %s5193 = smul.addr %s5192, 768
        %s5194 = scalar_lea.vmem [#allocation8], %s5193
        // Predicated region
        $region45: #{tpu_custom_call.1} parent=31 // pred_check
          %p5195 = pneg %p123
        $region46: #{tpu_custom_call.1} parent=31 // pred_check_branch
          %5197 = sbr.rel (%p5195) target = $region48
        $region47: #{tpu_custom_call.1} parent=31 // pred_region
          %s5199 = ssub.s32 12288, 12288
          %5200 = vsyncadd %s5191, %s5199
          %s5201 = smul.addr %s25, 96
          %s5202 = sadd.s32 %s26, %s5201
          %s5203 = smul.addr %s5202, 128
          %s5204 = scalar_lea.hbm %s3, %s5203
          %s5205 = sshll.u32 %s5194, 4
          %s5206 = int_to_ptr.vmem [resolvable:$true] %s5205
          %5211 = dma.vmem_to_hbm [thread:$0]  %s5206, 12288, %s5204, %s5191, 128, 128, 8
        $region48: #{tpu_custom_call.1} parent=31 // pred_fallthru
          _
      $region32: #{tpu_custom_call.1} parent=5 // pred_fallthru
        _
      %p5212 = scmp.le.s32.totalorder 2, %s16
      // Predicated region
      $region49: #{tpu_custom_call.1} parent=5 // pred_check
        %p5213 = pneg %p5212
      $region50: #{tpu_custom_call.1} parent=5 // pred_check_branch
        %5215 = sbr.rel (%p5213) target = $region52
      $region51: #{tpu_custom_call.1} parent=5 // pred_region
        %s5216 = ssub.s32 %s16, 2
        // Predicated region
        $region53: #{tpu_custom_call.1} parent=51 // pred_check
          %p5217 = pneg %p129
        $region54: #{tpu_custom_call.1} parent=51 // pred_check_branch
          %5219 = sbr.rel (%p5217) target = $region56
        $region55: #{tpu_custom_call.1} parent=51 // pred_region
          %s5220 = sand.u32 %s114, 1
          %s5221 = scalar_lea.sflag [#allocation4], %s5220
          %s5222 = sand.u32 %s114, 1
          %s5223 = smul.addr %s5222, 768
          %s5224 = scalar_lea.vmem [#allocation8], %s5223
          %5225 = dma.done %s5221, 12288
        $region56: #{tpu_custom_call.1} parent=51 // pred_fallthru
          _
      $region52: #{tpu_custom_call.1} parent=5 // pred_fallthru
        _
    $region6: #{tpu_custom_call.1} parent=1 // loop_footer
      %s20 = sadd.s32 1, %s16
    $region7: #{tpu_custom_call.1} parent=1 // loop_footer_branch
      %15 = sbr.rel target = $region3
    $region8: #{tpu_custom_call.1} parent=1 // loop_exit
      _
    %5226 = vsyncpa [#allocation3], 1
    %s5227 = scalar_lea.sflag [#allocation3], 1
    %5228 = vsyncpa %s5227, 1
    %5229 = vsyncpa [#allocation6], 1
    %5230 = vsyncpa [#allocation4], 1
    %s5231 = scalar_lea.sflag [#allocation4], 1
    %5232 = vsyncpa %s5231, 1

</llo_original>
